<compile_context>
chip_gen: v7x
topology: tpu7x:2x2x1
jax: 0.10.0
libtpu: 0.0.40
codegen_flags: <defaults>
</compile_context>

<pallas_src>
import functools

import jax
import jax.numpy as jnp
from jax.experimental import pallas as pl
from jax.experimental.pallas import tpu as pltpu

LN_EPS = 1e-5                     # PyTorch LayerNorm default
_COMPUTE_DTYPE = jnp.bfloat16     # MXU operand dtype; accumulation stays f32


def _layernorm(v, gamma, beta, eps=LN_EPS):
    mu = jnp.mean(v, axis=-1, keepdims=True)
    var = jnp.mean((v - mu) ** 2, axis=-1, keepdims=True)   # biased var, like torch
    return (v - mu) * jax.lax.rsqrt(var + eps) * gamma + beta


# ----------------------------- kernel --------------------------------------- #

def encoder_layer_kernel(*refs, heads, fuse_pe):
    if fuse_pe:
        (x_ref, pe_ref, scale_ref,
         wqkv_ref, bqkv_ref, wo_ref, bo_ref,
         w1_ref, b1_ref, w2_ref, b2_ref,
         ln1g_ref, ln1b_ref, ln2g_ref, ln2b_ref, o_ref) = refs
    else:
        pe_ref = scale_ref = None
        (x_ref,
         wqkv_ref, bqkv_ref, wo_ref, bo_ref,
         w1_ref, b1_ref, w2_ref, b2_ref,
         ln1g_ref, ln1b_ref, ln2g_ref, ln2b_ref, o_ref) = refs

    x = x_ref[0].astype(jnp.float32)                        # (S, D) residual path, f32
    if fuse_pe:
        x = x + scale_ref[0] * pe_ref[0].astype(jnp.float32)

    S, D = x.shape
    dh = D // heads
    inv_sqrt_dh = jnp.float32(dh) ** -0.5

    # ---- fused QKV projection (weights host-pre-transposed, bf16 operands) ----
    xc = x.astype(_COMPUTE_DTYPE)
    qkv = jnp.dot(xc, wqkv_ref[...], preferred_element_type=jnp.float32) + bqkv_ref[...]

    # ---- batched multi-head attention: (H, S, dh) operands, one contraction ----
    def heads_major(t):                                      # (S, D_slice) -> (H, S, dh)
        return jnp.transpose(t.reshape(S, heads, dh), (1, 0, 2))

    q = heads_major((qkv[:, :D] * inv_sqrt_dh).astype(_COMPUTE_DTYPE))  # scale folded in Q
    k = heads_major(qkv[:, D:2 * D].astype(_COMPUTE_DTYPE))
    v = heads_major(qkv[:, 2 * D:].astype(_COMPUTE_DTYPE))

    s = jnp.einsum('hqd,hkd->hqk', q, k, preferred_element_type=jnp.float32)  # (H,S,S)
    s = s - jnp.max(s, axis=-1, keepdims=True)               # softmax in f32
    p = jnp.exp(s)
    p = p * pl.reciprocal(jnp.sum(p, axis=-1, keepdims=True), approx=True)
    ctx = jnp.einsum('hqk,hkd->hqd', p.astype(_COMPUTE_DTYPE), v,
                     preferred_element_type=jnp.float32)     # (H, S, dh)
    attn = jnp.transpose(ctx, (1, 0, 2)).reshape(S, D)       # concat heads along features

    attn = jnp.dot(attn.astype(_COMPUTE_DTYPE), wo_ref[...],
                   preferred_element_type=jnp.float32) + bo_ref[...]
    # TODO(synk): dropout (torch default p=0.1) omitted -> eval()/inference semantics.
    # TODO(synk): no src_mask / src_key_padding_mask path (reference forward passes none).

    # ---- residual + LayerNorm 1 (post-norm, torch default norm_first=False) ----
    y = _layernorm(x + attn, ln1g_ref[...], ln1b_ref[...])

    # ---- feed-forward: linear -> relu -> linear ----
    h1 = jnp.dot(y.astype(_COMPUTE_DTYPE), w1_ref[...],
                 preferred_element_type=jnp.float32) + b1_ref[...]
    h1 = jnp.maximum(h1, 0.0)
    h2 = jnp.dot(h1.astype(_COMPUTE_DTYPE), w2_ref[...],
                 preferred_element_type=jnp.float32) + b2_ref[...]

    # ---- residual + LayerNorm 2 ----
    z = _layernorm(y + h2, ln2g_ref[...], ln2b_ref[...])
    o_ref[0] = z.astype(o_ref.dtype)


# ----------------------------- wrappers -------------------------------------- #

def _const_spec(shape, single_buffer):
    """Full-array block with a constant index map (weight resident every step)."""
    idx_map = lambda b, _n=len(shape): (0,) * _n
    if single_buffer:
        # Constant index map -> no prefetch overlap needed; 1 buffer halves weight VMEM.
        return pl.BlockSpec(shape, idx_map, pipeline_mode=pl.Buffered(1))
    return pl.BlockSpec(shape, idx_map)


def _layer_call(x, lp, heads, pe, scale, single_buffer):
    B, S, D = x.shape
    FF = lp["w1_t"].shape[1]
    fuse_pe = pe is not None

    flops = 2 * B * S * (3 * D * D + D * D + 2 * D * FF) + 4 * B * S * S * D
    bytes_accessed = (2 * B * S * D * 4                       # activations in + out (f32)
                      + (4 * D * D + 2 * D * FF) * 2          # bf16 weights
                      + (3 * D + D + FF + D + 4 * D) * 4)     # biases + LN params (f32)
    cost = pl.CostEstimate(flops=flops, transcendentals=B * heads * S * S,
                           bytes_accessed=bytes_accessed)

    in_specs = [pl.BlockSpec((1, S, D), lambda b: (b, 0, 0))]
    args = [x]
    if fuse_pe:
        in_specs += [_const_spec((1, S, D), single_buffer),
                     pl.BlockSpec(memory_space=pltpu.MemorySpace.SMEM)]
        args += [pe, scale]
    in_specs += [
        _const_spec((D, 3 * D), single_buffer), _const_spec((1, 3 * D), single_buffer),
        _const_spec((D, D), single_buffer),     _const_spec((1, D), single_buffer),
        _const_spec((D, FF), single_buffer),    _const_spec((1, FF), single_buffer),
        _const_spec((FF, D), single_buffer),    _const_spec((1, D), single_buffer),
        _const_spec((1, D), single_buffer),     _const_spec((1, D), single_buffer),
        _const_spec((1, D), single_buffer),     _const_spec((1, D), single_buffer),
    ]
    args += [lp["wqkv_t"], lp["bqkv"], lp["wo_t"], lp["bo"],
             lp["w1_t"], lp["b1"], lp["w2_t"], lp["b2"],
             lp["ln1g"], lp["ln1b"], lp["ln2g"], lp["ln2b"]]

    kernel = functools.partial(encoder_layer_kernel, heads=heads, fuse_pe=fuse_pe)
    return pl.pallas_call(
        kernel,
        out_shape=jax.ShapeDtypeStruct((B, S, D), x.dtype),
        grid=(B,),
        in_specs=in_specs,
        out_specs=pl.BlockSpec((1, S, D), lambda b: (b, 0, 0)),
        compiler_params=pltpu.CompilerParams(
            dimension_semantics=("parallel",),
            vmem_limit_bytes=48 * 1024 * 1024),
        cost_estimate=cost,
    )(*args)


_PIPELINE_SINGLE_BUFFER = [True]   # weights have constant index maps -> 1 buffer suffices


def apply_encoder_layer(x, lp, heads, pe=None, scale=None):
    if _PIPELINE_SINGLE_BUFFER[0]:
        try:
            return _layer_call(x, lp, heads, pe, scale, single_buffer=True)
        except Exception:
            # pl.Buffered(1) not supported on this jax/libtpu -> default double-buffering.
            _PIPELINE_SINGLE_BUFFER[0] = False
    return _layer_call(x, lp, heads, pe, scale, single_buffer=False)


def transformer_encoder(x, params, heads):
    B, S, D = x.shape
    pe = params["pe"][:, :S, :]                 # pe[:, :x.size(1), :]
    scale = params["scale"]
    if not params["layers"]:                    # degenerate: only positional encoding
        return x + scale[0] * pe
    out = x
    for i, lp in enumerate(params["layers"]):
        if i == 0:
            out = apply_encoder_layer(out, lp, heads, pe=pe, scale=scale)  # PE fused here
        else:
            out = apply_encoder_layer(out, lp, heads)
    return out


# ------------------------ pure-JAX f32 reference ----------------------------- #

def transformer_encoder_ref(x, params, heads):
    B, S, D = x.shape
    dh = D // heads
    y = x + params["scale"][0] * params["pe"][:, :S, :]
    for lp in params["layers"]:
        qkv = y @ lp["wqkv_t"].astype(jnp.float32) + lp["bqkv"]

        def split(t):
            return t.reshape(B, S, heads, dh).transpose(0, 2, 1, 3)

        q, k, v = split(qkv[..., :D]), split(qkv[..., D:2 * D]), split(qkv[..., 2 * D:])
        s = jnp.einsum('bhqd,bhkd->bhqk', q, k) / jnp.sqrt(jnp.float32(dh))
        p = jax.nn.softmax(s, axis=-1)
        ctx = jnp.einsum('bhqk,bhkd->bhqd', p, v).transpose(0, 2, 1, 3).reshape(B, S, D)
        attn = ctx @ lp["wo_t"].astype(jnp.float32) + lp["bo"]
        y1 = _layernorm(y + attn, lp["ln1g"], lp["ln1b"])
        h = jnp.maximum(y1 @ lp["w1_t"].astype(jnp.float32) + lp["b1"], 0.0)
        h2 = h @ lp["w2_t"].astype(jnp.float32) + lp["b2"]
        y = _layernorm(y1 + h2, lp["ln2g"], lp["ln2b"])
    return y


# ------------------------ deterministic parameter init ----------------------- #

def init_params(key, dim, heads, max_len, layers, dim_feedforward=2048):
    keys = jax.random.split(key, 2 + layers)

    def rnd(k, shape, s=0.05):
        return s * jax.random.normal(k, shape, jnp.float32)

    params = {
        # AbsPositionalEncoding: pe ~ N(0, d_model^-0.5); torch inits scale to 0 —
        # use a small nonzero scale so the PE path is actually exercised.
        "pe": (dim ** -0.5) * jax.random.normal(keys[0], (1, max_len, dim), jnp.float32),
        "scale": jnp.array([0.1], jnp.float32),
        "layers": [],
    }
    wdt = _COMPUTE_DTYPE
    for l in range(layers):
        lk = jax.random.split(keys[2 + l], 8)
        wqkv = rnd(lk[0], (3 * dim, dim))            # torch Linear layout (out, in)
        wo = rnd(lk[2], (dim, dim))
        w1 = rnd(lk[4], (dim_feedforward, dim))
        w2 = rnd(lk[6], (dim, dim_feedforward))
        params["layers"].append({
            # host-pre-transposed to (in, out) + cast to bf16: kernel does x @ W_t
            "wqkv_t": jnp.asarray(wqkv.T, wdt),
            "bqkv":   rnd(lk[1], (1, 3 * dim)),
            "wo_t":   jnp.asarray(wo.T, wdt),
            "bo":     rnd(lk[3], (1, dim)),
            "w1_t":   jnp.asarray(w1.T, wdt),
            "b1":     rnd(lk[5], (1, dim_feedforward)),
            "w2_t":   jnp.asarray(w2.T, wdt),
            "b2":     rnd(lk[7], (1, dim)),
            "ln1g": jnp.ones((1, dim), jnp.float32),
            "ln1b": jnp.zeros((1, dim), jnp.float32),
            "ln2g": jnp.ones((1, dim), jnp.float32),
            "ln2b": jnp.zeros((1, dim), jnp.float32),
        })
    return params


# --------------------------------- main --------------------------------------- #

if __name__ == "__main__":
    # lane-friendly small shapes: D multiple of 128, S multiple of 8, FF multiple of 128
    B, S, D, H, L, MAX_LEN, FF = 2, 8, 128, 4, 2, 16, 256
    key = jax.random.PRNGKey(0)
    kx, kp = jax.random.split(key)
    x = jax.random.normal(kx, (B, S, D), jnp.float32)
    params = init_params(kp, D, H, MAX_LEN, L, dim_feedforward=FF)

    out = transformer_encoder(x, params, H)
    out = jax.block_until_ready(out)
    assert out.shape == (B, S, D) and out.dtype == jnp.float32
    assert bool(jnp.all(jnp.isfinite(out)))

    # correctness sanity check vs full-precision JAX reference (loose tol: bf16 MXU
    # operands + approx softmax reciprocal in the kernel)
    ref = jax.block_until_ready(transformer_encoder_ref(x, params, H))
    err = float(jnp.max(jnp.abs(out - ref)))
    assert err < 0.2, f"mismatch vs reference: max abs err = {err}"

    print("KERNEL_OK")
</pallas_src>

<mosaic_0001>
module attributes {stable_mosaic.version = 11 : i64} {
  func.func @encoder_layer_kernel(%arg0: i32, %arg1: memref<1x8x128xf32, #tpu.memory_space<vmem>>, %arg2: memref<1x8x128xf32, #tpu.memory_space<vmem>>, %arg3: memref<1xf32, #tpu.memory_space<smem>>, %arg4: memref<128x384xbf16, #tpu.memory_space<vmem>>, %arg5: memref<1x384xf32, #tpu.memory_space<vmem>>, %arg6: memref<128x128xbf16, #tpu.memory_space<vmem>>, %arg7: memref<1x128xf32, #tpu.memory_space<vmem>>, %arg8: memref<128x256xbf16, #tpu.memory_space<vmem>>, %arg9: memref<1x256xf32, #tpu.memory_space<vmem>>, %arg10: memref<256x128xbf16, #tpu.memory_space<vmem>>, %arg11: memref<1x128xf32, #tpu.memory_space<vmem>>, %arg12: memref<1x128xf32, #tpu.memory_space<vmem>>, %arg13: memref<1x128xf32, #tpu.memory_space<vmem>>, %arg14: memref<1x128xf32, #tpu.memory_space<vmem>>, %arg15: memref<1x128xf32, #tpu.memory_space<vmem>>, %arg16: memref<1x8x128xf32, #tpu.memory_space<vmem>>) attributes {dimension_semantics = [#tpu.dimension_semantics<parallel>], iteration_bounds = array<i64: 2>, scalar_prefetch = 0 : i64, scratch_operands = 0 : i64, tpu.core_type = #tpu.core_type<tc>, window_params = [{transform_indices = @transform_0, window_bounds = array<i64: 1, 8, 128>}, {pipeline_mode = #tpu.pipeline_mode<synchronous>, transform_indices = @transform_1, window_bounds = array<i64: 1, 8, 128>}, {transform_indices = @transform_2, window_bounds = array<i64: 1>}, {pipeline_mode = #tpu.pipeline_mode<synchronous>, transform_indices = @transform_3, window_bounds = array<i64: 128, 384>}, {pipeline_mode = #tpu.pipeline_mode<synchronous>, transform_indices = @transform_4, window_bounds = array<i64: 1, 384>}, {pipeline_mode = #tpu.pipeline_mode<synchronous>, transform_indices = @transform_5, window_bounds = array<i64: 128, 128>}, {pipeline_mode = #tpu.pipeline_mode<synchronous>, transform_indices = @transform_6, window_bounds = array<i64: 1, 128>}, {pipeline_mode = #tpu.pipeline_mode<synchronous>, transform_indices = @transform_7, window_bounds = array<i64: 128, 256>}, {pipeline_mode = #tpu.pipeline_mode<synchronous>, transform_indices = @transform_8, window_bounds = array<i64: 1, 256>}, {pipeline_mode = #tpu.pipeline_mode<synchronous>, transform_indices = @transform_9, window_bounds = array<i64: 256, 128>}, {pipeline_mode = #tpu.pipeline_mode<synchronous>, transform_indices = @transform_10, window_bounds = array<i64: 1, 128>}, {pipeline_mode = #tpu.pipeline_mode<synchronous>, transform_indices = @transform_11, window_bounds = array<i64: 1, 128>}, {pipeline_mode = #tpu.pipeline_mode<synchronous>, transform_indices = @transform_12, window_bounds = array<i64: 1, 128>}, {pipeline_mode = #tpu.pipeline_mode<synchronous>, transform_indices = @transform_13, window_bounds = array<i64: 1, 128>}, {pipeline_mode = #tpu.pipeline_mode<synchronous>, transform_indices = @transform_14, window_bounds = array<i64: 1, 128>}, {transform_indices = @transform_15, window_bounds = array<i64: 1, 8, 128>}]} {
    %c0 = arith.constant 0 : index
    %c0_0 = arith.constant 0 : index
    %c0_1 = arith.constant 0 : index
    %0 = vector.load %arg1[%c0, %c0_0, %c0_1] : memref<1x8x128xf32, #tpu.memory_space<vmem>>, vector<1x8x128xf32>
    %1 = vector.shape_cast %0 : vector<1x8x128xf32> to vector<8x128xf32>
    %c0_2 = arith.constant 0 : index
    %2 = memref.load %arg3[%c0_2] : memref<1xf32, #tpu.memory_space<smem>>
    %c0_3 = arith.constant 0 : index
    %c0_4 = arith.constant 0 : index
    %c0_5 = arith.constant 0 : index
    %3 = vector.load %arg2[%c0_3, %c0_4, %c0_5] : memref<1x8x128xf32, #tpu.memory_space<vmem>>, vector<1x8x128xf32>
    %4 = vector.shape_cast %3 : vector<1x8x128xf32> to vector<8x128xf32>
    %5 = vector.broadcast %2 : f32 to vector<8x128xf32>
    %6 = arith.mulf %5, %4 : vector<8x128xf32>
    %7 = arith.addf %1, %6 : vector<8x128xf32>
    %cst = arith.constant 3.200000e+01 : f32
    %cst_6 = arith.constant -5.000000e-01 : f32
    %8 = math.powf %cst, %cst_6 : f32
    %9 = arith.truncf %7 : vector<8x128xf32> to vector<8x128xbf16>
    %c0_7 = arith.constant 0 : index
    %c0_8 = arith.constant 0 : index
    %10 = vector.load %arg4[%c0_7, %c0_8] : memref<128x384xbf16, #tpu.memory_space<vmem>>, vector<128x384xbf16>
    %cst_9 = arith.constant dense<0.000000e+00> : vector<8x384xf32>
    %11 = tpu.matmul %9, %10, %cst_9 {dimension_numbers = #tpu.dot_dimension_numbers<[1], [0], [0], [1], [0, 0, 1, 1], [], []>} : vector<8x128xbf16>, vector<128x384xbf16>, vector<8x384xf32> -> vector<8x384xf32>
    %c0_10 = arith.constant 0 : index
    %c0_11 = arith.constant 0 : index
    %12 = vector.load %arg5[%c0_10, %c0_11] : memref<1x384xf32, #tpu.memory_space<vmem>>, vector<1x384xf32>
    %13 = vector.broadcast %12 : vector<1x384xf32> to vector<8x384xf32>
    %14 = arith.addf %11, %13 : vector<8x384xf32>
    %15 = vector.extract_strided_slice %14 {offsets = [0, 0], sizes = [8, 128], strides = [1, 1]} : vector<8x384xf32> to vector<8x128xf32>
    %16 = vector.broadcast %8 : f32 to vector<8x128xf32>
    %17 = arith.mulf %15, %16 : vector<8x128xf32>
    %18 = arith.truncf %17 : vector<8x128xf32> to vector<8x128xbf16>
    %19 = vector.shape_cast %18 : vector<8x128xbf16> to vector<8x4x32xbf16>
    %20 = tpu.transpose %19, [1, 0, 2] : vector<8x4x32xbf16> -> vector<4x8x32xbf16>
    %21 = vector.extract_strided_slice %14 {offsets = [0, 128], sizes = [8, 128], strides = [1, 1]} : vector<8x384xf32> to vector<8x128xf32>
    %22 = arith.truncf %21 : vector<8x128xf32> to vector<8x128xbf16>
    %23 = vector.shape_cast %22 : vector<8x128xbf16> to vector<8x4x32xbf16>
    %24 = tpu.transpose %23, [1, 0, 2] : vector<8x4x32xbf16> -> vector<4x8x32xbf16>
    %25 = vector.extract_strided_slice %14 {offsets = [0, 256], sizes = [8, 128], strides = [1, 1]} : vector<8x384xf32> to vector<8x128xf32>
    %26 = arith.truncf %25 : vector<8x128xf32> to vector<8x128xbf16>
    %27 = vector.shape_cast %26 : vector<8x128xbf16> to vector<8x4x32xbf16>
    %28 = tpu.transpose %27, [1, 0, 2] : vector<8x4x32xbf16> -> vector<4x8x32xbf16>
    "tpu.trace_start"() <{level = 10 : i32, message = "hqd,hkd->hqk"}> : () -> ()
    %cst_12 = arith.constant dense<0.000000e+00> : vector<4x8x8xf32>
    %29 = tpu.matmul %20, %24, %cst_12 {dimension_numbers = #tpu.dot_dimension_numbers<[2], [2], [1], [1], [0, 0, 0, 1, 1, 1], [0], [0]>} : vector<4x8x32xbf16>, vector<4x8x32xbf16>, vector<4x8x8xf32> -> vector<4x8x8xf32>
    "tpu.trace_stop"() : () -> ()
    %cst_13 = arith.constant dense<0xFF800000> : vector<4x8xf32>
    %30 = vector.multi_reduction <maximumf>, %29, %cst_13 [2] : vector<4x8x8xf32> to vector<4x8xf32>
    %31 = vector.shape_cast %30 : vector<4x8xf32> to vector<4x8x1xf32>
    %32 = vector.broadcast %31 : vector<4x8x1xf32> to vector<4x8x8xf32>
    %33 = arith.subf %29, %32 : vector<4x8x8xf32>
    %34 = math.exp %33 : vector<4x8x8xf32>
    %cst_14 = arith.constant dense<0.000000e+00> : vector<4x8xf32>
    %35 = vector.multi_reduction <add>, %34, %cst_14 [2] : vector<4x8x8xf32> to vector<4x8xf32>
    %36 = vector.shape_cast %35 : vector<4x8xf32> to vector<4x8x1xf32>
    %37 = tpu.reciprocal %36 {approx = true} : vector<4x8x1xf32> -> vector<4x8x1xf32>
    %38 = vector.broadcast %37 : vector<4x8x1xf32> to vector<4x8x8xf32>
    %39 = arith.mulf %34, %38 : vector<4x8x8xf32>
    %40 = arith.truncf %39 : vector<4x8x8xf32> to vector<4x8x8xbf16>
    "tpu.trace_start"() <{level = 10 : i32, message = "hqk,hkd->hqd"}> : () -> ()
    %cst_15 = arith.constant dense<0.000000e+00> : vector<4x8x32xf32>
    %41 = tpu.matmul %40, %28, %cst_15 {dimension_numbers = #tpu.dot_dimension_numbers<[2], [1], [1], [2], [0, 0, 0, 1, 1, 2], [0], [0]>} : vector<4x8x8xbf16>, vector<4x8x32xbf16>, vector<4x8x32xf32> -> vector<4x8x32xf32>
    "tpu.trace_stop"() : () -> ()
    %42 = tpu.transpose %41, [1, 0, 2] : vector<4x8x32xf32> -> vector<8x4x32xf32>
    %43 = vector.shape_cast %42 : vector<8x4x32xf32> to vector<8x128xf32>
    %44 = arith.truncf %43 : vector<8x128xf32> to vector<8x128xbf16>
    %c0_16 = arith.constant 0 : index
    %c0_17 = arith.constant 0 : index
    %45 = vector.load %arg6[%c0_16, %c0_17] : memref<128x128xbf16, #tpu.memory_space<vmem>>, vector<128x128xbf16>
    %cst_18 = arith.constant dense<0.000000e+00> : vector<8x128xf32>
    %46 = tpu.matmul %44, %45, %cst_18 {dimension_numbers = #tpu.dot_dimension_numbers<[1], [0], [0], [1], [0, 0, 1, 1], [], []>} : vector<8x128xbf16>, vector<128x128xbf16>, vector<8x128xf32> -> vector<8x128xf32>
    %c0_19 = arith.constant 0 : index
    %c0_20 = arith.constant 0 : index
    %47 = vector.load %arg7[%c0_19, %c0_20] : memref<1x128xf32, #tpu.memory_space<vmem>>, vector<1x128xf32>
    %48 = vector.broadcast %47 : vector<1x128xf32> to vector<8x128xf32>
    %49 = arith.addf %46, %48 : vector<8x128xf32>
    %50 = arith.addf %7, %49 : vector<8x128xf32>
    %c0_21 = arith.constant 0 : index
    %c0_22 = arith.constant 0 : index
    %51 = vector.load %arg12[%c0_21, %c0_22] : memref<1x128xf32, #tpu.memory_space<vmem>>, vector<1x128xf32>
    %c0_23 = arith.constant 0 : index
    %c0_24 = arith.constant 0 : index
    %52 = vector.load %arg13[%c0_23, %c0_24] : memref<1x128xf32, #tpu.memory_space<vmem>>, vector<1x128xf32>
    %cst_25 = arith.constant dense<0.000000e+00> : vector<8xf32>
    %53 = vector.multi_reduction <add>, %50, %cst_25 [1] : vector<8x128xf32> to vector<8xf32>
    %54 = vector.shape_cast %53 : vector<8xf32> to vector<8x1xf32>
    %cst_26 = arith.constant 1.280000e+02 : f32
    %55 = vector.broadcast %cst_26 : f32 to vector<8x1xf32>
    %56 = arith.divf %54, %55 : vector<8x1xf32>
    %57 = vector.broadcast %56 : vector<8x1xf32> to vector<8x128xf32>
    %58 = arith.subf %50, %57 : vector<8x128xf32>
    %59 = arith.mulf %58, %58 : vector<8x128xf32>
    %cst_27 = arith.constant dense<0.000000e+00> : vector<8xf32>
    %60 = vector.multi_reduction <add>, %59, %cst_27 [1] : vector<8x128xf32> to vector<8xf32>
    %61 = vector.shape_cast %60 : vector<8xf32> to vector<8x1xf32>
    %cst_28 = arith.constant 1.280000e+02 : f32
    %62 = vector.broadcast %cst_28 : f32 to vector<8x1xf32>
    %63 = arith.divf %61, %62 : vector<8x1xf32>
    %64 = vector.broadcast %56 : vector<8x1xf32> to vector<8x128xf32>
    %65 = arith.subf %50, %64 : vector<8x128xf32>
    %cst_29 = arith.constant 9.99999974E-6 : f32
    %66 = vector.broadcast %cst_29 : f32 to vector<8x1xf32>
    %67 = arith.addf %63, %66 : vector<8x1xf32>
    %68 = math.rsqrt %67 : vector<8x1xf32>
    %69 = vector.broadcast %68 : vector<8x1xf32> to vector<8x128xf32>
    %70 = arith.mulf %65, %69 : vector<8x128xf32>
    %71 = vector.broadcast %51 : vector<1x128xf32> to vector<8x128xf32>
    %72 = arith.mulf %70, %71 : vector<8x128xf32>
    %73 = vector.broadcast %52 : vector<1x128xf32> to vector<8x128xf32>
    %74 = arith.addf %72, %73 : vector<8x128xf32>
    %75 = arith.truncf %74 : vector<8x128xf32> to vector<8x128xbf16>
    %c0_30 = arith.constant 0 : index
    %c0_31 = arith.constant 0 : index
    %76 = vector.load %arg8[%c0_30, %c0_31] : memref<128x256xbf16, #tpu.memory_space<vmem>>, vector<128x256xbf16>
    %cst_32 = arith.constant dense<0.000000e+00> : vector<8x256xf32>
    %77 = tpu.matmul %75, %76, %cst_32 {dimension_numbers = #tpu.dot_dimension_numbers<[1], [0], [0], [1], [0, 0, 1, 1], [], []>} : vector<8x128xbf16>, vector<128x256xbf16>, vector<8x256xf32> -> vector<8x256xf32>
    %c0_33 = arith.constant 0 : index
    %c0_34 = arith.constant 0 : index
    %78 = vector.load %arg9[%c0_33, %c0_34] : memref<1x256xf32, #tpu.memory_space<vmem>>, vector<1x256xf32>
    %79 = vector.broadcast %78 : vector<1x256xf32> to vector<8x256xf32>
    %80 = arith.addf %77, %79 : vector<8x256xf32>
    %cst_35 = arith.constant 0.000000e+00 : f32
    %81 = vector.broadcast %cst_35 : f32 to vector<8x256xf32>
    %82 = arith.maximumf %80, %81 : vector<8x256xf32>
    %83 = arith.truncf %82 : vector<8x256xf32> to vector<8x256xbf16>
    %c0_36 = arith.constant 0 : index
    %c0_37 = arith.constant 0 : index
    %84 = vector.load %arg10[%c0_36, %c0_37] : memref<256x128xbf16, #tpu.memory_space<vmem>>, vector<256x128xbf16>
    %cst_38 = arith.constant dense<0.000000e+00> : vector<8x128xf32>
    %85 = tpu.matmul %83, %84, %cst_38 {dimension_numbers = #tpu.dot_dimension_numbers<[1], [0], [0], [1], [0, 0, 1, 1], [], []>} : vector<8x256xbf16>, vector<256x128xbf16>, vector<8x128xf32> -> vector<8x128xf32>
    %c0_39 = arith.constant 0 : index
    %c0_40 = arith.constant 0 : index
    %86 = vector.load %arg11[%c0_39, %c0_40] : memref<1x128xf32, #tpu.memory_space<vmem>>, vector<1x128xf32>
    %87 = vector.broadcast %86 : vector<1x128xf32> to vector<8x128xf32>
    %88 = arith.addf %85, %87 : vector<8x128xf32>
    %89 = arith.addf %74, %88 : vector<8x128xf32>
    %c0_41 = arith.constant 0 : index
    %c0_42 = arith.constant 0 : index
    %90 = vector.load %arg14[%c0_41, %c0_42] : memref<1x128xf32, #tpu.memory_space<vmem>>, vector<1x128xf32>
    %c0_43 = arith.constant 0 : index
    %c0_44 = arith.constant 0 : index
    %91 = vector.load %arg15[%c0_43, %c0_44] : memref<1x128xf32, #tpu.memory_space<vmem>>, vector<1x128xf32>
    %cst_45 = arith.constant dense<0.000000e+00> : vector<8xf32>
    %92 = vector.multi_reduction <add>, %89, %cst_45 [1] : vector<8x128xf32> to vector<8xf32>
    %93 = vector.shape_cast %92 : vector<8xf32> to vector<8x1xf32>
    %cst_46 = arith.constant 1.280000e+02 : f32
    %94 = vector.broadcast %cst_46 : f32 to vector<8x1xf32>
    %95 = arith.divf %93, %94 : vector<8x1xf32>
    %96 = vector.broadcast %95 : vector<8x1xf32> to vector<8x128xf32>
    %97 = arith.subf %89, %96 : vector<8x128xf32>
    %98 = arith.mulf %97, %97 : vector<8x128xf32>
    %cst_47 = arith.constant dense<0.000000e+00> : vector<8xf32>
    %99 = vector.multi_reduction <add>, %98, %cst_47 [1] : vector<8x128xf32> to vector<8xf32>
    %100 = vector.shape_cast %99 : vector<8xf32> to vector<8x1xf32>
    %cst_48 = arith.constant 1.280000e+02 : f32
    %101 = vector.broadcast %cst_48 : f32 to vector<8x1xf32>
    %102 = arith.divf %100, %101 : vector<8x1xf32>
    %103 = vector.broadcast %95 : vector<8x1xf32> to vector<8x128xf32>
    %104 = arith.subf %89, %103 : vector<8x128xf32>
    %cst_49 = arith.constant 9.99999974E-6 : f32
    %105 = vector.broadcast %cst_49 : f32 to vector<8x1xf32>
    %106 = arith.addf %102, %105 : vector<8x1xf32>
    %107 = math.rsqrt %106 : vector<8x1xf32>
    %108 = vector.broadcast %107 : vector<8x1xf32> to vector<8x128xf32>
    %109 = arith.mulf %104, %108 : vector<8x128xf32>
    %110 = vector.broadcast %90 : vector<1x128xf32> to vector<8x128xf32>
    %111 = arith.mulf %109, %110 : vector<8x128xf32>
    %112 = vector.broadcast %91 : vector<1x128xf32> to vector<8x128xf32>
    %113 = arith.addf %111, %112 : vector<8x128xf32>
    %c0_50 = arith.constant 0 : index
    %c0_51 = arith.constant 0 : index
    %c0_52 = arith.constant 0 : index
    %114 = vector.load %arg16[%c0_50, %c0_51, %c0_52] : memref<1x8x128xf32, #tpu.memory_space<vmem>>, vector<1x8x128xf32>
    %115 = vector.shape_cast %114 : vector<1x8x128xf32> to vector<8x128xf32>
    %116 = vector.shape_cast %113 : vector<8x128xf32> to vector<1x8x128xf32>
    tpu.vector_store %arg16[%c0_50, %c0_51, %c0_52], %116 {strides = array<i32>} : memref<1x8x128xf32, #tpu.memory_space<vmem>>, vector<1x8x128xf32>,
    return
  }
  func.func @transform_0(%arg0: i32) -> (i32, i32, i32) {
    %c0_i32 = arith.constant 0 : i32
    %c0_i32_0 = arith.constant 0 : i32
    %c0_i32_1 = arith.constant 0 : i32
    return %arg0, %c0_i32, %c0_i32_0 : i32, i32, i32
  }
  func.func @transform_1(%arg0: i32) -> (i32, i32, i32) {
    %c0_i32 = arith.constant 0 : i32
    %c0_i32_0 = arith.constant 0 : i32
    %c0_i32_1 = arith.constant 0 : i32
    %c0_i32_2 = arith.constant 0 : i32
    return %c0_i32, %c0_i32_0, %c0_i32_1 : i32, i32, i32
  }
  func.func @transform_2(%arg0: i32) -> i32 {
    %c0_i32 = arith.constant 0 : i32
    %c0_i32_0 = arith.constant 0 : i32
    return %c0_i32 : i32
  }
  func.func @transform_3(%arg0: i32) -> (i32, i32) {
    %c0_i32 = arith.constant 0 : i32
    %c0_i32_0 = arith.constant 0 : i32
    %c0_i32_1 = arith.constant 0 : i32
    return %c0_i32, %c0_i32_0 : i32, i32
  }
  func.func @transform_4(%arg0: i32) -> (i32, i32) {
    %c0_i32 = arith.constant 0 : i32
    %c0_i32_0 = arith.constant 0 : i32
    %c0_i32_1 = arith.constant 0 : i32
    return %c0_i32, %c0_i32_0 : i32, i32
  }
  func.func @transform_5(%arg0: i32) -> (i32, i32) {
    %c0_i32 = arith.constant 0 : i32
    %c0_i32_0 = arith.constant 0 : i32
    %c0_i32_1 = arith.constant 0 : i32
    return %c0_i32, %c0_i32_0 : i32, i32
  }
  func.func @transform_6(%arg0: i32) -> (i32, i32) {
    %c0_i32 = arith.constant 0 : i32
    %c0_i32_0 = arith.constant 0 : i32
    %c0_i32_1 = arith.constant 0 : i32
    return %c0_i32, %c0_i32_0 : i32, i32
  }
  func.func @transform_7(%arg0: i32) -> (i32, i32) {
    %c0_i32 = arith.constant 0 : i32
    %c0_i32_0 = arith.constant 0 : i32
    %c0_i32_1 = arith.constant 0 : i32
    return %c0_i32, %c0_i32_0 : i32, i32
  }
  func.func @transform_8(%arg0: i32) -> (i32, i32) {
    %c0_i32 = arith.constant 0 : i32
    %c0_i32_0 = arith.constant 0 : i32
    %c0_i32_1 = arith.constant 0 : i32
    return %c0_i32, %c0_i32_0 : i32, i32
  }
  func.func @transform_9(%arg0: i32) -> (i32, i32) {
    %c0_i32 = arith.constant 0 : i32
    %c0_i32_0 = arith.constant 0 : i32
    %c0_i32_1 = arith.constant 0 : i32
    return %c0_i32, %c0_i32_0 : i32, i32
  }
  func.func @transform_10(%arg0: i32) -> (i32, i32) {
    %c0_i32 = arith.constant 0 : i32
    %c0_i32_0 = arith.constant 0 : i32
    %c0_i32_1 = arith.constant 0 : i32
    return %c0_i32, %c0_i32_0 : i32, i32
  }
  func.func @transform_11(%arg0: i32) -> (i32, i32) {
    %c0_i32 = arith.constant 0 : i32
    %c0_i32_0 = arith.constant 0 : i32
    %c0_i32_1 = arith.constant 0 : i32
    return %c0_i32, %c0_i32_0 : i32, i32
  }
  func.func @transform_12(%arg0: i32) -> (i32, i32) {
    %c0_i32 = arith.constant 0 : i32
    %c0_i32_0 = arith.constant 0 : i32
    %c0_i32_1 = arith.constant 0 : i32
    return %c0_i32, %c0_i32_0 : i32, i32
  }
  func.func @transform_13(%arg0: i32) -> (i32, i32) {
    %c0_i32 = arith.constant 0 : i32
    %c0_i32_0 = arith.constant 0 : i32
    %c0_i32_1 = arith.constant 0 : i32
    return %c0_i32, %c0_i32_0 : i32, i32
  }
  func.func @transform_14(%arg0: i32) -> (i32, i32) {
    %c0_i32 = arith.constant 0 : i32
    %c0_i32_0 = arith.constant 0 : i32
    %c0_i32_1 = arith.constant 0 : i32
    return %c0_i32, %c0_i32_0 : i32, i32
  }
  func.func @transform_15(%arg0: i32) -> (i32, i32, i32) {
    %c0_i32 = arith.constant 0 : i32
    %c0_i32_0 = arith.constant 0 : i32
    %c0_i32_1 = arith.constant 0 : i32
    return %arg0, %c0_i32, %c0_i32_0 : i32, i32, i32
  }
}

module attributes {stable_mosaic.version = 11 : i64} {
  func.func @encoder_layer_kernel(%arg0: i32, %arg1: memref<1x8x128xf32, #tpu.memory_space<vmem>>, %arg2: memref<1x8x128xf32, #tpu.memory_space<vmem>>, %arg3: memref<1xf32, #tpu.memory_space<smem>>, %arg4: memref<128x384xbf16, #tpu.memory_space<vmem>>, %arg5: memref<1x384xf32, #tpu.memory_space<vmem>>, %arg6: memref<128x128xbf16, #tpu.memory_space<vmem>>, %arg7: memref<1x128xf32, #tpu.memory_space<vmem>>, %arg8: memref<128x256xbf16, #tpu.memory_space<vmem>>, %arg9: memref<1x256xf32, #tpu.memory_space<vmem>>, %arg10: memref<256x128xbf16, #tpu.memory_space<vmem>>, %arg11: memref<1x128xf32, #tpu.memory_space<vmem>>, %arg12: memref<1x128xf32, #tpu.memory_space<vmem>>, %arg13: memref<1x128xf32, #tpu.memory_space<vmem>>, %arg14: memref<1x128xf32, #tpu.memory_space<vmem>>, %arg15: memref<1x128xf32, #tpu.memory_space<vmem>>, %arg16: memref<1x8x128xf32, #tpu.memory_space<vmem>>) attributes {dimension_semantics = [#tpu.dimension_semantics<parallel>], iteration_bounds = array<i64: 2>, scalar_prefetch = 0 : i64, scratch_operands = 0 : i64, tpu.core_type = #tpu.core_type<tc>, window_params = [{transform_indices = @transform_0, window_bounds = array<i64: 1, 8, 128>}, {pipeline_mode = #tpu.pipeline_mode<synchronous>, transform_indices = @transform_1, window_bounds = array<i64: 1, 8, 128>}, {transform_indices = @transform_2, window_bounds = array<i64: 1>}, {pipeline_mode = #tpu.pipeline_mode<synchronous>, transform_indices = @transform_3, window_bounds = array<i64: 128, 384>}, {pipeline_mode = #tpu.pipeline_mode<synchronous>, transform_indices = @transform_4, window_bounds = array<i64: 1, 384>}, {pipeline_mode = #tpu.pipeline_mode<synchronous>, transform_indices = @transform_5, window_bounds = array<i64: 128, 128>}, {pipeline_mode = #tpu.pipeline_mode<synchronous>, transform_indices = @transform_6, window_bounds = array<i64: 1, 128>}, {pipeline_mode = #tpu.pipeline_mode<synchronous>, transform_indices = @transform_7, window_bounds = array<i64: 128, 256>}, {pipeline_mode = #tpu.pipeline_mode<synchronous>, transform_indices = @transform_8, window_bounds = array<i64: 1, 256>}, {pipeline_mode = #tpu.pipeline_mode<synchronous>, transform_indices = @transform_9, window_bounds = array<i64: 256, 128>}, {pipeline_mode = #tpu.pipeline_mode<synchronous>, transform_indices = @transform_10, window_bounds = array<i64: 1, 128>}, {pipeline_mode = #tpu.pipeline_mode<synchronous>, transform_indices = @transform_11, window_bounds = array<i64: 1, 128>}, {pipeline_mode = #tpu.pipeline_mode<synchronous>, transform_indices = @transform_12, window_bounds = array<i64: 1, 128>}, {pipeline_mode = #tpu.pipeline_mode<synchronous>, transform_indices = @transform_13, window_bounds = array<i64: 1, 128>}, {pipeline_mode = #tpu.pipeline_mode<synchronous>, transform_indices = @transform_14, window_bounds = array<i64: 1, 128>}, {transform_indices = @transform_15, window_bounds = array<i64: 1, 8, 128>}]} {
    %c0 = arith.constant 0 : index
    %c0_0 = arith.constant 0 : index
    %c0_1 = arith.constant 0 : index
    %0 = vector.load %arg1[%c0, %c0_0, %c0_1] : memref<1x8x128xf32, #tpu.memory_space<vmem>>, vector<1x8x128xf32>
    %1 = vector.shape_cast %0 : vector<1x8x128xf32> to vector<8x128xf32>
    %c0_2 = arith.constant 0 : index
    %2 = memref.load %arg3[%c0_2] : memref<1xf32, #tpu.memory_space<smem>>
    %c0_3 = arith.constant 0 : index
    %c0_4 = arith.constant 0 : index
    %c0_5 = arith.constant 0 : index
    %3 = vector.load %arg2[%c0_3, %c0_4, %c0_5] : memref<1x8x128xf32, #tpu.memory_space<vmem>>, vector<1x8x128xf32>
    %4 = vector.shape_cast %3 : vector<1x8x128xf32> to vector<8x128xf32>
    %5 = vector.broadcast %2 : f32 to vector<8x128xf32>
    %6 = arith.mulf %5, %4 : vector<8x128xf32>
    %7 = arith.addf %1, %6 : vector<8x128xf32>
    %cst = arith.constant 3.200000e+01 : f32
    %cst_6 = arith.constant -5.000000e-01 : f32
    %8 = math.powf %cst, %cst_6 : f32
    %9 = arith.truncf %7 : vector<8x128xf32> to vector<8x128xbf16>
    %c0_7 = arith.constant 0 : index
    %c0_8 = arith.constant 0 : index
    %10 = vector.load %arg4[%c0_7, %c0_8] : memref<128x384xbf16, #tpu.memory_space<vmem>>, vector<128x384xbf16>
    %cst_9 = arith.constant dense<0.000000e+00> : vector<8x384xf32>
    %11 = tpu.matmul %9, %10, %cst_9 {dimension_numbers = #tpu.dot_dimension_numbers<[1], [0], [0], [1], [0, 0, 1, 1], [], []>} : vector<8x128xbf16>, vector<128x384xbf16>, vector<8x384xf32> -> vector<8x384xf32>
    %c0_10 = arith.constant 0 : index
    %c0_11 = arith.constant 0 : index
    %12 = vector.load %arg5[%c0_10, %c0_11] : memref<1x384xf32, #tpu.memory_space<vmem>>, vector<1x384xf32>
    %13 = vector.broadcast %12 : vector<1x384xf32> to vector<8x384xf32>
    %14 = arith.addf %11, %13 : vector<8x384xf32>
    %15 = vector.extract_strided_slice %14 {offsets = [0, 0], sizes = [8, 128], strides = [1, 1]} : vector<8x384xf32> to vector<8x128xf32>
    %16 = vector.broadcast %8 : f32 to vector<8x128xf32>
    %17 = arith.mulf %15, %16 : vector<8x128xf32>
    %18 = arith.truncf %17 : vector<8x128xf32> to vector<8x128xbf16>
    %19 = vector.shape_cast %18 : vector<8x128xbf16> to vector<8x4x32xbf16>
    %20 = tpu.transpose %19, [1, 0, 2] : vector<8x4x32xbf16> -> vector<4x8x32xbf16>
    %21 = vector.extract_strided_slice %14 {offsets = [0, 128], sizes = [8, 128], strides = [1, 1]} : vector<8x384xf32> to vector<8x128xf32>
    %22 = arith.truncf %21 : vector<8x128xf32> to vector<8x128xbf16>
    %23 = vector.shape_cast %22 : vector<8x128xbf16> to vector<8x4x32xbf16>
    %24 = tpu.transpose %23, [1, 0, 2] : vector<8x4x32xbf16> -> vector<4x8x32xbf16>
    %25 = vector.extract_strided_slice %14 {offsets = [0, 256], sizes = [8, 128], strides = [1, 1]} : vector<8x384xf32> to vector<8x128xf32>
    %26 = arith.truncf %25 : vector<8x128xf32> to vector<8x128xbf16>
    %27 = vector.shape_cast %26 : vector<8x128xbf16> to vector<8x4x32xbf16>
    %28 = tpu.transpose %27, [1, 0, 2] : vector<8x4x32xbf16> -> vector<4x8x32xbf16>
    "tpu.trace_start"() <{level = 10 : i32, message = "hqd,hkd->hqk"}> : () -> ()
    %cst_12 = arith.constant dense<0.000000e+00> : vector<4x8x8xf32>
    %29 = tpu.matmul %20, %24, %cst_12 {dimension_numbers = #tpu.dot_dimension_numbers<[2], [2], [1], [1], [0, 0, 0, 1, 1, 1], [0], [0]>} : vector<4x8x32xbf16>, vector<4x8x32xbf16>, vector<4x8x8xf32> -> vector<4x8x8xf32>
    "tpu.trace_stop"() : () -> ()
    %cst_13 = arith.constant dense<0xFF800000> : vector<4x8xf32>
    %30 = vector.multi_reduction <maximumf>, %29, %cst_13 [2] : vector<4x8x8xf32> to vector<4x8xf32>
    %31 = vector.shape_cast %30 : vector<4x8xf32> to vector<4x8x1xf32>
    %32 = vector.broadcast %31 : vector<4x8x1xf32> to vector<4x8x8xf32>
    %33 = arith.subf %29, %32 : vector<4x8x8xf32>
    %34 = math.exp %33 : vector<4x8x8xf32>
    %cst_14 = arith.constant dense<0.000000e+00> : vector<4x8xf32>
    %35 = vector.multi_reduction <add>, %34, %cst_14 [2] : vector<4x8x8xf32> to vector<4x8xf32>
    %36 = vector.shape_cast %35 : vector<4x8xf32> to vector<4x8x1xf32>
    %37 = tpu.reciprocal %36 {approx = true} : vector<4x8x1xf32> -> vector<4x8x1xf32>
    %38 = vector.broadcast %37 : vector<4x8x1xf32> to vector<4x8x8xf32>
    %39 = arith.mulf %34, %38 : vector<4x8x8xf32>
    %40 = arith.truncf %39 : vector<4x8x8xf32> to vector<4x8x8xbf16>
    "tpu.trace_start"() <{level = 10 : i32, message = "hqk,hkd->hqd"}> : () -> ()
    %cst_15 = arith.constant dense<0.000000e+00> : vector<4x8x32xf32>
    %41 = tpu.matmul %40, %28, %cst_15 {dimension_numbers = #tpu.dot_dimension_numbers<[2], [1], [1], [2], [0, 0, 0, 1, 1, 2], [0], [0]>} : vector<4x8x8xbf16>, vector<4x8x32xbf16>, vector<4x8x32xf32> -> vector<4x8x32xf32>
    "tpu.trace_stop"() : () -> ()
    %42 = tpu.transpose %41, [1, 0, 2] : vector<4x8x32xf32> -> vector<8x4x32xf32>
    %43 = vector.shape_cast %42 : vector<8x4x32xf32> to vector<8x128xf32>
    %44 = arith.truncf %43 : vector<8x128xf32> to vector<8x128xbf16>
    %c0_16 = arith.constant 0 : index
    %c0_17 = arith.constant 0 : index
    %45 = vector.load %arg6[%c0_16, %c0_17] : memref<128x128xbf16, #tpu.memory_space<vmem>>, vector<128x128xbf16>
    %cst_18 = arith.constant dense<0.000000e+00> : vector<8x128xf32>
    %46 = tpu.matmul %44, %45, %cst_18 {dimension_numbers = #tpu.dot_dimension_numbers<[1], [0], [0], [1], [0, 0, 1, 1], [], []>} : vector<8x128xbf16>, vector<128x128xbf16>, vector<8x128xf32> -> vector<8x128xf32>
    %c0_19 = arith.constant 0 : index
    %c0_20 = arith.constant 0 : index
    %47 = vector.load %arg7[%c0_19, %c0_20] : memref<1x128xf32, #tpu.memory_space<vmem>>, vector<1x128xf32>
    %48 = vector.broadcast %47 : vector<1x128xf32> to vector<8x128xf32>
    %49 = arith.addf %46, %48 : vector<8x128xf32>
    %50 = arith.addf %7, %49 : vector<8x128xf32>
    %c0_21 = arith.constant 0 : index
    %c0_22 = arith.constant 0 : index
    %51 = vector.load %arg12[%c0_21, %c0_22] : memref<1x128xf32, #tpu.memory_space<vmem>>, vector<1x128xf32>
    %c0_23 = arith.constant 0 : index
    %c0_24 = arith.constant 0 : index
    %52 = vector.load %arg13[%c0_23, %c0_24] : memref<1x128xf32, #tpu.memory_space<vmem>>, vector<1x128xf32>
    %cst_25 = arith.constant dense<0.000000e+00> : vector<8xf32>
    %53 = vector.multi_reduction <add>, %50, %cst_25 [1] : vector<8x128xf32> to vector<8xf32>
    %54 = vector.shape_cast %53 : vector<8xf32> to vector<8x1xf32>
    %cst_26 = arith.constant 1.280000e+02 : f32
    %55 = vector.broadcast %cst_26 : f32 to vector<8x1xf32>
    %56 = arith.divf %54, %55 : vector<8x1xf32>
    %57 = vector.broadcast %56 : vector<8x1xf32> to vector<8x128xf32>
    %58 = arith.subf %50, %57 : vector<8x128xf32>
    %59 = arith.mulf %58, %58 : vector<8x128xf32>
    %cst_27 = arith.constant dense<0.000000e+00> : vector<8xf32>
    %60 = vector.multi_reduction <add>, %59, %cst_27 [1] : vector<8x128xf32> to vector<8xf32>
    %61 = vector.shape_cast %60 : vector<8xf32> to vector<8x1xf32>
    %cst_28 = arith.constant 1.280000e+02 : f32
    %62 = vector.broadcast %cst_28 : f32 to vector<8x1xf32>
    %63 = arith.divf %61, %62 : vector<8x1xf32>
    %64 = vector.broadcast %56 : vector<8x1xf32> to vector<8x128xf32>
    %65 = arith.subf %50, %64 : vector<8x128xf32>
    %cst_29 = arith.constant 9.99999974E-6 : f32
    %66 = vector.broadcast %cst_29 : f32 to vector<8x1xf32>
    %67 = arith.addf %63, %66 : vector<8x1xf32>
    %68 = math.rsqrt %67 : vector<8x1xf32>
    %69 = vector.broadcast %68 : vector<8x1xf32> to vector<8x128xf32>
    %70 = arith.mulf %65, %69 : vector<8x128xf32>
    %71 = vector.broadcast %51 : vector<1x128xf32> to vector<8x128xf32>
    %72 = arith.mulf %70, %71 : vector<8x128xf32>
    %73 = vector.broadcast %52 : vector<1x128xf32> to vector<8x128xf32>
    %74 = arith.addf %72, %73 : vector<8x128xf32>
    %75 = arith.truncf %74 : vector<8x128xf32> to vector<8x128xbf16>
    %c0_30 = arith.constant 0 : index
    %c0_31 = arith.constant 0 : index
    %76 = vector.load %arg8[%c0_30, %c0_31] : memref<128x256xbf16, #tpu.memory_space<vmem>>, vector<128x256xbf16>
    %cst_32 = arith.constant dense<0.000000e+00> : vector<8x256xf32>
    %77 = tpu.matmul %75, %76, %cst_32 {dimension_numbers = #tpu.dot_dimension_numbers<[1], [0], [0], [1], [0, 0, 1, 1], [], []>} : vector<8x128xbf16>, vector<128x256xbf16>, vector<8x256xf32> -> vector<8x256xf32>
    %c0_33 = arith.constant 0 : index
    %c0_34 = arith.constant 0 : index
    %78 = vector.load %arg9[%c0_33, %c0_34] : memref<1x256xf32, #tpu.memory_space<vmem>>, vector<1x256xf32>
    %79 = vector.broadcast %78 : vector<1x256xf32> to vector<8x256xf32>
    %80 = arith.addf %77, %79 : vector<8x256xf32>
    %cst_35 = arith.constant 0.000000e+00 : f32
    %81 = vector.broadcast %cst_35 : f32 to vector<8x256xf32>
    %82 = arith.maximumf %80, %81 : vector<8x256xf32>
    %83 = arith.truncf %82 : vector<8x256xf32> to vector<8x256xbf16>
    %c0_36 = arith.constant 0 : index
    %c0_37 = arith.constant 0 : index
    %84 = vector.load %arg10[%c0_36, %c0_37] : memref<256x128xbf16, #tpu.memory_space<vmem>>, vector<256x128xbf16>
    %cst_38 = arith.constant dense<0.000000e+00> : vector<8x128xf32>
    %85 = tpu.matmul %83, %84, %cst_38 {dimension_numbers = #tpu.dot_dimension_numbers<[1], [0], [0], [1], [0, 0, 1, 1], [], []>} : vector<8x256xbf16>, vector<256x128xbf16>, vector<8x128xf32> -> vector<8x128xf32>
    %c0_39 = arith.constant 0 : index
    %c0_40 = arith.constant 0 : index
    %86 = vector.load %arg11[%c0_39, %c0_40] : memref<1x128xf32, #tpu.memory_space<vmem>>, vector<1x128xf32>
    %87 = vector.broadcast %86 : vector<1x128xf32> to vector<8x128xf32>
    %88 = arith.addf %85, %87 : vector<8x128xf32>
    %89 = arith.addf %74, %88 : vector<8x128xf32>
    %c0_41 = arith.constant 0 : index
    %c0_42 = arith.constant 0 : index
    %90 = vector.load %arg14[%c0_41, %c0_42] : memref<1x128xf32, #tpu.memory_space<vmem>>, vector<1x128xf32>
    %c0_43 = arith.constant 0 : index
    %c0_44 = arith.constant 0 : index
    %91 = vector.load %arg15[%c0_43, %c0_44] : memref<1x128xf32, #tpu.memory_space<vmem>>, vector<1x128xf32>
    %cst_45 = arith.constant dense<0.000000e+00> : vector<8xf32>
    %92 = vector.multi_reduction <add>, %89, %cst_45 [1] : vector<8x128xf32> to vector<8xf32>
    %93 = vector.shape_cast %92 : vector<8xf32> to vector<8x1xf32>
    %cst_46 = arith.constant 1.280000e+02 : f32
    %94 = vector.broadcast %cst_46 : f32 to vector<8x1xf32>
    %95 = arith.divf %93, %94 : vector<8x1xf32>
    %96 = vector.broadcast %95 : vector<8x1xf32> to vector<8x128xf32>
    %97 = arith.subf %89, %96 : vector<8x128xf32>
    %98 = arith.mulf %97, %97 : vector<8x128xf32>
    %cst_47 = arith.constant dense<0.000000e+00> : vector<8xf32>
    %99 = vector.multi_reduction <add>, %98, %cst_47 [1] : vector<8x128xf32> to vector<8xf32>
    %100 = vector.shape_cast %99 : vector<8xf32> to vector<8x1xf32>
    %cst_48 = arith.constant 1.280000e+02 : f32
    %101 = vector.broadcast %cst_48 : f32 to vector<8x1xf32>
    %102 = arith.divf %100, %101 : vector<8x1xf32>
    %103 = vector.broadcast %95 : vector<8x1xf32> to vector<8x128xf32>
    %104 = arith.subf %89, %103 : vector<8x128xf32>
    %cst_49 = arith.constant 9.99999974E-6 : f32
    %105 = vector.broadcast %cst_49 : f32 to vector<8x1xf32>
    %106 = arith.addf %102, %105 : vector<8x1xf32>
    %107 = math.rsqrt %106 : vector<8x1xf32>
    %108 = vector.broadcast %107 : vector<8x1xf32> to vector<8x128xf32>
    %109 = arith.mulf %104, %108 : vector<8x128xf32>
    %110 = vector.broadcast %90 : vector<1x128xf32> to vector<8x128xf32>
    %111 = arith.mulf %109, %110 : vector<8x128xf32>
    %112 = vector.broadcast %91 : vector<1x128xf32> to vector<8x128xf32>
    %113 = arith.addf %111, %112 : vector<8x128xf32>
    %c0_50 = arith.constant 0 : index
    %c0_51 = arith.constant 0 : index
    %c0_52 = arith.constant 0 : index
    %114 = vector.load %arg16[%c0_50, %c0_51, %c0_52] : memref<1x8x128xf32, #tpu.memory_space<vmem>>, vector<1x8x128xf32>
    %115 = vector.shape_cast %114 : vector<1x8x128xf32> to vector<8x128xf32>
    %116 = vector.shape_cast %113 : vector<8x128xf32> to vector<1x8x128xf32>
    tpu.vector_store %arg16[%c0_50, %c0_51, %c0_52], %116 {strides = array<i32>} : memref<1x8x128xf32, #tpu.memory_space<vmem>>, vector<1x8x128xf32>,
    return
  }
  func.func @transform_0(%arg0: i32) -> (i32, i32, i32) {
    %c0_i32 = arith.constant 0 : i32
    %c0_i32_0 = arith.constant 0 : i32
    %c0_i32_1 = arith.constant 0 : i32
    return %arg0, %c0_i32, %c0_i32_0 : i32, i32, i32
  }
  func.func @transform_1(%arg0: i32) -> (i32, i32, i32) {
    %c0_i32 = arith.constant 0 : i32
    %c0_i32_0 = arith.constant 0 : i32
    %c0_i32_1 = arith.constant 0 : i32
    %c0_i32_2 = arith.constant 0 : i32
    return %c0_i32, %c0_i32_0, %c0_i32_1 : i32, i32, i32
  }
  func.func @transform_2(%arg0: i32) -> i32 {
    %c0_i32 = arith.constant 0 : i32
    %c0_i32_0 = arith.constant 0 : i32
    return %c0_i32 : i32
  }
  func.func @transform_3(%arg0: i32) -> (i32, i32) {
    %c0_i32 = arith.constant 0 : i32
    %c0_i32_0 = arith.constant 0 : i32
    %c0_i32_1 = arith.constant 0 : i32
    return %c0_i32, %c0_i32_0 : i32, i32
  }
  func.func @transform_4(%arg0: i32) -> (i32, i32) {
    %c0_i32 = arith.constant 0 : i32
    %c0_i32_0 = arith.constant 0 : i32
    %c0_i32_1 = arith.constant 0 : i32
    return %c0_i32, %c0_i32_0 : i32, i32
  }
  func.func @transform_5(%arg0: i32) -> (i32, i32) {
    %c0_i32 = arith.constant 0 : i32
    %c0_i32_0 = arith.constant 0 : i32
    %c0_i32_1 = arith.constant 0 : i32
    return %c0_i32, %c0_i32_0 : i32, i32
  }
  func.func @transform_6(%arg0: i32) -> (i32, i32) {
    %c0_i32 = arith.constant 0 : i32
    %c0_i32_0 = arith.constant 0 : i32
    %c0_i32_1 = arith.constant 0 : i32
    return %c0_i32, %c0_i32_0 : i32, i32
  }
  func.func @transform_7(%arg0: i32) -> (i32, i32) {
    %c0_i32 = arith.constant 0 : i32
    %c0_i32_0 = arith.constant 0 : i32
    %c0_i32_1 = arith.constant 0 : i32
    return %c0_i32, %c0_i32_0 : i32, i32
  }
  func.func @transform_8(%arg0: i32) -> (i32, i32) {
    %c0_i32 = arith.constant 0 : i32
    %c0_i32_0 = arith.constant 0 : i32
    %c0_i32_1 = arith.constant 0 : i32
    return %c0_i32, %c0_i32_0 : i32, i32
  }
  func.func @transform_9(%arg0: i32) -> (i32, i32) {
    %c0_i32 = arith.constant 0 : i32
    %c0_i32_0 = arith.constant 0 : i32
    %c0_i32_1 = arith.constant 0 : i32
    return %c0_i32, %c0_i32_0 : i32, i32
  }
  func.func @transform_10(%arg0: i32) -> (i32, i32) {
    %c0_i32 = arith.constant 0 : i32
    %c0_i32_0 = arith.constant 0 : i32
    %c0_i32_1 = arith.constant 0 : i32
    return %c0_i32, %c0_i32_0 : i32, i32
  }
  func.func @transform_11(%arg0: i32) -> (i32, i32) {
    %c0_i32 = arith.constant 0 : i32
    %c0_i32_0 = arith.constant 0 : i32
    %c0_i32_1 = arith.constant 0 : i32
    return %c0_i32, %c0_i32_0 : i32, i32
  }
  func.func @transform_12(%arg0: i32) -> (i32, i32) {
    %c0_i32 = arith.constant 0 : i32
    %c0_i32_0 = arith.constant 0 : i32
    %c0_i32_1 = arith.constant 0 : i32
    return %c0_i32, %c0_i32_0 : i32, i32
  }
  func.func @transform_13(%arg0: i32) -> (i32, i32) {
    %c0_i32 = arith.constant 0 : i32
    %c0_i32_0 = arith.constant 0 : i32
    %c0_i32_1 = arith.constant 0 : i32
    return %c0_i32, %c0_i32_0 : i32, i32
  }
  func.func @transform_14(%arg0: i32) -> (i32, i32) {
    %c0_i32 = arith.constant 0 : i32
    %c0_i32_0 = arith.constant 0 : i32
    %c0_i32_1 = arith.constant 0 : i32
    return %c0_i32, %c0_i32_0 : i32, i32
  }
  func.func @transform_15(%arg0: i32) -> (i32, i32, i32) {
    %c0_i32 = arith.constant 0 : i32
    %c0_i32_0 = arith.constant 0 : i32
    %c0_i32_1 = arith.constant 0 : i32
    return %arg0, %c0_i32, %c0_i32_0 : i32, i32, i32
  }
}

</mosaic_0001>

<llo_original>
// kernel: tpu_custom_call.1
$region0: #{tpu_custom_call.1}
  #allocation0 [shape = 'u32[]', space=smem, size = 0x4, offset = 0x4, fixed_abs, tag = 'smem constant byte address 0x4 - core index']
  #allocation1 [shape = 'u32[144,128]{1,0:T(1,128)}', space=vmem, size = 0x12000, scoped, tag = 'internal scratch']
  #allocation2 [shape = 'f32[1]{0:T(128)S(6)}', space=smem, size = 0x200, scoped, tag = 'scoped memory for tpu_custom_call.1']
  %s0 = inlined_call_operand.hbm [shape: f32[2,8,128], index: 0, kind: input, shape index: {}]
  %s1 = inlined_call_operand.hbm [shape: f32[1,8,128], index: 1, kind: input, shape index: {}]
  %s2 = inlined_call_operand.<no memory space> [shape: f32[1], index: 2, kind: input, shape index: {}]
  %s3 = inlined_call_operand.hbm [shape: bf16[128,384], index: 3, kind: input, shape index: {}]
  %s4 = inlined_call_operand.vmem [shape: f32[1,384], index: 4, kind: input, shape index: {}]
  %s5 = inlined_call_operand.hbm [shape: bf16[128,128], index: 5, kind: input, shape index: {}]
  %s6 = inlined_call_operand.vmem [shape: f32[1,128], index: 6, kind: input, shape index: {}]
  %s7 = inlined_call_operand.hbm [shape: bf16[128,256], index: 7, kind: input, shape index: {}]
  %s8 = inlined_call_operand.vmem [shape: f32[1,256], index: 8, kind: input, shape index: {}]
  %s9 = inlined_call_operand.hbm [shape: bf16[256,128], index: 9, kind: input, shape index: {}]
  %s10 = inlined_call_operand.vmem [shape: f32[1,128], index: 10, kind: input, shape index: {}]
  %s11 = inlined_call_operand.vmem [shape: f32[1,128], index: 11, kind: input, shape index: {}]
  %s12 = inlined_call_operand.vmem [shape: f32[1,128], index: 12, kind: input, shape index: {}]
  %s13 = inlined_call_operand.vmem [shape: f32[1,128], index: 13, kind: input, shape index: {}]
  %s14 = inlined_call_operand.vmem [shape: f32[1,128], index: 14, kind: input, shape index: {}]
  %s15 = inlined_call_operand.hbm [shape: f32[2,8,128], index: 15, kind: output, shape index: {}]
  %s16 = sld [smem:[#allocation0]]
  $region117: #{tpu_custom_call.1} parent=0
    _
  %s18 = ssub.s32 1, %s16
  %s19 = scalar_select 0, %s18, %s16
  %20 = sst [smem:[#allocation2]] %s2
  $region1: #{tpu_custom_call.1} parent=0
    #allocation3 [shape = 'u8[8192]{0}', space=vmem, size = 0x2000, scoped, tag = 'input window, operand 0']
    #allocation4 [shape = 's32[2]{0}', space=sflag, size = 0x8, scoped, tag = 'scoped memory for tpu_custom_call.1']
    #allocation5 [shape = 's32[2]{0}', space=sflag, size = 0x8, scoped, tag = 'scoped memory for tpu_custom_call.1']
    #allocation6 [shape = 'u8[4096]{0}', space=vmem, size = 0x1000, scoped, tag = 'input window, operand 1, single buffered']
    #allocation7 [shape = 's32[1]{0}', space=sflag, size = 0x4, scoped, tag = 'scoped memory for tpu_custom_call.1']
    #allocation8 [shape = 'u8[98304]{0}', space=vmem, size = 0x18000, scoped, tag = 'input window, operand 3, single buffered']
    #allocation9 [shape = 'u8[32768]{0}', space=vmem, size = 0x8000, scoped, tag = 'input window, operand 5, single buffered']
    #allocation10 [shape = 's32[1]{0}', space=sflag, size = 0x4, scoped, tag = 'scoped memory for tpu_custom_call.1']
    #allocation11 [shape = 'u8[65536]{0}', space=vmem, size = 0x10000, scoped, tag = 'input window, operand 7, single buffered']
    #allocation12 [shape = 'u8[65536]{0}', space=vmem, size = 0x10000, scoped, tag = 'input window, operand 9, single buffered']
    #allocation13 [shape = 's32[1]{0}', space=sflag, size = 0x4, scoped, tag = 'scoped memory for tpu_custom_call.1']
    #allocation14 [shape = 'u8[8192]{0}', space=vmem, size = 0x2000, scoped, tag = 'output window, operand 0']
    %21 = vsyncpa [#allocation4], 0
    %s22 = scalar_lea.sflag [#allocation4], 1
    %23 = vsyncpa %s22, 0
    %24 = vsyncpa [#allocation7], 0
    %25 = vsyncpa [#allocation10], 0
    %26 = vsyncpa [#allocation13], 0
    %27 = vsyncpa [#allocation5], 0
    %s28 = scalar_lea.sflag [#allocation5], 1
    %29 = vsyncpa %s28, 0
    loop: start=0, step=1, limit=4
    $region2: #{tpu_custom_call.1} parent=1 // loop_pre_header
      _
    $region3: #{tpu_custom_call.1} parent=1 // loop_header
      %s31 = sphi 0, %s35
      %p32 = scmp.ge.s32.totalorder %s31, 4
      %s41 = sphi 0, %s43
      %s44 = sphi 0, %s41
      %s45 = sphi 0, %s44
      %s61 = sphi 0, %s45
      %s65 = sphi 0, %s65
      %s67 = sphi 0, %s65
      %s68 = sphi 0, %s67
      %s82 = sphi 0, %s68
      %s86 = sphi 0, %s86
      %s88 = sphi 0, %s86
      %s89 = sphi 0, %s88
      %s103 = sphi 0, %s89
      %s107 = sphi 0, %s107
      %s109 = sphi 0, %s107
      %s110 = sphi 0, %s109
      %s124 = sphi 0, %s110
      %s128 = sphi 0, %s128
      %s130 = sphi 0, %s128
      %s131 = sphi 0, %s130
      %s145 = sphi 0, %s131
      %s149 = sphi 0, %s149
      %s151 = sphi 0, %s149
      %s152 = sphi 0, %s151
      %s166 = sphi 0, %s152
      %s170 = sphi 0, %s170
      %s172 = sphi 0, %s170
      %s173 = sphi 0, %s172
      %s187 = sphi 0, %s173
      %s191 = sphi 0, %s191
      %s193 = sphi 0, %s191
      %s194 = sphi 0, %s193
      %s208 = sphi 0, %s194
      %s212 = sphi 0, %s212
      %s214 = sphi 0, %s212
      %s215 = sphi 0, %s214
      %s229 = sphi 0, %s215
      %s233 = sphi 0, %s233
      %s235 = sphi 0, %s233
      %s236 = sphi 0, %s235
      %s250 = sphi 0, %s236
      %s254 = sphi 0, %s254
      %s256 = sphi 0, %s254
      %s257 = sphi 0, %s256
      %s271 = sphi 0, %s257
      %s275 = sphi 0, %s275
      %s277 = sphi 0, %s275
      %s278 = sphi 0, %s277
      %s292 = sphi 0, %s278
      %s296 = sphi 0, %s296
      %s298 = sphi 0, %s296
      %s299 = sphi 0, %s298
      %s313 = sphi 0, %s299
      %s317 = sphi 0, %s317
      %s319 = sphi 0, %s317
      %s320 = sphi 0, %s319
      %s334 = sphi 0, %s320
      %s338 = sphi 0, %s338
      %s340 = sphi 0, %s338
      %s341 = sphi 0, %s340
      %s355 = sphi 0, %s341
      %s361 = sphi 0, %s363
      %s364 = sphi 0, %s361
      %s365 = sphi 0, %s364
      %s381 = sphi 0, %s365
    $region4: #{tpu_custom_call.1} parent=1 // loop_header_branch
      %34 = sbr.rel (%p32) target = $region8
    $region5: #{tpu_custom_call.1} parent=1 // loop_body
      %s36 = ssub.s32 %s31, 1
      %s37 = ssub.s32 %s31, 2
      %s38 = sadd.s32 %s31, 1
      %s39 = ssub.s32 %s31, %s38
      %p40 = scmp.eq.s32.totalorder %s39, 0
      %s42 = sadd.s32 %s41, 1
      %s43 = scalar_select %p40, %s41, %s42
      %p46 = pneg %p40
      %p47 = scmp.eq.s32.totalorder %s31, 1
      %p48 = por %p46, %p47
      %p49 = scmp.ne.s32.totalorder %s41, %s44
      %p50 = scmp.eq.s32.totalorder %s31, 0
      %p51 = por %p49, %p50
      %p52 = scmp.ne.s32.totalorder %s41, %s44
      %p53 = scmp.eq.s32.totalorder %s36, 1
      %p54 = por %p52, %p53
      %p55 = scmp.ne.s32.totalorder %s44, %s45
      %p56 = scmp.eq.s32.totalorder %s36, 0
      %p57 = por %p55, %p56
      %p58 = scmp.ne.s32.totalorder %s44, %s45
      %p59 = scmp.eq.s32.totalorder %s37, 1
      %p60 = por %p58, %p59
      %p62 = scmp.ne.s32.totalorder %s45, %s61
      %p63 = scmp.eq.s32.totalorder %s37, 0
      %p64 = por %p62, %p63
      %s66 = sadd.s32 %s65, 1
      %p69 = scmp.eq.s32.totalorder %s31, 1
      %p70 = scmp.ne.s32.totalorder %s65, %s67
      %p71 = scmp.eq.s32.totalorder %s31, 0
      %p72 = por %p70, %p71
      %p73 = scmp.ne.s32.totalorder %s65, %s67
      %p74 = scmp.eq.s32.totalorder %s36, 1
      %p75 = por %p73, %p74
      %p76 = scmp.ne.s32.totalorder %s67, %s68
      %p77 = scmp.eq.s32.totalorder %s36, 0
      %p78 = por %p76, %p77
      %p79 = scmp.ne.s32.totalorder %s67, %s68
      %p80 = scmp.eq.s32.totalorder %s37, 1
      %p81 = por %p79, %p80
      %p83 = scmp.ne.s32.totalorder %s68, %s82
      %p84 = scmp.eq.s32.totalorder %s37, 0
      %p85 = por %p83, %p84
      %s87 = sadd.s32 %s86, 1
      %p90 = scmp.eq.s32.totalorder %s31, 1
      %p91 = scmp.ne.s32.totalorder %s86, %s88
      %p92 = scmp.eq.s32.totalorder %s31, 0
      %p93 = por %p91, %p92
      %p94 = scmp.ne.s32.totalorder %s86, %s88
      %p95 = scmp.eq.s32.totalorder %s36, 1
      %p96 = por %p94, %p95
      %p97 = scmp.ne.s32.totalorder %s88, %s89
      %p98 = scmp.eq.s32.totalorder %s36, 0
      %p99 = por %p97, %p98
      %p100 = scmp.ne.s32.totalorder %s88, %s89
      %p101 = scmp.eq.s32.totalorder %s37, 1
      %p102 = por %p100, %p101
      %p104 = scmp.ne.s32.totalorder %s89, %s103
      %p105 = scmp.eq.s32.totalorder %s37, 0
      %p106 = por %p104, %p105
      %s108 = sadd.s32 %s107, 1
      %p111 = scmp.eq.s32.totalorder %s31, 1
      %p112 = scmp.ne.s32.totalorder %s107, %s109
      %p113 = scmp.eq.s32.totalorder %s31, 0
      %p114 = por %p112, %p113
      %p115 = scmp.ne.s32.totalorder %s107, %s109
      %p116 = scmp.eq.s32.totalorder %s36, 1
      %p117 = por %p115, %p116
      %p118 = scmp.ne.s32.totalorder %s109, %s110
      %p119 = scmp.eq.s32.totalorder %s36, 0
      %p120 = por %p118, %p119
      %p121 = scmp.ne.s32.totalorder %s109, %s110
      %p122 = scmp.eq.s32.totalorder %s37, 1
      %p123 = por %p121, %p122
      %p125 = scmp.ne.s32.totalorder %s110, %s124
      %p126 = scmp.eq.s32.totalorder %s37, 0
      %p127 = por %p125, %p126
      %s129 = sadd.s32 %s128, 1
      %p132 = scmp.eq.s32.totalorder %s31, 1
      %p133 = scmp.ne.s32.totalorder %s128, %s130
      %p134 = scmp.eq.s32.totalorder %s31, 0
      %p135 = por %p133, %p134
      %p136 = scmp.ne.s32.totalorder %s128, %s130
      %p137 = scmp.eq.s32.totalorder %s36, 1
      %p138 = por %p136, %p137
      %p139 = scmp.ne.s32.totalorder %s130, %s131
      %p140 = scmp.eq.s32.totalorder %s36, 0
      %p141 = por %p139, %p140
      %p142 = scmp.ne.s32.totalorder %s130, %s131
      %p143 = scmp.eq.s32.totalorder %s37, 1
      %p144 = por %p142, %p143
      %p146 = scmp.ne.s32.totalorder %s131, %s145
      %p147 = scmp.eq.s32.totalorder %s37, 0
      %p148 = por %p146, %p147
      %s150 = sadd.s32 %s149, 1
      %p153 = scmp.eq.s32.totalorder %s31, 1
      %p154 = scmp.ne.s32.totalorder %s149, %s151
      %p155 = scmp.eq.s32.totalorder %s31, 0
      %p156 = por %p154, %p155
      %p157 = scmp.ne.s32.totalorder %s149, %s151
      %p158 = scmp.eq.s32.totalorder %s36, 1
      %p159 = por %p157, %p158
      %p160 = scmp.ne.s32.totalorder %s151, %s152
      %p161 = scmp.eq.s32.totalorder %s36, 0
      %p162 = por %p160, %p161
      %p163 = scmp.ne.s32.totalorder %s151, %s152
      %p164 = scmp.eq.s32.totalorder %s37, 1
      %p165 = por %p163, %p164
      %p167 = scmp.ne.s32.totalorder %s152, %s166
      %p168 = scmp.eq.s32.totalorder %s37, 0
      %p169 = por %p167, %p168
      %s171 = sadd.s32 %s170, 1
      %p174 = scmp.eq.s32.totalorder %s31, 1
      %p175 = scmp.ne.s32.totalorder %s170, %s172
      %p176 = scmp.eq.s32.totalorder %s31, 0
      %p177 = por %p175, %p176
      %p178 = scmp.ne.s32.totalorder %s170, %s172
      %p179 = scmp.eq.s32.totalorder %s36, 1
      %p180 = por %p178, %p179
      %p181 = scmp.ne.s32.totalorder %s172, %s173
      %p182 = scmp.eq.s32.totalorder %s36, 0
      %p183 = por %p181, %p182
      %p184 = scmp.ne.s32.totalorder %s172, %s173
      %p185 = scmp.eq.s32.totalorder %s37, 1
      %p186 = por %p184, %p185
      %p188 = scmp.ne.s32.totalorder %s173, %s187
      %p189 = scmp.eq.s32.totalorder %s37, 0
      %p190 = por %p188, %p189
      %s192 = sadd.s32 %s191, 1
      %p195 = scmp.eq.s32.totalorder %s31, 1
      %p196 = scmp.ne.s32.totalorder %s191, %s193
      %p197 = scmp.eq.s32.totalorder %s31, 0
      %p198 = por %p196, %p197
      %p199 = scmp.ne.s32.totalorder %s191, %s193
      %p200 = scmp.eq.s32.totalorder %s36, 1
      %p201 = por %p199, %p200
      %p202 = scmp.ne.s32.totalorder %s193, %s194
      %p203 = scmp.eq.s32.totalorder %s36, 0
      %p204 = por %p202, %p203
      %p205 = scmp.ne.s32.totalorder %s193, %s194
      %p206 = scmp.eq.s32.totalorder %s37, 1
      %p207 = por %p205, %p206
      %p209 = scmp.ne.s32.totalorder %s194, %s208
      %p210 = scmp.eq.s32.totalorder %s37, 0
      %p211 = por %p209, %p210
      %s213 = sadd.s32 %s212, 1
      %p216 = scmp.eq.s32.totalorder %s31, 1
      %p217 = scmp.ne.s32.totalorder %s212, %s214
      %p218 = scmp.eq.s32.totalorder %s31, 0
      %p219 = por %p217, %p218
      %p220 = scmp.ne.s32.totalorder %s212, %s214
      %p221 = scmp.eq.s32.totalorder %s36, 1
      %p222 = por %p220, %p221
      %p223 = scmp.ne.s32.totalorder %s214, %s215
      %p224 = scmp.eq.s32.totalorder %s36, 0
      %p225 = por %p223, %p224
      %p226 = scmp.ne.s32.totalorder %s214, %s215
      %p227 = scmp.eq.s32.totalorder %s37, 1
      %p228 = por %p226, %p227
      %p230 = scmp.ne.s32.totalorder %s215, %s229
      %p231 = scmp.eq.s32.totalorder %s37, 0
      %p232 = por %p230, %p231
      %s234 = sadd.s32 %s233, 1
      %p237 = scmp.eq.s32.totalorder %s31, 1
      %p238 = scmp.ne.s32.totalorder %s233, %s235
      %p239 = scmp.eq.s32.totalorder %s31, 0
      %p240 = por %p238, %p239
      %p241 = scmp.ne.s32.totalorder %s233, %s235
      %p242 = scmp.eq.s32.totalorder %s36, 1
      %p243 = por %p241, %p242
      %p244 = scmp.ne.s32.totalorder %s235, %s236
      %p245 = scmp.eq.s32.totalorder %s36, 0
      %p246 = por %p244, %p245
      %p247 = scmp.ne.s32.totalorder %s235, %s236
      %p248 = scmp.eq.s32.totalorder %s37, 1
      %p249 = por %p247, %p248
      %p251 = scmp.ne.s32.totalorder %s236, %s250
      %p252 = scmp.eq.s32.totalorder %s37, 0
      %p253 = por %p251, %p252
      %s255 = sadd.s32 %s254, 1
      %p258 = scmp.eq.s32.totalorder %s31, 1
      %p259 = scmp.ne.s32.totalorder %s254, %s256
      %p260 = scmp.eq.s32.totalorder %s31, 0
      %p261 = por %p259, %p260
      %p262 = scmp.ne.s32.totalorder %s254, %s256
      %p263 = scmp.eq.s32.totalorder %s36, 1
      %p264 = por %p262, %p263
      %p265 = scmp.ne.s32.totalorder %s256, %s257
      %p266 = scmp.eq.s32.totalorder %s36, 0
      %p267 = por %p265, %p266
      %p268 = scmp.ne.s32.totalorder %s256, %s257
      %p269 = scmp.eq.s32.totalorder %s37, 1
      %p270 = por %p268, %p269
      %p272 = scmp.ne.s32.totalorder %s257, %s271
      %p273 = scmp.eq.s32.totalorder %s37, 0
      %p274 = por %p272, %p273
      %s276 = sadd.s32 %s275, 1
      %p279 = scmp.eq.s32.totalorder %s31, 1
      %p280 = scmp.ne.s32.totalorder %s275, %s277
      %p281 = scmp.eq.s32.totalorder %s31, 0
      %p282 = por %p280, %p281
      %p283 = scmp.ne.s32.totalorder %s275, %s277
      %p284 = scmp.eq.s32.totalorder %s36, 1
      %p285 = por %p283, %p284
      %p286 = scmp.ne.s32.totalorder %s277, %s278
      %p287 = scmp.eq.s32.totalorder %s36, 0
      %p288 = por %p286, %p287
      %p289 = scmp.ne.s32.totalorder %s277, %s278
      %p290 = scmp.eq.s32.totalorder %s37, 1
      %p291 = por %p289, %p290
      %p293 = scmp.ne.s32.totalorder %s278, %s292
      %p294 = scmp.eq.s32.totalorder %s37, 0
      %p295 = por %p293, %p294
      %s297 = sadd.s32 %s296, 1
      %p300 = scmp.eq.s32.totalorder %s31, 1
      %p301 = scmp.ne.s32.totalorder %s296, %s298
      %p302 = scmp.eq.s32.totalorder %s31, 0
      %p303 = por %p301, %p302
      %p304 = scmp.ne.s32.totalorder %s296, %s298
      %p305 = scmp.eq.s32.totalorder %s36, 1
      %p306 = por %p304, %p305
      %p307 = scmp.ne.s32.totalorder %s298, %s299
      %p308 = scmp.eq.s32.totalorder %s36, 0
      %p309 = por %p307, %p308
      %p310 = scmp.ne.s32.totalorder %s298, %s299
      %p311 = scmp.eq.s32.totalorder %s37, 1
      %p312 = por %p310, %p311
      %p314 = scmp.ne.s32.totalorder %s299, %s313
      %p315 = scmp.eq.s32.totalorder %s37, 0
      %p316 = por %p314, %p315
      %s318 = sadd.s32 %s317, 1
      %p321 = scmp.eq.s32.totalorder %s31, 1
      %p322 = scmp.ne.s32.totalorder %s317, %s319
      %p323 = scmp.eq.s32.totalorder %s31, 0
      %p324 = por %p322, %p323
      %p325 = scmp.ne.s32.totalorder %s317, %s319
      %p326 = scmp.eq.s32.totalorder %s36, 1
      %p327 = por %p325, %p326
      %p328 = scmp.ne.s32.totalorder %s319, %s320
      %p329 = scmp.eq.s32.totalorder %s36, 0
      %p330 = por %p328, %p329
      %p331 = scmp.ne.s32.totalorder %s319, %s320
      %p332 = scmp.eq.s32.totalorder %s37, 1
      %p333 = por %p331, %p332
      %p335 = scmp.ne.s32.totalorder %s320, %s334
      %p336 = scmp.eq.s32.totalorder %s37, 0
      %p337 = por %p335, %p336
      %s339 = sadd.s32 %s338, 1
      %p342 = scmp.eq.s32.totalorder %s31, 1
      %p343 = scmp.ne.s32.totalorder %s338, %s340
      %p344 = scmp.eq.s32.totalorder %s31, 0
      %p345 = por %p343, %p344
      %p346 = scmp.ne.s32.totalorder %s338, %s340
      %p347 = scmp.eq.s32.totalorder %s36, 1
      %p348 = por %p346, %p347
      %p349 = scmp.ne.s32.totalorder %s340, %s341
      %p350 = scmp.eq.s32.totalorder %s36, 0
      %p351 = por %p349, %p350
      %p352 = scmp.ne.s32.totalorder %s340, %s341
      %p353 = scmp.eq.s32.totalorder %s37, 1
      %p354 = por %p352, %p353
      %p356 = scmp.ne.s32.totalorder %s341, %s355
      %p357 = scmp.eq.s32.totalorder %s37, 0
      %p358 = por %p356, %p357
      %s359 = ssub.s32 %s31, %s38
      %p360 = scmp.eq.s32.totalorder %s359, 0
      %s362 = sadd.s32 %s361, 1
      %s363 = scalar_select %p360, %s361, %s362
      %p366 = pneg %p360
      %p367 = scmp.eq.s32.totalorder %s31, 1
      %p368 = por %p366, %p367
      %p369 = scmp.ne.s32.totalorder %s361, %s364
      %p370 = scmp.eq.s32.totalorder %s31, 0
      %p371 = por %p369, %p370
      %p372 = scmp.ne.s32.totalorder %s361, %s364
      %p373 = scmp.eq.s32.totalorder %s36, 1
      %p374 = por %p372, %p373
      %p375 = scmp.ne.s32.totalorder %s364, %s365
      %p376 = scmp.eq.s32.totalorder %s36, 0
      %p377 = por %p375, %p376
      %p378 = scmp.ne.s32.totalorder %s364, %s365
      %p379 = scmp.eq.s32.totalorder %s37, 1
      %p380 = por %p378, %p379
      %p382 = scmp.ne.s32.totalorder %s365, %s381
      %p383 = scmp.eq.s32.totalorder %s37, 0
      %p384 = por %p382, %p383
      %p385 = scmp.le.s32.totalorder 1, %s31
      %p386 = scmp.lt.s32.totalorder %s31, 3
      %p387 = pnand %p385, %p386
      %p388 = pneg %p387
      // Predicated region
      $region9: #{tpu_custom_call.1} parent=5 // pred_check
        _
      $region10: #{tpu_custom_call.1} parent=5 // pred_check_branch
        %390 = sbr.rel (%p387) target = $region12
      $region11: #{tpu_custom_call.1} parent=5 // pred_region
        %s391 = ssub.s32 %s31, 1
        // Predicated region
        $region13: #{tpu_custom_call.1} parent=11 // pred_check
          %p392 = pneg %p78
        $region14: #{tpu_custom_call.1} parent=11 // pred_check_branch
          %394 = sbr.rel (%p392) target = $region16
        $region15: #{tpu_custom_call.1} parent=11 // pred_region
          %s396 = ssub.s32 128, 128
          %397 = vsyncadd [#allocation7], %s396
          %s399 = sshll.u32 [#allocation6], 4
          %s400 = int_to_ptr.vmem [resolvable:$true] %s399
          %402 = dma.hbm_to_vmem [thread:$0]  %s1, 128, %s400, [#allocation7]
        $region16: #{tpu_custom_call.1} parent=11 // pred_fallthru
          _
        // Predicated region
        $region17: #{tpu_custom_call.1} parent=11 // pred_check
          %p403 = pneg %p99
        $region18: #{tpu_custom_call.1} parent=11 // pred_check_branch
          %405 = sbr.rel (%p403) target = $region20
        $region19: #{tpu_custom_call.1} parent=11 // pred_region
          _
        $region20: #{tpu_custom_call.1} parent=11 // pred_fallthru
          _
        // Predicated region
        $region21: #{tpu_custom_call.1} parent=11 // pred_check
          %p406 = pneg %p120
        $region22: #{tpu_custom_call.1} parent=11 // pred_check_branch
          %408 = sbr.rel (%p406) target = $region24
        $region23: #{tpu_custom_call.1} parent=11 // pred_region
          %s410 = ssub.s32 3072, 3072
          %411 = vsyncadd [#allocation7], %s410
          %s412 = sshll.u32 [#allocation8], 4
          %s413 = int_to_ptr.vmem [resolvable:$true] %s412
          %418 = dma.hbm_to_vmem [thread:$0]  %s3, 3072, %s413, [#allocation7], 192, 192, 12
        $region24: #{tpu_custom_call.1} parent=11 // pred_fallthru
          _
        // Predicated region
        $region25: #{tpu_custom_call.1} parent=11 // pred_check
          %p419 = pneg %p141
        $region26: #{tpu_custom_call.1} parent=11 // pred_check_branch
          %421 = sbr.rel (%p419) target = $region28
        $region27: #{tpu_custom_call.1} parent=11 // pred_region
          _
        $region28: #{tpu_custom_call.1} parent=11 // pred_fallthru
          _
        // Predicated region
        $region29: #{tpu_custom_call.1} parent=11 // pred_check
          %p422 = pneg %p162
        $region30: #{tpu_custom_call.1} parent=11 // pred_check_branch
          %424 = sbr.rel (%p422) target = $region32
        $region31: #{tpu_custom_call.1} parent=11 // pred_region
          %s426 = ssub.s32 1024, 1024
          %427 = vsyncadd [#allocation10], %s426
          %s428 = sshll.u32 [#allocation9], 4
          %s429 = int_to_ptr.vmem [resolvable:$true] %s428
          %434 = dma.hbm_to_vmem [thread:$0]  %s5, 1024, %s429, [#allocation10], 64, 64, 4
        $region32: #{tpu_custom_call.1} parent=11 // pred_fallthru
          _
        // Predicated region
        $region33: #{tpu_custom_call.1} parent=11 // pred_check
          %p435 = pneg %p183
        $region34: #{tpu_custom_call.1} parent=11 // pred_check_branch
          %437 = sbr.rel (%p435) target = $region36
        $region35: #{tpu_custom_call.1} parent=11 // pred_region
          _
        $region36: #{tpu_custom_call.1} parent=11 // pred_fallthru
          _
        // Predicated region
        $region37: #{tpu_custom_call.1} parent=11 // pred_check
          %p438 = pneg %p204
        $region38: #{tpu_custom_call.1} parent=11 // pred_check_branch
          %440 = sbr.rel (%p438) target = $region40
        $region39: #{tpu_custom_call.1} parent=11 // pred_region
          %s442 = ssub.s32 2048, 2048
          %443 = vsyncadd [#allocation10], %s442
          %s444 = sshll.u32 [#allocation11], 4
          %s445 = int_to_ptr.vmem [resolvable:$true] %s444
          %450 = dma.hbm_to_vmem [thread:$0]  %s7, 2048, %s445, [#allocation10], 128, 128, 8
        $region40: #{tpu_custom_call.1} parent=11 // pred_fallthru
          _
        // Predicated region
        $region41: #{tpu_custom_call.1} parent=11 // pred_check
          %p451 = pneg %p225
        $region42: #{tpu_custom_call.1} parent=11 // pred_check_branch
          %453 = sbr.rel (%p451) target = $region44
        $region43: #{tpu_custom_call.1} parent=11 // pred_region
          _
        $region44: #{tpu_custom_call.1} parent=11 // pred_fallthru
          _
        // Predicated region
        $region45: #{tpu_custom_call.1} parent=11 // pred_check
          %p454 = pneg %p246
        $region46: #{tpu_custom_call.1} parent=11 // pred_check_branch
          %456 = sbr.rel (%p454) target = $region48
        $region47: #{tpu_custom_call.1} parent=11 // pred_region
          %s458 = ssub.s32 2048, 2048
          %459 = vsyncadd [#allocation13], %s458
          %s460 = sshll.u32 [#allocation12], 4
          %s461 = int_to_ptr.vmem [resolvable:$true] %s460
          %466 = dma.hbm_to_vmem [thread:$0]  %s9, 2048, %s461, [#allocation13], 64, 64, 4
        $region48: #{tpu_custom_call.1} parent=11 // pred_fallthru
          _
        // Predicated region
        $region49: #{tpu_custom_call.1} parent=11 // pred_check
          %p467 = pneg %p267
        $region50: #{tpu_custom_call.1} parent=11 // pred_check_branch
          %469 = sbr.rel (%p467) target = $region52
        $region51: #{tpu_custom_call.1} parent=11 // pred_region
          _
        $region52: #{tpu_custom_call.1} parent=11 // pred_fallthru
          _
        // Predicated region
        $region53: #{tpu_custom_call.1} parent=11 // pred_check
          %p470 = pneg %p288
        $region54: #{tpu_custom_call.1} parent=11 // pred_check_branch
          %472 = sbr.rel (%p470) target = $region56
        $region55: #{tpu_custom_call.1} parent=11 // pred_region
          _
        $region56: #{tpu_custom_call.1} parent=11 // pred_fallthru
          _
        // Predicated region
        $region57: #{tpu_custom_call.1} parent=11 // pred_check
          %p473 = pneg %p309
        $region58: #{tpu_custom_call.1} parent=11 // pred_check_branch
          %475 = sbr.rel (%p473) target = $region60
        $region59: #{tpu_custom_call.1} parent=11 // pred_region
          _
        $region60: #{tpu_custom_call.1} parent=11 // pred_fallthru
          _
        // Predicated region
        $region61: #{tpu_custom_call.1} parent=11 // pred_check
          %p476 = pneg %p330
        $region62: #{tpu_custom_call.1} parent=11 // pred_check_branch
          %478 = sbr.rel (%p476) target = $region64
        $region63: #{tpu_custom_call.1} parent=11 // pred_region
          _
        $region64: #{tpu_custom_call.1} parent=11 // pred_fallthru
          _
        // Predicated region
        $region65: #{tpu_custom_call.1} parent=11 // pred_check
          %p479 = pneg %p351
        $region66: #{tpu_custom_call.1} parent=11 // pred_check_branch
          %481 = sbr.rel (%p479) target = $region68
        $region67: #{tpu_custom_call.1} parent=11 // pred_region
          _
        $region68: #{tpu_custom_call.1} parent=11 // pred_fallthru
          _
      $region12: #{tpu_custom_call.1} parent=5 // pred_fallthru
        _
      %p482 = scmp.lt.s32.totalorder %s31, 2
      // Predicated region
      $region69: #{tpu_custom_call.1} parent=5 // pred_check
        %p483 = pneg %p482
      $region70: #{tpu_custom_call.1} parent=5 // pred_check_branch
        %485 = sbr.rel (%p483) target = $region72
      $region71: #{tpu_custom_call.1} parent=5 // pred_region
        // Predicated region
        $region73: #{tpu_custom_call.1} parent=71 // pred_check
          %p486 = pneg %p51
        $region74: #{tpu_custom_call.1} parent=71 // pred_check_branch
          %488 = sbr.rel (%p486) target = $region76
        $region75: #{tpu_custom_call.1} parent=71 // pred_region
          %s489 = sand.u32 %s41, 1
          %s490 = scalar_lea.sflag [#allocation4], %s489
          %s491 = sand.u32 %s41, 1
          %s492 = smul.addr %s491, 8
          %s493 = scalar_lea.vmem [#allocation3], %s492
          %s495 = ssub.s32 128, 128
          %496 = vsyncadd %s490, %s495
          %s497 = smul.addr %s31, 128
          %s498 = scalar_lea.hbm %s0, %s497
          %s500 = sshll.u32 %s493, 4
          %s501 = int_to_ptr.vmem [resolvable:$true] %s500
          %503 = dma.hbm_to_vmem [thread:$0]  %s498, 128, %s501, %s490
        $region76: #{tpu_custom_call.1} parent=71 // pred_fallthru
          _
      $region72: #{tpu_custom_call.1} parent=5 // pred_fallthru
        _
      %p504 = scmp.le.s32.totalorder 1, %s31
      %p505 = scmp.lt.s32.totalorder %s31, 3
      %p506 = pnand %p504, %p505
      %p507 = pneg %p506
      // Predicated region
      $region77: #{tpu_custom_call.1} parent=5 // pred_check
        _
      $region78: #{tpu_custom_call.1} parent=5 // pred_check_branch
        %509 = sbr.rel (%p506) target = $region80
      $region79: #{tpu_custom_call.1} parent=5 // pred_region
        %s510 = ssub.s32 %s31, 1
        %s511 = sand.u32 %s44, 1
        %s512 = scalar_lea.sflag [#allocation4], %s511
        %s513 = sand.u32 %s44, 1
        %s514 = smul.addr %s513, 8
        %s515 = scalar_lea.vmem [#allocation3], %s514
        // Predicated region
        $region81: #{tpu_custom_call.1} parent=79 // pred_check
          %p516 = pneg %p57
        $region82: #{tpu_custom_call.1} parent=79 // pred_check_branch
          %518 = sbr.rel (%p516) target = $region84
        $region83: #{tpu_custom_call.1} parent=79 // pred_region
          %519 = dma.done %s512, 128
        $region84: #{tpu_custom_call.1} parent=79 // pred_fallthru
          _
        // Predicated region
        $region85: #{tpu_custom_call.1} parent=79 // pred_check
          %p520 = pneg %p78
        $region86: #{tpu_custom_call.1} parent=79 // pred_check_branch
          %522 = sbr.rel (%p520) target = $region88
        $region87: #{tpu_custom_call.1} parent=79 // pred_region
          %523 = dma.done [#allocation7], 128
        $region88: #{tpu_custom_call.1} parent=79 // pred_fallthru
          _
        // Predicated region
        $region89: #{tpu_custom_call.1} parent=79 // pred_check
          %p524 = pneg %p120
        $region90: #{tpu_custom_call.1} parent=79 // pred_check_branch
          %526 = sbr.rel (%p524) target = $region92
        $region91: #{tpu_custom_call.1} parent=79 // pred_region
          %527 = dma.done [#allocation7], 3072
        $region92: #{tpu_custom_call.1} parent=79 // pred_fallthru
          _
        // Predicated region
        $region93: #{tpu_custom_call.1} parent=79 // pred_check
          %p528 = pneg %p162
        $region94: #{tpu_custom_call.1} parent=79 // pred_check_branch
          %530 = sbr.rel (%p528) target = $region96
        $region95: #{tpu_custom_call.1} parent=79 // pred_region
          %531 = dma.done [#allocation10], 1024
        $region96: #{tpu_custom_call.1} parent=79 // pred_fallthru
          _
        // Predicated region
        $region97: #{tpu_custom_call.1} parent=79 // pred_check
          %p532 = pneg %p204
        $region98: #{tpu_custom_call.1} parent=79 // pred_check_branch
          %534 = sbr.rel (%p532) target = $region100
        $region99: #{tpu_custom_call.1} parent=79 // pred_region
          %535 = dma.done [#allocation10], 2048
        $region100: #{tpu_custom_call.1} parent=79 // pred_fallthru
          _
        // Predicated region
        $region101: #{tpu_custom_call.1} parent=79 // pred_check
          %p536 = pneg %p246
        $region102: #{tpu_custom_call.1} parent=79 // pred_check_branch
          %538 = sbr.rel (%p536) target = $region104
        $region103: #{tpu_custom_call.1} parent=79 // pred_region
          %539 = dma.done [#allocation13], 2048
        $region104: #{tpu_custom_call.1} parent=79 // pred_fallthru
          _
        %s540 = sand.u32 %s44, 1
        %s541 = scalar_lea.sflag [#allocation4], %s540
        %s542 = sand.u32 %s44, 1
        %s543 = smul.addr %s542, 8
        %s544 = scalar_lea.vmem [#allocation3], %s543
        %p545 = pneg %p57
        %p546 = pneg %p54
        %p547 = pneg %p78
        %p548 = pneg %p75
        %p549 = pneg %p99
        %p550 = pneg %p96
        %p551 = pneg %p120
        %p552 = pneg %p117
        %p553 = pneg %p141
        %p554 = pneg %p138
        %p555 = pneg %p162
        %p556 = pneg %p159
        %p557 = pneg %p183
        %p558 = pneg %p180
        %p559 = pneg %p204
        %p560 = pneg %p201
        %p561 = pneg %p225
        %p562 = pneg %p222
        %p563 = pneg %p246
        %p564 = pneg %p243
        %p565 = pneg %p267
        %p566 = pneg %p264
        %p567 = pneg %p288
        %p568 = pneg %p285
        %p569 = pneg %p309
        %p570 = pneg %p306
        %p571 = pneg %p330
        %p572 = pneg %p327
        %p573 = pneg %p351
        %p574 = pneg %p348
        %p575 = pneg %p377
        %p576 = pneg %p374
        %s577 = sand.u32 %s364, 1
        %s578 = scalar_lea.sflag [#allocation5], %s577
        %s579 = sand.u32 %s364, 1
        %s580 = smul.addr %s579, 8
        %s581 = scalar_lea.vmem [#allocation14], %s580
        %v583 = vld [vmem:[%s515] sm:$0xff]
        %s584 = sld [smem:[#allocation2]]
        %v585 = vld [vmem:[#allocation6] sm:$0xff]
        %v586 = vstv %s584
        %v587 = vmul.f32 %v586, %v585
        %v588 = vadd.f32 %v583, %v587
        %v589 = vpack.c.bf16 %v588, %v588
        %v590 = vld [vmem:[#allocation8] sm:$0xff]
        %v591 = vld [vmem:[#allocation8 + $0x8] sm:$0xf]
        %v592 = vld [vmem:[#allocation8 + $0xc] sm:$0xff]
        %v593 = vld [vmem:[#allocation8 + $0x14] sm:$0xf]
        %v594 = vld [vmem:[#allocation8 + $0x18] sm:$0xff]
        %v595 = vld [vmem:[#allocation8 + $0x20] sm:$0xf]
        %v596 = vld [vmem:[#allocation8 + $0x24] sm:$0xff]
        %v597 = vld [vmem:[#allocation8 + $0x2c] sm:$0xf]
        %v598 = vld [vmem:[#allocation8 + $0x30] sm:$0xff]
        %v599 = vld [vmem:[#allocation8 + $0x38] sm:$0xf]
        %v600 = vld [vmem:[#allocation8 + $0x3c] sm:$0xff]
        %v601 = vld [vmem:[#allocation8 + $0x44] sm:$0xf]
        %v602 = vld [vmem:[#allocation8 + $0x48] sm:$0xff]
        %v603 = vld [vmem:[#allocation8 + $0x50] sm:$0xf]
        %v604 = vld [vmem:[#allocation8 + $0x54] sm:$0xff]
        %v605 = vld [vmem:[#allocation8 + $0x5c] sm:$0xf]
        %v606 = vld [vmem:[#allocation8 + $0x60] sm:$0xff]
        %v607 = vld [vmem:[#allocation8 + $0x68] sm:$0xf]
        %v608 = vld [vmem:[#allocation8 + $0x6c] sm:$0xff]
        %v609 = vld [vmem:[#allocation8 + $0x74] sm:$0xf]
        %v610 = vld [vmem:[#allocation8 + $0x78] sm:$0xff]
        %v611 = vld [vmem:[#allocation8 + $0x80] sm:$0xf]
        %v612 = vld [vmem:[#allocation8 + $0x84] sm:$0xff]
        %v613 = vld [vmem:[#allocation8 + $0x8c] sm:$0xf]
        %v614 = vld [vmem:[#allocation8 + $0x90] sm:$0xff]
        %v615 = vld [vmem:[#allocation8 + $0x98] sm:$0xf]
        %v616 = vld [vmem:[#allocation8 + $0x9c] sm:$0xff]
        %v617 = vld [vmem:[#allocation8 + $0xa4] sm:$0xf]
        %v618 = vld [vmem:[#allocation8 + $0xa8] sm:$0xff]
        %v619 = vld [vmem:[#allocation8 + $0xb0] sm:$0xf]
        %v620 = vld [vmem:[#allocation8 + $0xb4] sm:$0xff]
        %v621 = vld [vmem:[#allocation8 + $0xbc] sm:$0xf]
        %v622 = vld [vmem:[%s4] sm:$0x7]
        %v624 = vlaneseq
        %v625 = vshrl.u32 %v624, 7
        %v626 = vsub.s32 0, %v625
        %v627 = vrot.slane %v622, %v626
        %v628 = vlaneseq
        %v629 = vshrl.u32 %v628, 7
        %v630 = vsub.s32 1, %v629
        %v631 = vrot.slane %v622, %v630
        %v632 = vlaneseq
        %v633 = vshrl.u32 %v632, 7
        %v634 = vsub.s32 2, %v633
        %v635 = vrot.slane %v622, %v634
        %v671 = vunpack.c.l.b16 %v590
        %v672 = vunpack.c.h.b16 %v590
        %v673 = vunpack.c.l.b16 %v591
        %v674 = vunpack.c.l.b16 %v592
        %v675 = vunpack.c.h.b16 %v592
        %v676 = vunpack.c.l.b16 %v593
        %v677 = vunpack.c.l.b16 %v594
        %v678 = vunpack.c.h.b16 %v594
        %v679 = vunpack.c.l.b16 %v595
        %v680 = vunpack.c.l.b16 %v596
        %v681 = vunpack.c.h.b16 %v596
        %v682 = vunpack.c.l.b16 %v597
        %v683 = vunpack.c.l.b16 %v598
        %v684 = vunpack.c.h.b16 %v598
        %v685 = vunpack.c.l.b16 %v599
        %v686 = vunpack.c.l.b16 %v600
        %v687 = vunpack.c.h.b16 %v600
        %v688 = vunpack.c.l.b16 %v601
        %v689 = vunpack.c.l.b16 %v602
        %v690 = vunpack.c.h.b16 %v602
        %v691 = vunpack.c.l.b16 %v603
        %v692 = vunpack.c.l.b16 %v604
        %v693 = vunpack.c.h.b16 %v604
        %v694 = vunpack.c.l.b16 %v605
        %v695 = vunpack.c.l.b16 %v606
        %v696 = vunpack.c.h.b16 %v606
        %v697 = vunpack.c.l.b16 %v607
        %v698 = vunpack.c.l.b16 %v608
        %v699 = vunpack.c.h.b16 %v608
        %v700 = vunpack.c.l.b16 %v609
        %v701 = vunpack.c.l.b16 %v610
        %v702 = vunpack.c.h.b16 %v610
        %v703 = vunpack.c.l.b16 %v611
        %v704 = vunpack.c.l.b16 %v612
        %v705 = vunpack.c.h.b16 %v612
        %v706 = vunpack.c.l.b16 %v613
        %v707 = vunpack.c.l.b16 %v614
        %v708 = vunpack.c.h.b16 %v614
        %v709 = vunpack.c.l.b16 %v615
        %v710 = vunpack.c.l.b16 %v616
        %v711 = vunpack.c.h.b16 %v616
        %v712 = vunpack.c.l.b16 %v617
        %v713 = vunpack.c.l.b16 %v618
        %v714 = vunpack.c.h.b16 %v618
        %v715 = vunpack.c.l.b16 %v619
        %v716 = vunpack.c.l.b16 %v620
        %v717 = vunpack.c.h.b16 %v620
        %v718 = vunpack.c.l.b16 %v621
        %v719 = vpack.c.b16 %v674, %v671
        %v720 = vpack.c.b16 %v675, %v672
        %v721 = vpack.c.b16 %v676, %v673
        %v722 = vpack.c.b16 %v680, %v677
        %v723 = vpack.c.b16 %v681, %v678
        %v724 = vpack.c.b16 %v682, %v679
        %v725 = vpack.c.b16 %v686, %v683
        %v726 = vpack.c.b16 %v687, %v684
        %v727 = vpack.c.b16 %v688, %v685
        %v728 = vpack.c.b16 %v692, %v689
        %v729 = vpack.c.b16 %v693, %v690
        %v730 = vpack.c.b16 %v694, %v691
        %v731 = vpack.c.b16 %v698, %v695
        %v732 = vpack.c.b16 %v699, %v696
        %v733 = vpack.c.b16 %v700, %v697
        %v734 = vpack.c.b16 %v704, %v701
        %v735 = vpack.c.b16 %v705, %v702
        %v736 = vpack.c.b16 %v706, %v703
        %v737 = vpack.c.b16 %v710, %v707
        %v738 = vpack.c.b16 %v711, %v708
        %v739 = vpack.c.b16 %v712, %v709
        %v740 = vpack.c.b16 %v716, %v713
        %v741 = vpack.c.b16 %v717, %v714
        %v742 = vpack.c.b16 %v718, %v715
        %767 = vmatprep.subr.bf16.mxu0 %v720
        %768 = vmatpush1.bf16.msra.mxu0 %v719
        %769 = vmatprep.subr.bf16.mxu0 %v723
        %770 = vmatpush1.bf16.msra.mxu0 %v722
        %771 = vmatprep.subr.bf16.mxu0 %v726
        %772 = vmatpush1.bf16.msra.mxu0 %v725
        %773 = vmatprep.subr.bf16.mxu0 %v729
        %774 = vmatpush1.bf16.msra.mxu0 %v728
        %775 = vmatprep.subr.bf16.mxu0 %v732
        %776 = vmatpush1.bf16.msra.mxu0 %v731
        %777 = vmatprep.subr.bf16.mxu0 %v735
        %778 = vmatpush1.bf16.msra.mxu0 %v734
        %779 = vmatprep.subr.bf16.mxu0 %v738
        %780 = vmatpush1.bf16.msra.mxu0 %v737
        %781 = vmatprep.subr.bf16.mxu0 %v741
        %782 = vmatpush1.bf16.msra.mxu0 %v740
        %783 = vmatprep.subr.bf16.mxu0 0
        %784 = vmatpush1.bf16.msra.mxu0 0
        %785 = vmatprep.subr.bf16.mxu0 0
        %786 = vmatpush1.bf16.msra.mxu0 0
        %787 = vmatprep.subr.bf16.mxu0 0
        %788 = vmatpush1.bf16.msra.mxu0 0
        %789 = vmatprep.subr.bf16.mxu0 0
        %790 = vmatpush1.bf16.msra.mxu0 0
        %791 = vmatprep.subr.bf16.mxu0 0
        %792 = vmatpush1.bf16.msra.mxu0 0
        %793 = vmatprep.subr.bf16.mxu0 0
        %794 = vmatpush1.bf16.msra.mxu0 0
        %795 = vmatprep.subr.bf16.mxu0 0
        %796 = vmatpush1.bf16.msra.mxu0 0
        %797 = vmatprep.subr.bf16.mxu0 0
        %798 = vmatpush1.bf16.msra.mxu0 0
        %799 = vmatprep.mubr.bf16.mxu0 0
        %800 = vmatmul.mubr.bf16.gmra.mrb[0].mxu0 %v589
        %v801 = vpop.f32.mrb[0].mxu0
        %v802 = vadd.f32 %v627, %v801
        %v803 = vpop.f32.mrb[0].mxu0
        %v804 = vadd.f32 %v631, %v803
        %v805 = vpop.f32.mrb[0].mxu0
        %v806 = vpop.f32.mrb[0].mxu0
        %807 = vdwg.mxu0
        %808 = vmatprep.subr.bf16.mxu0 0
        %809 = vmatpush1.bf16.msra.mxu0 %v721
        %810 = vmatprep.subr.bf16.mxu0 0
        %811 = vmatpush1.bf16.msra.mxu0 %v724
        %812 = vmatprep.subr.bf16.mxu0 0
        %813 = vmatpush1.bf16.msra.mxu0 %v727
        %814 = vmatprep.subr.bf16.mxu0 0
        %815 = vmatpush1.bf16.msra.mxu0 %v730
        %816 = vmatprep.subr.bf16.mxu0 0
        %817 = vmatpush1.bf16.msra.mxu0 %v733
        %818 = vmatprep.subr.bf16.mxu0 0
        %819 = vmatpush1.bf16.msra.mxu0 %v736
        %820 = vmatprep.subr.bf16.mxu0 0
        %821 = vmatpush1.bf16.msra.mxu0 %v739
        %822 = vmatprep.subr.bf16.mxu0 0
        %823 = vmatpush1.bf16.msra.mxu0 %v742
        %824 = vmatprep.subr.bf16.mxu0 0
        %825 = vmatpush1.bf16.msra.mxu0 0
        %826 = vmatprep.subr.bf16.mxu0 0
        %827 = vmatpush1.bf16.msra.mxu0 0
        %828 = vmatprep.subr.bf16.mxu0 0
        %829 = vmatpush1.bf16.msra.mxu0 0
        %830 = vmatprep.subr.bf16.mxu0 0
        %831 = vmatpush1.bf16.msra.mxu0 0
        %832 = vmatprep.subr.bf16.mxu0 0
        %833 = vmatpush1.bf16.msra.mxu0 0
        %834 = vmatprep.subr.bf16.mxu0 0
        %835 = vmatpush1.bf16.msra.mxu0 0
        %836 = vmatprep.subr.bf16.mxu0 0
        %837 = vmatpush1.bf16.msra.mxu0 0
        %838 = vmatprep.subr.bf16.mxu0 0
        %839 = vmatpush1.bf16.msra.mxu0 0
        %840 = vmatprep.mubr.bf16.mxu0 0
        %841 = vmatmul.mubr.bf16.gmra.mrb[0].mxu0 %v589
        %v842 = vpop.f32.mrb[0].mxu0
        %v843 = vadd.f32 %v635, %v842
        %v844 = vpop.f32.mrb[0].mxu0
        %v845 = vpop.f32.mrb[0].mxu0
        %v846 = vpop.f32.mrb[0].mxu0
        %847 = vdwg.mxu0
        %v848 = vmul.f32 %v802, 0.17677669
        %v849 = vpack.c.bf16 %v848, %v848
        %851 = vrot.lane.b32.xlu0 %v849, 96
        %v852 = vpop.permute.xlu0 %851
        %853 = vrot.lane.b32.xlu0 %v849, 64
        %v854 = vpop.permute.xlu0 %853
        %855 = vrot.lane.b32.xlu0 %v849, 32
        %v856 = vpop.permute.xlu0 %855
        %v858 = vunpack.c.l.s4 1983009808
        %v859 = vunpack.c.0.s8 %v858
        %v860 = vlaneseq
        %v861 = vshrl.u32 %v860, 7
        %v862 = vsub.s32 %v859, %v861
        %v863 = vrot.slane %v849, %v862
        %v866 = vunpack.c.l.s4 1983009808
        %v867 = vunpack.c.0.s8 %v866
        %v868 = vlaneseq
        %v869 = vshrl.u32 %v868, 7
        %v870 = vsub.s32 %v867, %v869
        %v871 = vrot.slane %v854, %v870
        %v872 = vcombine.low %v863, %v871
        %v873 = vcombine.high %v863, %v871
        %v875 = vunpack.c.l.s4 1934713408
        %v876 = vunpack.c.0.s8 %v875
        %v877 = vlaneseq
        %v878 = vshrl.u32 %v877, 7
        %v879 = vsub.s32 %v876, %v878
        %v880 = vrot.slane %v872, %v879
        %v882 = vunpack.c.l.s4 1934713408
        %v883 = vunpack.c.0.s8 %v882
        %v884 = vlaneseq
        %v885 = vshrl.u32 %v884, 7
        %v886 = vsub.s32 %v883, %v885
        %v887 = vrot.slane %v873, %v886
        %v888 = vcombine.high %v880, 0
        %v889 = vcombine.high %v887, 0
        %v892 = vunpack.c.l.s4 1983009808
        %v893 = vunpack.c.0.s8 %v892
        %v894 = vlaneseq
        %v895 = vshrl.u32 %v894, 7
        %v896 = vsub.s32 %v893, %v895
        %v897 = vrot.slane %v852, %v896
        %v900 = vunpack.c.l.s4 1983009808
        %v901 = vunpack.c.0.s8 %v900
        %v902 = vlaneseq
        %v903 = vshrl.u32 %v902, 7
        %v904 = vsub.s32 %v901, %v903
        %v905 = vrot.slane %v856, %v904
        %v906 = vcombine.low %v897, %v905
        %v907 = vcombine.high %v897, %v905
        %v909 = vunpack.c.l.s4 1934713408
        %v910 = vunpack.c.0.s8 %v909
        %v911 = vlaneseq
        %v912 = vshrl.u32 %v911, 7
        %v913 = vsub.s32 %v910, %v912
        %v914 = vrot.slane %v906, %v913
        %v916 = vunpack.c.l.s4 1934713408
        %v917 = vunpack.c.0.s8 %v916
        %v918 = vlaneseq
        %v919 = vshrl.u32 %v918, 7
        %v920 = vsub.s32 %v917, %v919
        %v921 = vrot.slane %v907, %v920
        %v922 = vcombine.high %v914, 0
        %v923 = vcombine.high %v921, 0
        %v926 = vpack.i.b16 %v914, %v880
        %v928 = vshrl.u32 %v880, 16
        %v929 = vshrl.u32 %v914, 16
        %v930 = vpack.i.b16 %v929, %v928
        %v934 = vpack.i.b16 %v922, %v888
        %v936 = vshrl.u32 %v888, 16
        %v937 = vshrl.u32 %v922, 16
        %v938 = vpack.i.b16 %v937, %v936
        %v942 = vpack.i.b16 %v921, %v887
        %v944 = vshrl.u32 %v887, 16
        %v945 = vshrl.u32 %v921, 16
        %v946 = vpack.i.b16 %v945, %v944
        %v950 = vpack.i.b16 %v923, %v889
        %v952 = vshrl.u32 %v889, 16
        %v953 = vshrl.u32 %v923, 16
        %v954 = vpack.i.b16 %v953, %v952
        %v956 = vcombine.low %v926, %v942
        %v958 = vunpack.c.l.s4 1983009808
        %v959 = vunpack.c.0.s8 %v958
        %v960 = vlaneseq
        %v961 = vshrl.u32 %v960, 7
        %v962 = vsub.s32 %v959, %v961
        %v963 = vrot.slane %v956, %v962
        %v964 = vcombine.low %v934, %v950
        %v966 = vunpack.c.l.s4 1983009808
        %v967 = vunpack.c.0.s8 %v966
        %v968 = vlaneseq
        %v969 = vshrl.u32 %v968, 7
        %v970 = vsub.s32 %v967, %v969
        %v971 = vrot.slane %v964, %v970
        %v972 = vcombine.low %v963, %v971
        %v974 = vunpack.c.l.s4 1934713408
        %v975 = vunpack.c.0.s8 %v974
        %v976 = vlaneseq
        %v977 = vshrl.u32 %v976, 7
        %v978 = vsub.s32 %v975, %v977
        %v979 = vrot.slane %v972, %v978
        %v980 = vcombine.high %v979, 0
        %v981 = vcombine.low %v930, %v946
        %v983 = vunpack.c.l.s4 1983009808
        %v984 = vunpack.c.0.s8 %v983
        %v985 = vlaneseq
        %v986 = vshrl.u32 %v985, 7
        %v987 = vsub.s32 %v984, %v986
        %v988 = vrot.slane %v981, %v987
        %v989 = vcombine.low %v938, %v954
        %v991 = vunpack.c.l.s4 1983009808
        %v992 = vunpack.c.0.s8 %v991
        %v993 = vlaneseq
        %v994 = vshrl.u32 %v993, 7
        %v995 = vsub.s32 %v992, %v994
        %v996 = vrot.slane %v989, %v995
        %v997 = vcombine.low %v988, %v996
        %v999 = vunpack.c.l.s4 1934713408
        %v1000 = vunpack.c.0.s8 %v999
        %v1001 = vlaneseq
        %v1002 = vshrl.u32 %v1001, 7
        %v1003 = vsub.s32 %v1000, %v1002
        %v1004 = vrot.slane %v997, %v1003
        %v1005 = vcombine.high %v1004, 0
        %v1008 = vpack.i.b16 %v1004, %v979
        %v1009 = vshrl.u32 %v979, 16
        %v1010 = vshrl.u32 %v1004, 16
        %v1011 = vpack.i.b16 %v1010, %v1009
        %v1014 = vpack.i.b16 %v1005, %v980
        %v1015 = vshrl.u32 %v980, 16
        %v1016 = vshrl.u32 %v1005, 16
        %v1017 = vpack.i.b16 %v1016, %v1015
        %v1018 = vpack.c.bf16 %v804, %v804
        %1020 = vrot.lane.b32.xlu0 %v1018, 96
        %v1021 = vpop.permute.xlu0 %1020
        %1022 = vrot.lane.b32.xlu0 %v1018, 64
        %v1023 = vpop.permute.xlu0 %1022
        %1024 = vrot.lane.b32.xlu0 %v1018, 32
        %v1025 = vpop.permute.xlu0 %1024
        %v1027 = vunpack.c.l.s4 1983009808
        %v1028 = vunpack.c.0.s8 %v1027
        %v1029 = vlaneseq
        %v1030 = vshrl.u32 %v1029, 7
        %v1031 = vsub.s32 %v1028, %v1030
        %v1032 = vrot.slane %v1018, %v1031
        %v1035 = vunpack.c.l.s4 1983009808
        %v1036 = vunpack.c.0.s8 %v1035
        %v1037 = vlaneseq
        %v1038 = vshrl.u32 %v1037, 7
        %v1039 = vsub.s32 %v1036, %v1038
        %v1040 = vrot.slane %v1023, %v1039
        %v1041 = vcombine.low %v1032, %v1040
        %v1042 = vcombine.high %v1032, %v1040
        %v1044 = vunpack.c.l.s4 1934713408
        %v1045 = vunpack.c.0.s8 %v1044
        %v1046 = vlaneseq
        %v1047 = vshrl.u32 %v1046, 7
        %v1048 = vsub.s32 %v1045, %v1047
        %v1049 = vrot.slane %v1041, %v1048
        %v1051 = vunpack.c.l.s4 1934713408
        %v1052 = vunpack.c.0.s8 %v1051
        %v1053 = vlaneseq
        %v1054 = vshrl.u32 %v1053, 7
        %v1055 = vsub.s32 %v1052, %v1054
        %v1056 = vrot.slane %v1042, %v1055
        %v1057 = vcombine.high %v1049, 0
        %v1058 = vcombine.high %v1056, 0
        %v1061 = vunpack.c.l.s4 1983009808
        %v1062 = vunpack.c.0.s8 %v1061
        %v1063 = vlaneseq
        %v1064 = vshrl.u32 %v1063, 7
        %v1065 = vsub.s32 %v1062, %v1064
        %v1066 = vrot.slane %v1021, %v1065
        %v1069 = vunpack.c.l.s4 1983009808
        %v1070 = vunpack.c.0.s8 %v1069
        %v1071 = vlaneseq
        %v1072 = vshrl.u32 %v1071, 7
        %v1073 = vsub.s32 %v1070, %v1072
        %v1074 = vrot.slane %v1025, %v1073
        %v1075 = vcombine.low %v1066, %v1074
        %v1076 = vcombine.high %v1066, %v1074
        %v1078 = vunpack.c.l.s4 1934713408
        %v1079 = vunpack.c.0.s8 %v1078
        %v1080 = vlaneseq
        %v1081 = vshrl.u32 %v1080, 7
        %v1082 = vsub.s32 %v1079, %v1081
        %v1083 = vrot.slane %v1075, %v1082
        %v1085 = vunpack.c.l.s4 1934713408
        %v1086 = vunpack.c.0.s8 %v1085
        %v1087 = vlaneseq
        %v1088 = vshrl.u32 %v1087, 7
        %v1089 = vsub.s32 %v1086, %v1088
        %v1090 = vrot.slane %v1076, %v1089
        %v1091 = vcombine.high %v1083, 0
        %v1092 = vcombine.high %v1090, 0
        %v1095 = vpack.i.b16 %v1083, %v1049
        %v1097 = vshrl.u32 %v1049, 16
        %v1098 = vshrl.u32 %v1083, 16
        %v1099 = vpack.i.b16 %v1098, %v1097
        %v1103 = vpack.i.b16 %v1091, %v1057
        %v1105 = vshrl.u32 %v1057, 16
        %v1106 = vshrl.u32 %v1091, 16
        %v1107 = vpack.i.b16 %v1106, %v1105
        %v1111 = vpack.i.b16 %v1090, %v1056
        %v1113 = vshrl.u32 %v1056, 16
        %v1114 = vshrl.u32 %v1090, 16
        %v1115 = vpack.i.b16 %v1114, %v1113
        %v1119 = vpack.i.b16 %v1092, %v1058
        %v1121 = vshrl.u32 %v1058, 16
        %v1122 = vshrl.u32 %v1092, 16
        %v1123 = vpack.i.b16 %v1122, %v1121
        %v1125 = vcombine.low %v1095, %v1111
        %v1127 = vunpack.c.l.s4 1983009808
        %v1128 = vunpack.c.0.s8 %v1127
        %v1129 = vlaneseq
        %v1130 = vshrl.u32 %v1129, 7
        %v1131 = vsub.s32 %v1128, %v1130
        %v1132 = vrot.slane %v1125, %v1131
        %v1133 = vcombine.low %v1103, %v1119
        %v1135 = vunpack.c.l.s4 1983009808
        %v1136 = vunpack.c.0.s8 %v1135
        %v1137 = vlaneseq
        %v1138 = vshrl.u32 %v1137, 7
        %v1139 = vsub.s32 %v1136, %v1138
        %v1140 = vrot.slane %v1133, %v1139
        %v1141 = vcombine.low %v1132, %v1140
        %v1143 = vunpack.c.l.s4 1934713408
        %v1144 = vunpack.c.0.s8 %v1143
        %v1145 = vlaneseq
        %v1146 = vshrl.u32 %v1145, 7
        %v1147 = vsub.s32 %v1144, %v1146
        %v1148 = vrot.slane %v1141, %v1147
        %v1149 = vcombine.high %v1148, 0
        %v1150 = vcombine.low %v1099, %v1115
        %v1152 = vunpack.c.l.s4 1983009808
        %v1153 = vunpack.c.0.s8 %v1152
        %v1154 = vlaneseq
        %v1155 = vshrl.u32 %v1154, 7
        %v1156 = vsub.s32 %v1153, %v1155
        %v1157 = vrot.slane %v1150, %v1156
        %v1158 = vcombine.low %v1107, %v1123
        %v1160 = vunpack.c.l.s4 1983009808
        %v1161 = vunpack.c.0.s8 %v1160
        %v1162 = vlaneseq
        %v1163 = vshrl.u32 %v1162, 7
        %v1164 = vsub.s32 %v1161, %v1163
        %v1165 = vrot.slane %v1158, %v1164
        %v1166 = vcombine.low %v1157, %v1165
        %v1168 = vunpack.c.l.s4 1934713408
        %v1169 = vunpack.c.0.s8 %v1168
        %v1170 = vlaneseq
        %v1171 = vshrl.u32 %v1170, 7
        %v1172 = vsub.s32 %v1169, %v1171
        %v1173 = vrot.slane %v1166, %v1172
        %v1174 = vcombine.high %v1173, 0
        %v1177 = vpack.i.b16 %v1173, %v1148
        %v1178 = vshrl.u32 %v1148, 16
        %v1179 = vshrl.u32 %v1173, 16
        %v1180 = vpack.i.b16 %v1179, %v1178
        %v1183 = vpack.i.b16 %v1174, %v1149
        %v1184 = vshrl.u32 %v1149, 16
        %v1185 = vshrl.u32 %v1174, 16
        %v1186 = vpack.i.b16 %v1185, %v1184
        %v1187 = vpack.c.bf16 %v843, %v843
        %1189 = vrot.lane.b32.xlu0 %v1187, 96
        %v1190 = vpop.permute.xlu0 %1189
        %1191 = vrot.lane.b32.xlu0 %v1187, 64
        %v1192 = vpop.permute.xlu0 %1191
        %1193 = vrot.lane.b32.xlu0 %v1187, 32
        %v1194 = vpop.permute.xlu0 %1193
        %v1196 = vunpack.c.l.s4 1983009808
        %v1197 = vunpack.c.0.s8 %v1196
        %v1198 = vlaneseq
        %v1199 = vshrl.u32 %v1198, 7
        %v1200 = vsub.s32 %v1197, %v1199
        %v1201 = vrot.slane %v1187, %v1200
        %v1204 = vunpack.c.l.s4 1983009808
        %v1205 = vunpack.c.0.s8 %v1204
        %v1206 = vlaneseq
        %v1207 = vshrl.u32 %v1206, 7
        %v1208 = vsub.s32 %v1205, %v1207
        %v1209 = vrot.slane %v1192, %v1208
        %v1210 = vcombine.low %v1201, %v1209
        %v1211 = vcombine.high %v1201, %v1209
        %v1213 = vunpack.c.l.s4 1934713408
        %v1214 = vunpack.c.0.s8 %v1213
        %v1215 = vlaneseq
        %v1216 = vshrl.u32 %v1215, 7
        %v1217 = vsub.s32 %v1214, %v1216
        %v1218 = vrot.slane %v1210, %v1217
        %v1220 = vunpack.c.l.s4 1934713408
        %v1221 = vunpack.c.0.s8 %v1220
        %v1222 = vlaneseq
        %v1223 = vshrl.u32 %v1222, 7
        %v1224 = vsub.s32 %v1221, %v1223
        %v1225 = vrot.slane %v1211, %v1224
        %v1226 = vcombine.high %v1218, 0
        %v1227 = vcombine.high %v1225, 0
        %v1230 = vunpack.c.l.s4 1983009808
        %v1231 = vunpack.c.0.s8 %v1230
        %v1232 = vlaneseq
        %v1233 = vshrl.u32 %v1232, 7
        %v1234 = vsub.s32 %v1231, %v1233
        %v1235 = vrot.slane %v1190, %v1234
        %v1238 = vunpack.c.l.s4 1983009808
        %v1239 = vunpack.c.0.s8 %v1238
        %v1240 = vlaneseq
        %v1241 = vshrl.u32 %v1240, 7
        %v1242 = vsub.s32 %v1239, %v1241
        %v1243 = vrot.slane %v1194, %v1242
        %v1244 = vcombine.low %v1235, %v1243
        %v1245 = vcombine.high %v1235, %v1243
        %v1247 = vunpack.c.l.s4 1934713408
        %v1248 = vunpack.c.0.s8 %v1247
        %v1249 = vlaneseq
        %v1250 = vshrl.u32 %v1249, 7
        %v1251 = vsub.s32 %v1248, %v1250
        %v1252 = vrot.slane %v1244, %v1251
        %v1254 = vunpack.c.l.s4 1934713408
        %v1255 = vunpack.c.0.s8 %v1254
        %v1256 = vlaneseq
        %v1257 = vshrl.u32 %v1256, 7
        %v1258 = vsub.s32 %v1255, %v1257
        %v1259 = vrot.slane %v1245, %v1258
        %v1260 = vcombine.high %v1252, 0
        %v1261 = vcombine.high %v1259, 0
        %v1264 = vpack.i.b16 %v1252, %v1218
        %v1266 = vshrl.u32 %v1218, 16
        %v1267 = vshrl.u32 %v1252, 16
        %v1268 = vpack.i.b16 %v1267, %v1266
        %v1272 = vpack.i.b16 %v1260, %v1226
        %v1274 = vshrl.u32 %v1226, 16
        %v1275 = vshrl.u32 %v1260, 16
        %v1276 = vpack.i.b16 %v1275, %v1274
        %v1280 = vpack.i.b16 %v1259, %v1225
        %v1282 = vshrl.u32 %v1225, 16
        %v1283 = vshrl.u32 %v1259, 16
        %v1284 = vpack.i.b16 %v1283, %v1282
        %v1288 = vpack.i.b16 %v1261, %v1227
        %v1290 = vshrl.u32 %v1227, 16
        %v1291 = vshrl.u32 %v1261, 16
        %v1292 = vpack.i.b16 %v1291, %v1290
        %v1294 = vcombine.low %v1264, %v1280
        %v1296 = vunpack.c.l.s4 1983009808
        %v1297 = vunpack.c.0.s8 %v1296
        %v1298 = vlaneseq
        %v1299 = vshrl.u32 %v1298, 7
        %v1300 = vsub.s32 %v1297, %v1299
        %v1301 = vrot.slane %v1294, %v1300
        %v1302 = vcombine.low %v1272, %v1288
        %v1304 = vunpack.c.l.s4 1983009808
        %v1305 = vunpack.c.0.s8 %v1304
        %v1306 = vlaneseq
        %v1307 = vshrl.u32 %v1306, 7
        %v1308 = vsub.s32 %v1305, %v1307
        %v1309 = vrot.slane %v1302, %v1308
        %v1310 = vcombine.low %v1301, %v1309
        %v1312 = vunpack.c.l.s4 1934713408
        %v1313 = vunpack.c.0.s8 %v1312
        %v1314 = vlaneseq
        %v1315 = vshrl.u32 %v1314, 7
        %v1316 = vsub.s32 %v1313, %v1315
        %v1317 = vrot.slane %v1310, %v1316
        %v1318 = vcombine.high %v1317, 0
        %v1319 = vcombine.low %v1268, %v1284
        %v1321 = vunpack.c.l.s4 1983009808
        %v1322 = vunpack.c.0.s8 %v1321
        %v1323 = vlaneseq
        %v1324 = vshrl.u32 %v1323, 7
        %v1325 = vsub.s32 %v1322, %v1324
        %v1326 = vrot.slane %v1319, %v1325
        %v1327 = vcombine.low %v1276, %v1292
        %v1329 = vunpack.c.l.s4 1983009808
        %v1330 = vunpack.c.0.s8 %v1329
        %v1331 = vlaneseq
        %v1332 = vshrl.u32 %v1331, 7
        %v1333 = vsub.s32 %v1330, %v1332
        %v1334 = vrot.slane %v1327, %v1333
        %v1335 = vcombine.low %v1326, %v1334
        %v1337 = vunpack.c.l.s4 1934713408
        %v1338 = vunpack.c.0.s8 %v1337
        %v1339 = vlaneseq
        %v1340 = vshrl.u32 %v1339, 7
        %v1341 = vsub.s32 %v1338, %v1340
        %v1342 = vrot.slane %v1335, %v1341
        %v1343 = vcombine.high %v1342, 0
        %v1346 = vpack.i.b16 %v1342, %v1317
        %v1347 = vshrl.u32 %v1317, 16
        %v1348 = vshrl.u32 %v1342, 16
        %v1349 = vpack.i.b16 %v1348, %v1347
        %v1352 = vpack.i.b16 %v1343, %v1318
        %v1353 = vshrl.u32 %v1318, 16
        %v1354 = vshrl.u32 %v1343, 16
        %v1355 = vpack.i.b16 %v1354, %v1353
        %vm1356 = vcmask 261120
        %v1358 = vsel %vm1356, %v1008, 0
        %v1361 = vsel %vm1356, %v1177, 0
        %1363 = vmatprep.subr.bf16.mxu0 0
        %1364 = vmatpush1.bf16.xpose.msra.mxu0 %v1361
        %1365 = vmatprep.subr.bf16.mxu0 0
        %1366 = vmatpush1.bf16.xpose.msra.mxu0 0
        %1367 = vmatprep.subr.bf16.mxu0 0
        %1368 = vmatpush1.bf16.xpose.msra.mxu0 0
        %1369 = vmatprep.subr.bf16.mxu0 0
        %1370 = vmatpush1.bf16.xpose.msra.mxu0 0
        %1371 = vmatprep.subr.bf16.mxu0 0
        %1372 = vmatpush1.bf16.xpose.msra.mxu0 0
        %1373 = vmatprep.subr.bf16.mxu0 0
        %1374 = vmatpush1.bf16.xpose.msra.mxu0 0
        %1375 = vmatprep.subr.bf16.mxu0 0
        %1376 = vmatpush1.bf16.xpose.msra.mxu0 0
        %1377 = vmatprep.subr.bf16.mxu0 0
        %1378 = vmatpush1.bf16.xpose.msra.mxu0 0
        %1379 = vmatprep.subr.bf16.mxu0 0
        %1380 = vmatpush1.bf16.xpose.msra.mxu0 0
        %1381 = vmatprep.subr.bf16.mxu0 0
        %1382 = vmatpush1.bf16.xpose.msra.mxu0 0
        %1383 = vmatprep.subr.bf16.mxu0 0
        %1384 = vmatpush1.bf16.xpose.msra.mxu0 0
        %1385 = vmatprep.subr.bf16.mxu0 0
        %1386 = vmatpush1.bf16.xpose.msra.mxu0 0
        %1387 = vmatprep.subr.bf16.mxu0 0
        %1388 = vmatpush1.bf16.xpose.msra.mxu0 0
        %1389 = vmatprep.subr.bf16.mxu0 0
        %1390 = vmatpush1.bf16.xpose.msra.mxu0 0
        %1391 = vmatprep.subr.bf16.mxu0 0
        %1392 = vmatpush1.bf16.xpose.msra.mxu0 0
        %1393 = vmatprep.subr.bf16.mxu0 0
        %1394 = vmatpush1.bf16.xpose.msra.mxu0 0
        %1395 = vmatprep.mubr.bf16.mxu0 0
        %1396 = vmatmul.mubr.bf16.gmra.mrb[0].mxu0 %v1358
        %v1397 = vpop.f32.mrb[0].mxu0
        %v1398 = vadd.f32 0.0, %v1397
        %v1399 = vpop.f32.mrb[0].mxu0
        %v1400 = vpop.f32.mrb[0].mxu0
        %v1401 = vpop.f32.mrb[0].mxu0
        %1402 = vdwg.mxu0
        %v1404 = vsel %vm1356, %v1011, 0
        %v1407 = vsel %vm1356, %v1180, 0
        %1409 = vmatprep.subr.bf16.mxu0 0
        %1410 = vmatpush1.bf16.xpose.msra.mxu0 %v1407
        %1411 = vmatprep.subr.bf16.mxu0 0
        %1412 = vmatpush1.bf16.xpose.msra.mxu0 0
        %1413 = vmatprep.subr.bf16.mxu0 0
        %1414 = vmatpush1.bf16.xpose.msra.mxu0 0
        %1415 = vmatprep.subr.bf16.mxu0 0
        %1416 = vmatpush1.bf16.xpose.msra.mxu0 0
        %1417 = vmatprep.subr.bf16.mxu0 0
        %1418 = vmatpush1.bf16.xpose.msra.mxu0 0
        %1419 = vmatprep.subr.bf16.mxu0 0
        %1420 = vmatpush1.bf16.xpose.msra.mxu0 0
        %1421 = vmatprep.subr.bf16.mxu0 0
        %1422 = vmatpush1.bf16.xpose.msra.mxu0 0
        %1423 = vmatprep.subr.bf16.mxu0 0
        %1424 = vmatpush1.bf16.xpose.msra.mxu0 0
        %1425 = vmatprep.subr.bf16.mxu0 0
        %1426 = vmatpush1.bf16.xpose.msra.mxu0 0
        %1427 = vmatprep.subr.bf16.mxu0 0
        %1428 = vmatpush1.bf16.xpose.msra.mxu0 0
        %1429 = vmatprep.subr.bf16.mxu0 0
        %1430 = vmatpush1.bf16.xpose.msra.mxu0 0
        %1431 = vmatprep.subr.bf16.mxu0 0
        %1432 = vmatpush1.bf16.xpose.msra.mxu0 0
        %1433 = vmatprep.subr.bf16.mxu0 0
        %1434 = vmatpush1.bf16.xpose.msra.mxu0 0
        %1435 = vmatprep.subr.bf16.mxu0 0
        %1436 = vmatpush1.bf16.xpose.msra.mxu0 0
        %1437 = vmatprep.subr.bf16.mxu0 0
        %1438 = vmatpush1.bf16.xpose.msra.mxu0 0
        %1439 = vmatprep.subr.bf16.mxu0 0
        %1440 = vmatpush1.bf16.xpose.msra.mxu0 0
        %1441 = vmatprep.mubr.bf16.mxu0 0
        %1442 = vmatmul.mubr.bf16.gmra.mrb[0].mxu0 %v1404
        %v1443 = vpop.f32.mrb[0].mxu0
        %v1444 = vadd.f32 0.0, %v1443
        %v1445 = vpop.f32.mrb[0].mxu0
        %v1446 = vpop.f32.mrb[0].mxu0
        %v1447 = vpop.f32.mrb[0].mxu0
        %1448 = vdwg.mxu0
        %v1450 = vsel %vm1356, %v1014, 0
        %v1453 = vsel %vm1356, %v1183, 0
        %1455 = vmatprep.subr.bf16.mxu0 0
        %1456 = vmatpush1.bf16.xpose.msra.mxu0 %v1453
        %1457 = vmatprep.subr.bf16.mxu0 0
        %1458 = vmatpush1.bf16.xpose.msra.mxu0 0
        %1459 = vmatprep.subr.bf16.mxu0 0
        %1460 = vmatpush1.bf16.xpose.msra.mxu0 0
        %1461 = vmatprep.subr.bf16.mxu0 0
        %1462 = vmatpush1.bf16.xpose.msra.mxu0 0
        %1463 = vmatprep.subr.bf16.mxu0 0
        %1464 = vmatpush1.bf16.xpose.msra.mxu0 0
        %1465 = vmatprep.subr.bf16.mxu0 0
        %1466 = vmatpush1.bf16.xpose.msra.mxu0 0
        %1467 = vmatprep.subr.bf16.mxu0 0
        %1468 = vmatpush1.bf16.xpose.msra.mxu0 0
        %1469 = vmatprep.subr.bf16.mxu0 0
        %1470 = vmatpush1.bf16.xpose.msra.mxu0 0
        %1471 = vmatprep.subr.bf16.mxu0 0
        %1472 = vmatpush1.bf16.xpose.msra.mxu0 0
        %1473 = vmatprep.subr.bf16.mxu0 0
        %1474 = vmatpush1.bf16.xpose.msra.mxu0 0
        %1475 = vmatprep.subr.bf16.mxu0 0
        %1476 = vmatpush1.bf16.xpose.msra.mxu0 0
        %1477 = vmatprep.subr.bf16.mxu0 0
        %1478 = vmatpush1.bf16.xpose.msra.mxu0 0
        %1479 = vmatprep.subr.bf16.mxu0 0
        %1480 = vmatpush1.bf16.xpose.msra.mxu0 0
        %1481 = vmatprep.subr.bf16.mxu0 0
        %1482 = vmatpush1.bf16.xpose.msra.mxu0 0
        %1483 = vmatprep.subr.bf16.mxu0 0
        %1484 = vmatpush1.bf16.xpose.msra.mxu0 0
        %1485 = vmatprep.subr.bf16.mxu0 0
        %1486 = vmatpush1.bf16.xpose.msra.mxu0 0
        %1487 = vmatprep.mubr.bf16.mxu0 0
        %1488 = vmatmul.mubr.bf16.gmra.mrb[0].mxu0 %v1450
        %v1489 = vpop.f32.mrb[0].mxu0
        %v1490 = vadd.f32 0.0, %v1489
        %v1491 = vpop.f32.mrb[0].mxu0
        %v1492 = vpop.f32.mrb[0].mxu0
        %v1493 = vpop.f32.mrb[0].mxu0
        %1494 = vdwg.mxu0
        %v1496 = vsel %vm1356, %v1017, 0
        %v1499 = vsel %vm1356, %v1186, 0
        %1501 = vmatprep.subr.bf16.mxu0 0
        %1502 = vmatpush1.bf16.xpose.msra.mxu0 %v1499
        %1503 = vmatprep.subr.bf16.mxu0 0
        %1504 = vmatpush1.bf16.xpose.msra.mxu0 0
        %1505 = vmatprep.subr.bf16.mxu0 0
        %1506 = vmatpush1.bf16.xpose.msra.mxu0 0
        %1507 = vmatprep.subr.bf16.mxu0 0
        %1508 = vmatpush1.bf16.xpose.msra.mxu0 0
        %1509 = vmatprep.subr.bf16.mxu0 0
        %1510 = vmatpush1.bf16.xpose.msra.mxu0 0
        %1511 = vmatprep.subr.bf16.mxu0 0
        %1512 = vmatpush1.bf16.xpose.msra.mxu0 0
        %1513 = vmatprep.subr.bf16.mxu0 0
        %1514 = vmatpush1.bf16.xpose.msra.mxu0 0
        %1515 = vmatprep.subr.bf16.mxu0 0
        %1516 = vmatpush1.bf16.xpose.msra.mxu0 0
        %1517 = vmatprep.subr.bf16.mxu0 0
        %1518 = vmatpush1.bf16.xpose.msra.mxu0 0
        %1519 = vmatprep.subr.bf16.mxu0 0
        %1520 = vmatpush1.bf16.xpose.msra.mxu0 0
        %1521 = vmatprep.subr.bf16.mxu0 0
        %1522 = vmatpush1.bf16.xpose.msra.mxu0 0
        %1523 = vmatprep.subr.bf16.mxu0 0
        %1524 = vmatpush1.bf16.xpose.msra.mxu0 0
        %1525 = vmatprep.subr.bf16.mxu0 0
        %1526 = vmatpush1.bf16.xpose.msra.mxu0 0
        %1527 = vmatprep.subr.bf16.mxu0 0
        %1528 = vmatpush1.bf16.xpose.msra.mxu0 0
        %1529 = vmatprep.subr.bf16.mxu0 0
        %1530 = vmatpush1.bf16.xpose.msra.mxu0 0
        %1531 = vmatprep.subr.bf16.mxu0 0
        %1532 = vmatpush1.bf16.xpose.msra.mxu0 0
        %1533 = vmatprep.mubr.bf16.mxu0 0
        %1534 = vmatmul.mubr.bf16.gmra.mrb[0].mxu0 %v1496
        %v1535 = vpop.f32.mrb[0].mxu0
        %v1536 = vadd.f32 0.0, %v1535
        %v1537 = vpop.f32.mrb[0].mxu0
        %v1538 = vpop.f32.mrb[0].mxu0
        %v1539 = vpop.f32.mrb[0].mxu0
        %1540 = vdwg.mxu0
        %vm1541 = vcmask 64512
        %v1542 = vsel %vm1541, %v1398, -inf
        %1543 = vmax.xlane.f32.xlu0 %v1542
        %v1544 = vpop.xlane.xlu0 %1543
        %v1545 = vsel %vm1541, %v1444, -inf
        %1546 = vmax.xlane.f32.xlu0 %v1545
        %v1547 = vpop.xlane.xlu0 %1546
        %v1548 = vsel %vm1541, %v1490, -inf
        %1549 = vmax.xlane.f32.xlu0 %v1548
        %v1550 = vpop.xlane.xlu0 %1549
        %v1551 = vsel %vm1541, %v1536, -inf
        %1552 = vmax.xlane.f32.xlu0 %v1551
        %v1553 = vpop.xlane.xlu0 %1552
        %v1554 = vsub.f32 %v1398, %v1544
        %v1555 = vsub.f32 %v1444, %v1547
        %v1556 = vsub.f32 %v1490, %v1550
        %v1557 = vsub.f32 %v1536, %v1553
        %v1558 = vmul.f32 %v1554, 1.442695
        %v1559 = vpow.pop %v1558
        %v1560 = vmul.f32 %v1555, 1.442695
        %v1561 = vpow.pop %v1560
        %v1562 = vmul.f32 %v1556, 1.442695
        %v1563 = vpow.pop %v1562
        %v1564 = vmul.f32 %v1557, 1.442695
        %v1565 = vpow.pop %v1564
        %v1566 = vsel %vm1541, %v1559, 0.0
        %1567 = vadd.xlane.f32.xlu0 %v1566
        %v1568 = vpop.xlane.xlu0 %1567
        %v1569 = vsel %vm1541, %v1561, 0.0
        %1570 = vadd.xlane.f32.xlu0 %v1569
        %v1571 = vpop.xlane.xlu0 %1570
        %v1572 = vsel %vm1541, %v1563, 0.0
        %1573 = vadd.xlane.f32.xlu0 %v1572
        %v1574 = vpop.xlane.xlu0 %1573
        %v1575 = vsel %vm1541, %v1565, 0.0
        %1576 = vadd.xlane.f32.xlu0 %v1575
        %v1577 = vpop.xlane.xlu0 %1576
        %v1578 = vrcp.pop %v1568
        %v1579 = vrcp.pop %v1571
        %v1580 = vrcp.pop %v1574
        %v1581 = vrcp.pop %v1577
        %v1582 = vmul.f32 %v1559, %v1578
        %v1583 = vmul.f32 %v1561, %v1579
        %v1584 = vmul.f32 %v1563, %v1580
        %v1585 = vmul.f32 %v1565, %v1581
        %v1586 = vpack.c.bf16 %v1582, %v1582
        %v1587 = vpack.c.bf16 %v1583, %v1583
        %v1588 = vpack.c.bf16 %v1584, %v1584
        %v1589 = vpack.c.bf16 %v1585, %v1585
        %v1591 = vsel %vm1541, %v1586, 0
        %vm1593 = vcmask 1043456
        %v1595 = vsel %vm1593, %v1346, 0
        %1597 = vmatprep.subr.bf16.mxu0 0
        %1598 = vmatpush1.bf16.msra.mxu0 %v1595
        %1599 = vmatprep.subr.bf16.mxu0 0
        %1600 = vmatpush1.bf16.msra.mxu0 0
        %1601 = vmatprep.subr.bf16.mxu0 0
        %1602 = vmatpush1.bf16.msra.mxu0 0
        %1603 = vmatprep.subr.bf16.mxu0 0
        %1604 = vmatpush1.bf16.msra.mxu0 0
        %1605 = vmatprep.subr.bf16.mxu0 0
        %1606 = vmatpush1.bf16.msra.mxu0 0
        %1607 = vmatprep.subr.bf16.mxu0 0
        %1608 = vmatpush1.bf16.msra.mxu0 0
        %1609 = vmatprep.subr.bf16.mxu0 0
        %1610 = vmatpush1.bf16.msra.mxu0 0
        %1611 = vmatprep.subr.bf16.mxu0 0
        %1612 = vmatpush1.bf16.msra.mxu0 0
        %1613 = vmatprep.subr.bf16.mxu0 0
        %1614 = vmatpush1.bf16.msra.mxu0 0
        %1615 = vmatprep.subr.bf16.mxu0 0
        %1616 = vmatpush1.bf16.msra.mxu0 0
        %1617 = vmatprep.subr.bf16.mxu0 0
        %1618 = vmatpush1.bf16.msra.mxu0 0
        %1619 = vmatprep.subr.bf16.mxu0 0
        %1620 = vmatpush1.bf16.msra.mxu0 0
        %1621 = vmatprep.subr.bf16.mxu0 0
        %1622 = vmatpush1.bf16.msra.mxu0 0
        %1623 = vmatprep.subr.bf16.mxu0 0
        %1624 = vmatpush1.bf16.msra.mxu0 0
        %1625 = vmatprep.subr.bf16.mxu0 0
        %1626 = vmatpush1.bf16.msra.mxu0 0
        %1627 = vmatprep.subr.bf16.mxu0 0
        %1628 = vmatpush1.bf16.msra.mxu0 0
        %1629 = vmatprep.mubr.bf16.mxu0 0
        %1630 = vmatmul.mubr.bf16.gmra.mrb[0].mxu0 %v1591
        %v1631 = vpop.f32.mrb[0].mxu0
        %v1632 = vadd.f32 0.0, %v1631
        %v1633 = vpop.f32.mrb[0].mxu0
        %v1634 = vpop.f32.mrb[0].mxu0
        %v1635 = vpop.f32.mrb[0].mxu0
        %1636 = vdwg.mxu0
        %v1638 = vsel %vm1541, %v1587, 0
        %v1641 = vsel %vm1593, %v1349, 0
        %1643 = vmatprep.subr.bf16.mxu0 0
        %1644 = vmatpush1.bf16.msra.mxu0 %v1641
        %1645 = vmatprep.subr.bf16.mxu0 0
        %1646 = vmatpush1.bf16.msra.mxu0 0
        %1647 = vmatprep.subr.bf16.mxu0 0
        %1648 = vmatpush1.bf16.msra.mxu0 0
        %1649 = vmatprep.subr.bf16.mxu0 0
        %1650 = vmatpush1.bf16.msra.mxu0 0
        %1651 = vmatprep.subr.bf16.mxu0 0
        %1652 = vmatpush1.bf16.msra.mxu0 0
        %1653 = vmatprep.subr.bf16.mxu0 0
        %1654 = vmatpush1.bf16.msra.mxu0 0
        %1655 = vmatprep.subr.bf16.mxu0 0
        %1656 = vmatpush1.bf16.msra.mxu0 0
        %1657 = vmatprep.subr.bf16.mxu0 0
        %1658 = vmatpush1.bf16.msra.mxu0 0
        %1659 = vmatprep.subr.bf16.mxu0 0
        %1660 = vmatpush1.bf16.msra.mxu0 0
        %1661 = vmatprep.subr.bf16.mxu0 0
        %1662 = vmatpush1.bf16.msra.mxu0 0
        %1663 = vmatprep.subr.bf16.mxu0 0
        %1664 = vmatpush1.bf16.msra.mxu0 0
        %1665 = vmatprep.subr.bf16.mxu0 0
        %1666 = vmatpush1.bf16.msra.mxu0 0
        %1667 = vmatprep.subr.bf16.mxu0 0
        %1668 = vmatpush1.bf16.msra.mxu0 0
        %1669 = vmatprep.subr.bf16.mxu0 0
        %1670 = vmatpush1.bf16.msra.mxu0 0
        %1671 = vmatprep.subr.bf16.mxu0 0
        %1672 = vmatpush1.bf16.msra.mxu0 0
        %1673 = vmatprep.subr.bf16.mxu0 0
        %1674 = vmatpush1.bf16.msra.mxu0 0
        %1675 = vmatprep.mubr.bf16.mxu0 0
        %1676 = vmatmul.mubr.bf16.gmra.mrb[0].mxu0 %v1638
        %v1677 = vpop.f32.mrb[0].mxu0
        %v1678 = vadd.f32 0.0, %v1677
        %v1679 = vpop.f32.mrb[0].mxu0
        %v1680 = vpop.f32.mrb[0].mxu0
        %v1681 = vpop.f32.mrb[0].mxu0
        %1682 = vdwg.mxu0
        %v1684 = vsel %vm1541, %v1588, 0
        %v1687 = vsel %vm1593, %v1352, 0
        %1689 = vmatprep.subr.bf16.mxu0 0
        %1690 = vmatpush1.bf16.msra.mxu0 %v1687
        %1691 = vmatprep.subr.bf16.mxu0 0
        %1692 = vmatpush1.bf16.msra.mxu0 0
        %1693 = vmatprep.subr.bf16.mxu0 0
        %1694 = vmatpush1.bf16.msra.mxu0 0
        %1695 = vmatprep.subr.bf16.mxu0 0
        %1696 = vmatpush1.bf16.msra.mxu0 0
        %1697 = vmatprep.subr.bf16.mxu0 0
        %1698 = vmatpush1.bf16.msra.mxu0 0
        %1699 = vmatprep.subr.bf16.mxu0 0
        %1700 = vmatpush1.bf16.msra.mxu0 0
        %1701 = vmatprep.subr.bf16.mxu0 0
        %1702 = vmatpush1.bf16.msra.mxu0 0
        %1703 = vmatprep.subr.bf16.mxu0 0
        %1704 = vmatpush1.bf16.msra.mxu0 0
        %1705 = vmatprep.subr.bf16.mxu0 0
        %1706 = vmatpush1.bf16.msra.mxu0 0
        %1707 = vmatprep.subr.bf16.mxu0 0
        %1708 = vmatpush1.bf16.msra.mxu0 0
        %1709 = vmatprep.subr.bf16.mxu0 0
        %1710 = vmatpush1.bf16.msra.mxu0 0
        %1711 = vmatprep.subr.bf16.mxu0 0
        %1712 = vmatpush1.bf16.msra.mxu0 0
        %1713 = vmatprep.subr.bf16.mxu0 0
        %1714 = vmatpush1.bf16.msra.mxu0 0
        %1715 = vmatprep.subr.bf16.mxu0 0
        %1716 = vmatpush1.bf16.msra.mxu0 0
        %1717 = vmatprep.subr.bf16.mxu0 0
        %1718 = vmatpush1.bf16.msra.mxu0 0
        %1719 = vmatprep.subr.bf16.mxu0 0
        %1720 = vmatpush1.bf16.msra.mxu0 0
        %1721 = vmatprep.mubr.bf16.mxu0 0
        %1722 = vmatmul.mubr.bf16.gmra.mrb[0].mxu0 %v1684
        %v1723 = vpop.f32.mrb[0].mxu0
        %v1724 = vadd.f32 0.0, %v1723
        %v1725 = vpop.f32.mrb[0].mxu0
        %v1726 = vpop.f32.mrb[0].mxu0
        %v1727 = vpop.f32.mrb[0].mxu0
        %1728 = vdwg.mxu0
        %v1730 = vsel %vm1541, %v1589, 0
        %v1733 = vsel %vm1593, %v1355, 0
        %1735 = vmatprep.subr.bf16.mxu0 0
        %1736 = vmatpush1.bf16.msra.mxu0 %v1733
        %1737 = vmatprep.subr.bf16.mxu0 0
        %1738 = vmatpush1.bf16.msra.mxu0 0
        %1739 = vmatprep.subr.bf16.mxu0 0
        %1740 = vmatpush1.bf16.msra.mxu0 0
        %1741 = vmatprep.subr.bf16.mxu0 0
        %1742 = vmatpush1.bf16.msra.mxu0 0
        %1743 = vmatprep.subr.bf16.mxu0 0
        %1744 = vmatpush1.bf16.msra.mxu0 0
        %1745 = vmatprep.subr.bf16.mxu0 0
        %1746 = vmatpush1.bf16.msra.mxu0 0
        %1747 = vmatprep.subr.bf16.mxu0 0
        %1748 = vmatpush1.bf16.msra.mxu0 0
        %1749 = vmatprep.subr.bf16.mxu0 0
        %1750 = vmatpush1.bf16.msra.mxu0 0
        %1751 = vmatprep.subr.bf16.mxu0 0
        %1752 = vmatpush1.bf16.msra.mxu0 0
        %1753 = vmatprep.subr.bf16.mxu0 0
        %1754 = vmatpush1.bf16.msra.mxu0 0
        %1755 = vmatprep.subr.bf16.mxu0 0
        %1756 = vmatpush1.bf16.msra.mxu0 0
        %1757 = vmatprep.subr.bf16.mxu0 0
        %1758 = vmatpush1.bf16.msra.mxu0 0
        %1759 = vmatprep.subr.bf16.mxu0 0
        %1760 = vmatpush1.bf16.msra.mxu0 0
        %1761 = vmatprep.subr.bf16.mxu0 0
        %1762 = vmatpush1.bf16.msra.mxu0 0
        %1763 = vmatprep.subr.bf16.mxu0 0
        %1764 = vmatpush1.bf16.msra.mxu0 0
        %1765 = vmatprep.subr.bf16.mxu0 0
        %1766 = vmatpush1.bf16.msra.mxu0 0
        %1767 = vmatprep.mubr.bf16.mxu0 0
        %1768 = vmatmul.mubr.bf16.gmra.mrb[0].mxu0 %v1730
        %v1769 = vpop.f32.mrb[0].mxu0
        %v1770 = vadd.f32 0.0, %v1769
        %v1771 = vpop.f32.mrb[0].mxu0
        %v1772 = vpop.f32.mrb[0].mxu0
        %v1773 = vpop.f32.mrb[0].mxu0
        %1774 = vdwg.mxu0
        %v1775 = vcombine.low %v1632, %v1724
        %v1776 = vcombine.high %v1632, %v1724
        %v1778 = vunpack.c.l.s4 1983009808
        %v1779 = vunpack.c.0.s8 %v1778
        %v1780 = vlaneseq
        %v1781 = vshrl.u32 %v1780, 7
        %v1782 = vsub.s32 %v1779, %v1781
        %v1783 = vrot.slane %v1775, %v1782
        %v1785 = vunpack.c.l.s4 1983009808
        %v1786 = vunpack.c.0.s8 %v1785
        %v1787 = vlaneseq
        %v1788 = vshrl.u32 %v1787, 7
        %v1789 = vsub.s32 %v1786, %v1788
        %v1790 = vrot.slane %v1776, %v1789
        %v1791 = vcombine.low %v1678, %v1770
        %v1792 = vcombine.high %v1678, %v1770
        %v1794 = vunpack.c.l.s4 1983009808
        %v1795 = vunpack.c.0.s8 %v1794
        %v1796 = vlaneseq
        %v1797 = vshrl.u32 %v1796, 7
        %v1798 = vsub.s32 %v1795, %v1797
        %v1799 = vrot.slane %v1791, %v1798
        %v1801 = vunpack.c.l.s4 1983009808
        %v1802 = vunpack.c.0.s8 %v1801
        %v1803 = vlaneseq
        %v1804 = vshrl.u32 %v1803, 7
        %v1805 = vsub.s32 %v1802, %v1804
        %v1806 = vrot.slane %v1792, %v1805
        %v1807 = vcombine.low %v1783, %v1799
        %v1808 = vcombine.high %v1783, %v1799
        %v1810 = vunpack.c.l.s4 1934713408
        %v1811 = vunpack.c.0.s8 %v1810
        %v1812 = vlaneseq
        %v1813 = vshrl.u32 %v1812, 7
        %v1814 = vsub.s32 %v1811, %v1813
        %v1815 = vrot.slane %v1807, %v1814
        %v1817 = vunpack.c.l.s4 1934713408
        %v1818 = vunpack.c.0.s8 %v1817
        %v1819 = vlaneseq
        %v1820 = vshrl.u32 %v1819, 7
        %v1821 = vsub.s32 %v1818, %v1820
        %v1822 = vrot.slane %v1808, %v1821
        %v1823 = vcombine.low %v1790, %v1806
        %v1824 = vcombine.high %v1790, %v1806
        %v1826 = vunpack.c.l.s4 1934713408
        %v1827 = vunpack.c.0.s8 %v1826
        %v1828 = vlaneseq
        %v1829 = vshrl.u32 %v1828, 7
        %v1830 = vsub.s32 %v1827, %v1829
        %v1831 = vrot.slane %v1823, %v1830
        %v1833 = vunpack.c.l.s4 1934713408
        %v1834 = vunpack.c.0.s8 %v1833
        %v1835 = vlaneseq
        %v1836 = vshrl.u32 %v1835, 7
        %v1837 = vsub.s32 %v1834, %v1836
        %v1838 = vrot.slane %v1824, %v1837
        %v1839 = vcombine.high %v1815, 0.0
        %v1840 = vcombine.high %v1822, 0.0
        %v1841 = vcombine.high %v1831, 0.0
        %v1842 = vcombine.high %v1838, 0.0
        %v1843 = vcombine.low %v1815, %v1822
        %v1845 = vunpack.c.l.s4 1983009808
        %v1846 = vunpack.c.0.s8 %v1845
        %v1847 = vlaneseq
        %v1848 = vshrl.u32 %v1847, 7
        %v1849 = vsub.s32 %v1846, %v1848
        %v1850 = vrot.slane %v1843, %v1849
        %v1851 = vcombine.low %v1839, %v1840
        %v1853 = vunpack.c.l.s4 1983009808
        %v1854 = vunpack.c.0.s8 %v1853
        %v1855 = vlaneseq
        %v1856 = vshrl.u32 %v1855, 7
        %v1857 = vsub.s32 %v1854, %v1856
        %v1858 = vrot.slane %v1851, %v1857
        %v1859 = vcombine.low %v1831, %v1838
        %v1861 = vunpack.c.l.s4 1983009808
        %v1862 = vunpack.c.0.s8 %v1861
        %v1863 = vlaneseq
        %v1864 = vshrl.u32 %v1863, 7
        %v1865 = vsub.s32 %v1862, %v1864
        %v1866 = vrot.slane %v1859, %v1865
        %v1867 = vcombine.low %v1841, %v1842
        %v1869 = vunpack.c.l.s4 1983009808
        %v1870 = vunpack.c.0.s8 %v1869
        %v1871 = vlaneseq
        %v1872 = vshrl.u32 %v1871, 7
        %v1873 = vsub.s32 %v1870, %v1872
        %v1874 = vrot.slane %v1867, %v1873
        %v1875 = vcombine.low %v1850, %v1858
        %v1876 = vcombine.high %v1850, %v1858
        %v1878 = vunpack.c.l.s4 1934713408
        %v1879 = vunpack.c.0.s8 %v1878
        %v1880 = vlaneseq
        %v1881 = vshrl.u32 %v1880, 7
        %v1882 = vsub.s32 %v1879, %v1881
        %v1883 = vrot.slane %v1875, %v1882
        %v1885 = vunpack.c.l.s4 1934713408
        %v1886 = vunpack.c.0.s8 %v1885
        %v1887 = vlaneseq
        %v1888 = vshrl.u32 %v1887, 7
        %v1889 = vsub.s32 %v1886, %v1888
        %v1890 = vrot.slane %v1876, %v1889
        %v1891 = vcombine.low %v1866, %v1874
        %v1892 = vcombine.high %v1866, %v1874
        %v1894 = vunpack.c.l.s4 1934713408
        %v1895 = vunpack.c.0.s8 %v1894
        %v1896 = vlaneseq
        %v1897 = vshrl.u32 %v1896, 7
        %v1898 = vsub.s32 %v1895, %v1897
        %v1899 = vrot.slane %v1891, %v1898
        %v1901 = vunpack.c.l.s4 1934713408
        %v1902 = vunpack.c.0.s8 %v1901
        %v1903 = vlaneseq
        %v1904 = vshrl.u32 %v1903, 7
        %v1905 = vsub.s32 %v1902, %v1904
        %v1906 = vrot.slane %v1892, %v1905
        %v1907 = vcombine.low %v1883, %v1899
        %v1908 = vcombine.high %v1883, %v1899
        %v1909 = vcombine.low %v1890, %v1906
        %v1910 = vcombine.high %v1890, %v1906
        %1912 = vrot.lane.b32.xlu0 %v1908, 32
        %v1913 = vpop.permute.xlu0 %1912
        %1916 = vrot.lane.b32.xlu0 %v1909, 64
        %v1917 = vpop.permute.xlu0 %1916
        %1920 = vrot.lane.b32.xlu0 %v1910, 96
        %v1921 = vpop.permute.xlu0 %1920
        %v1923 = vsel %vm1356, %v1907, %v1913
        %vm1924 = vcmask 523264
        %v1925 = vsel %vm1924, %v1923, %v1917
        %vm1926 = vcmask 785408
        %v1927 = vsel %vm1926, %v1925, %v1921
        %v1928 = vpack.c.bf16 %v1927, %v1927
        %v1929 = vld [vmem:[#allocation9] sm:$0xf]
        %v1930 = vld [vmem:[#allocation9 + $0x4] sm:$0xf]
        %v1931 = vld [vmem:[#allocation9 + $0x8] sm:$0xf]
        %v1932 = vld [vmem:[#allocation9 + $0xc] sm:$0xf]
        %v1933 = vld [vmem:[#allocation9 + $0x10] sm:$0xf]
        %v1934 = vld [vmem:[#allocation9 + $0x14] sm:$0xf]
        %v1935 = vld [vmem:[#allocation9 + $0x18] sm:$0xf]
        %v1936 = vld [vmem:[#allocation9 + $0x1c] sm:$0xf]
        %v1937 = vld [vmem:[#allocation9 + $0x20] sm:$0xf]
        %v1938 = vld [vmem:[#allocation9 + $0x24] sm:$0xf]
        %v1939 = vld [vmem:[#allocation9 + $0x28] sm:$0xf]
        %v1940 = vld [vmem:[#allocation9 + $0x2c] sm:$0xf]
        %v1941 = vld [vmem:[#allocation9 + $0x30] sm:$0xf]
        %v1942 = vld [vmem:[#allocation9 + $0x34] sm:$0xf]
        %v1943 = vld [vmem:[#allocation9 + $0x38] sm:$0xf]
        %v1944 = vld [vmem:[#allocation9 + $0x3c] sm:$0xf]
        %v1945 = vld [vmem:[%s6] sm:$0x1]
        %v1947 = vlaneseq
        %v1948 = vshrl.u32 %v1947, 7
        %v1949 = vsub.s32 0, %v1948
        %v1950 = vrot.slane %v1945, %v1949
        %v1968 = vunpack.c.l.b16 %v1929
        %v1969 = vunpack.c.l.b16 %v1930
        %v1970 = vunpack.c.l.b16 %v1931
        %v1971 = vunpack.c.l.b16 %v1932
        %v1972 = vunpack.c.l.b16 %v1933
        %v1973 = vunpack.c.l.b16 %v1934
        %v1974 = vunpack.c.l.b16 %v1935
        %v1975 = vunpack.c.l.b16 %v1936
        %v1976 = vunpack.c.l.b16 %v1937
        %v1977 = vunpack.c.l.b16 %v1938
        %v1978 = vunpack.c.l.b16 %v1939
        %v1979 = vunpack.c.l.b16 %v1940
        %v1980 = vunpack.c.l.b16 %v1941
        %v1981 = vunpack.c.l.b16 %v1942
        %v1982 = vunpack.c.l.b16 %v1943
        %v1983 = vunpack.c.l.b16 %v1944
        %v1984 = vpack.c.b16 %v1969, %v1968
        %v1985 = vpack.c.b16 %v1971, %v1970
        %v1986 = vpack.c.b16 %v1973, %v1972
        %v1987 = vpack.c.b16 %v1975, %v1974
        %v1988 = vpack.c.b16 %v1977, %v1976
        %v1989 = vpack.c.b16 %v1979, %v1978
        %v1990 = vpack.c.b16 %v1981, %v1980
        %v1991 = vpack.c.b16 %v1983, %v1982
        %2000 = vmatprep.subr.bf16.mxu0 0
        %2001 = vmatpush1.bf16.msra.mxu0 %v1984
        %2002 = vmatprep.subr.bf16.mxu0 0
        %2003 = vmatpush1.bf16.msra.mxu0 %v1985
        %2004 = vmatprep.subr.bf16.mxu0 0
        %2005 = vmatpush1.bf16.msra.mxu0 %v1986
        %2006 = vmatprep.subr.bf16.mxu0 0
        %2007 = vmatpush1.bf16.msra.mxu0 %v1987
        %2008 = vmatprep.subr.bf16.mxu0 0
        %2009 = vmatpush1.bf16.msra.mxu0 %v1988
        %2010 = vmatprep.subr.bf16.mxu0 0
        %2011 = vmatpush1.bf16.msra.mxu0 %v1989
        %2012 = vmatprep.subr.bf16.mxu0 0
        %2013 = vmatpush1.bf16.msra.mxu0 %v1990
        %2014 = vmatprep.subr.bf16.mxu0 0
        %2015 = vmatpush1.bf16.msra.mxu0 %v1991
        %2016 = vmatprep.subr.bf16.mxu0 0
        %2017 = vmatpush1.bf16.msra.mxu0 0
        %2018 = vmatprep.subr.bf16.mxu0 0
        %2019 = vmatpush1.bf16.msra.mxu0 0
        %2020 = vmatprep.subr.bf16.mxu0 0
        %2021 = vmatpush1.bf16.msra.mxu0 0
        %2022 = vmatprep.subr.bf16.mxu0 0
        %2023 = vmatpush1.bf16.msra.mxu0 0
        %2024 = vmatprep.subr.bf16.mxu0 0
        %2025 = vmatpush1.bf16.msra.mxu0 0
        %2026 = vmatprep.subr.bf16.mxu0 0
        %2027 = vmatpush1.bf16.msra.mxu0 0
        %2028 = vmatprep.subr.bf16.mxu0 0
        %2029 = vmatpush1.bf16.msra.mxu0 0
        %2030 = vmatprep.subr.bf16.mxu0 0
        %2031 = vmatpush1.bf16.msra.mxu0 0
        %2032 = vmatprep.mubr.bf16.mxu0 0
        %2033 = vmatmul.mubr.bf16.gmra.mrb[0].mxu0 %v1928
        %v2034 = vpop.f32.mrb[0].mxu0
        %v2035 = vadd.f32 %v1950, %v2034
        %v2036 = vpop.f32.mrb[0].mxu0
        %v2037 = vpop.f32.mrb[0].mxu0
        %v2038 = vpop.f32.mrb[0].mxu0
        %2039 = vdwg.mxu0
        %v2040 = vadd.f32 %v588, %v2035
        %v2041 = vld [vmem:[%s11] sm:$0x1]
        %v2042 = vld [vmem:[%s12] sm:$0x1]
        %2043 = vadd.xlane.f32.xlu0 %v2040
        %v2044 = vpop.xlane.xlu0 %2043
        %v2045 = vrcp.pop 128.0
        %v2046 = vmul.f32 %v2044, %v2045
        %v2047 = vsub.f32 %v2040, %v2046
        %v2048 = vmul.f32 %v2047, %v2047
        %2049 = vadd.xlane.f32.xlu0 %v2048
        %v2050 = vpop.xlane.xlu0 %2049
        %v2051 = vmul.f32 %v2050, %v2045
        %v2052 = vadd.f32 %v2051, 1e-05
        %v2053 = vrsqrt.pop %v2052
        %v2054 = vmul.f32 %v2047, %v2053
        %v2056 = vlaneseq
        %v2057 = vshrl.u32 %v2056, 7
        %v2058 = vsub.s32 0, %v2057
        %v2059 = vrot.slane %v2041, %v2058
        %v2061 = vmul.f32 %v2054, %v2059
        %v2063 = vlaneseq
        %v2064 = vshrl.u32 %v2063, 7
        %v2065 = vsub.s32 0, %v2064
        %v2066 = vrot.slane %v2042, %v2065
        %v2068 = vadd.f32 %v2061, %v2066
        %v2069 = vpack.c.bf16 %v2068, %v2068
        %v2070 = vld [vmem:[#allocation11] sm:$0xff]
        %v2071 = vld [vmem:[#allocation11 + $0x8] sm:$0xff]
        %v2072 = vld [vmem:[#allocation11 + $0x10] sm:$0xff]
        %v2073 = vld [vmem:[#allocation11 + $0x18] sm:$0xff]
        %v2074 = vld [vmem:[#allocation11 + $0x20] sm:$0xff]
        %v2075 = vld [vmem:[#allocation11 + $0x28] sm:$0xff]
        %v2076 = vld [vmem:[#allocation11 + $0x30] sm:$0xff]
        %v2077 = vld [vmem:[#allocation11 + $0x38] sm:$0xff]
        %v2078 = vld [vmem:[#allocation11 + $0x40] sm:$0xff]
        %v2079 = vld [vmem:[#allocation11 + $0x48] sm:$0xff]
        %v2080 = vld [vmem:[#allocation11 + $0x50] sm:$0xff]
        %v2081 = vld [vmem:[#allocation11 + $0x58] sm:$0xff]
        %v2082 = vld [vmem:[#allocation11 + $0x60] sm:$0xff]
        %v2083 = vld [vmem:[#allocation11 + $0x68] sm:$0xff]
        %v2084 = vld [vmem:[#allocation11 + $0x70] sm:$0xff]
        %v2085 = vld [vmem:[#allocation11 + $0x78] sm:$0xff]
        %v2086 = vld [vmem:[%s8] sm:$0x3]
        %v2088 = vlaneseq
        %v2089 = vshrl.u32 %v2088, 7
        %v2090 = vsub.s32 0, %v2089
        %v2091 = vrot.slane %v2086, %v2090
        %v2092 = vlaneseq
        %v2093 = vshrl.u32 %v2092, 7
        %v2094 = vsub.s32 1, %v2093
        %v2095 = vrot.slane %v2086, %v2094
        %v2114 = vunpack.c.l.b16 %v2070
        %v2115 = vunpack.c.h.b16 %v2070
        %v2116 = vunpack.c.l.b16 %v2071
        %v2117 = vunpack.c.h.b16 %v2071
        %v2118 = vunpack.c.l.b16 %v2072
        %v2119 = vunpack.c.h.b16 %v2072
        %v2120 = vunpack.c.l.b16 %v2073
        %v2121 = vunpack.c.h.b16 %v2073
        %v2122 = vunpack.c.l.b16 %v2074
        %v2123 = vunpack.c.h.b16 %v2074
        %v2124 = vunpack.c.l.b16 %v2075
        %v2125 = vunpack.c.h.b16 %v2075
        %v2126 = vunpack.c.l.b16 %v2076
        %v2127 = vunpack.c.h.b16 %v2076
        %v2128 = vunpack.c.l.b16 %v2077
        %v2129 = vunpack.c.h.b16 %v2077
        %v2130 = vunpack.c.l.b16 %v2078
        %v2131 = vunpack.c.h.b16 %v2078
        %v2132 = vunpack.c.l.b16 %v2079
        %v2133 = vunpack.c.h.b16 %v2079
        %v2134 = vunpack.c.l.b16 %v2080
        %v2135 = vunpack.c.h.b16 %v2080
        %v2136 = vunpack.c.l.b16 %v2081
        %v2137 = vunpack.c.h.b16 %v2081
        %v2138 = vunpack.c.l.b16 %v2082
        %v2139 = vunpack.c.h.b16 %v2082
        %v2140 = vunpack.c.l.b16 %v2083
        %v2141 = vunpack.c.h.b16 %v2083
        %v2142 = vunpack.c.l.b16 %v2084
        %v2143 = vunpack.c.h.b16 %v2084
        %v2144 = vunpack.c.l.b16 %v2085
        %v2145 = vunpack.c.h.b16 %v2085
        %v2146 = vpack.c.b16 %v2116, %v2114
        %v2147 = vpack.c.b16 %v2117, %v2115
        %v2148 = vpack.c.b16 %v2120, %v2118
        %v2149 = vpack.c.b16 %v2121, %v2119
        %v2150 = vpack.c.b16 %v2124, %v2122
        %v2151 = vpack.c.b16 %v2125, %v2123
        %v2152 = vpack.c.b16 %v2128, %v2126
        %v2153 = vpack.c.b16 %v2129, %v2127
        %v2154 = vpack.c.b16 %v2132, %v2130
        %v2155 = vpack.c.b16 %v2133, %v2131
        %v2156 = vpack.c.b16 %v2136, %v2134
        %v2157 = vpack.c.b16 %v2137, %v2135
        %v2158 = vpack.c.b16 %v2140, %v2138
        %v2159 = vpack.c.b16 %v2141, %v2139
        %v2160 = vpack.c.b16 %v2144, %v2142
        %v2161 = vpack.c.b16 %v2145, %v2143
        %2178 = vmatprep.subr.bf16.mxu0 %v2147
        %2179 = vmatpush1.bf16.msra.mxu0 %v2146
        %2180 = vmatprep.subr.bf16.mxu0 %v2149
        %2181 = vmatpush1.bf16.msra.mxu0 %v2148
        %2182 = vmatprep.subr.bf16.mxu0 %v2151
        %2183 = vmatpush1.bf16.msra.mxu0 %v2150
        %2184 = vmatprep.subr.bf16.mxu0 %v2153
        %2185 = vmatpush1.bf16.msra.mxu0 %v2152
        %2186 = vmatprep.subr.bf16.mxu0 %v2155
        %2187 = vmatpush1.bf16.msra.mxu0 %v2154
        %2188 = vmatprep.subr.bf16.mxu0 %v2157
        %2189 = vmatpush1.bf16.msra.mxu0 %v2156
        %2190 = vmatprep.subr.bf16.mxu0 %v2159
        %2191 = vmatpush1.bf16.msra.mxu0 %v2158
        %2192 = vmatprep.subr.bf16.mxu0 %v2161
        %2193 = vmatpush1.bf16.msra.mxu0 %v2160
        %2194 = vmatprep.subr.bf16.mxu0 0
        %2195 = vmatpush1.bf16.msra.mxu0 0
        %2196 = vmatprep.subr.bf16.mxu0 0
        %2197 = vmatpush1.bf16.msra.mxu0 0
        %2198 = vmatprep.subr.bf16.mxu0 0
        %2199 = vmatpush1.bf16.msra.mxu0 0
        %2200 = vmatprep.subr.bf16.mxu0 0
        %2201 = vmatpush1.bf16.msra.mxu0 0
        %2202 = vmatprep.subr.bf16.mxu0 0
        %2203 = vmatpush1.bf16.msra.mxu0 0
        %2204 = vmatprep.subr.bf16.mxu0 0
        %2205 = vmatpush1.bf16.msra.mxu0 0
        %2206 = vmatprep.subr.bf16.mxu0 0
        %2207 = vmatpush1.bf16.msra.mxu0 0
        %2208 = vmatprep.subr.bf16.mxu0 0
        %2209 = vmatpush1.bf16.msra.mxu0 0
        %2210 = vmatprep.mubr.bf16.mxu0 0
        %2211 = vmatmul.mubr.bf16.gmra.mrb[0].mxu0 %v2069
        %v2212 = vpop.f32.mrb[0].mxu0
        %v2213 = vadd.f32 %v2091, %v2212
        %v2214 = vpop.f32.mrb[0].mxu0
        %v2215 = vadd.f32 %v2095, %v2214
        %v2216 = vpop.f32.mrb[0].mxu0
        %v2217 = vpop.f32.mrb[0].mxu0
        %2218 = vdwg.mxu0
        %v2219 = vmax.f32 %v2213, 0.0
        %v2220 = vmax.f32 %v2215, 0.0
        %v2221 = vpack.c.bf16 %v2219, %v2219
        %v2222 = vpack.c.bf16 %v2220, %v2220
        %v2223 = vld [vmem:[#allocation12] sm:$0xf]
        %v2224 = vld [vmem:[#allocation12 + $0x4] sm:$0xf]
        %v2225 = vld [vmem:[#allocation12 + $0x8] sm:$0xf]
        %v2226 = vld [vmem:[#allocation12 + $0xc] sm:$0xf]
        %v2227 = vld [vmem:[#allocation12 + $0x10] sm:$0xf]
        %v2228 = vld [vmem:[#allocation12 + $0x14] sm:$0xf]
        %v2229 = vld [vmem:[#allocation12 + $0x18] sm:$0xf]
        %v2230 = vld [vmem:[#allocation12 + $0x1c] sm:$0xf]
        %v2231 = vld [vmem:[#allocation12 + $0x20] sm:$0xf]
        %v2232 = vld [vmem:[#allocation12 + $0x24] sm:$0xf]
        %v2233 = vld [vmem:[#allocation12 + $0x28] sm:$0xf]
        %v2234 = vld [vmem:[#allocation12 + $0x2c] sm:$0xf]
        %v2235 = vld [vmem:[#allocation12 + $0x30] sm:$0xf]
        %v2236 = vld [vmem:[#allocation12 + $0x34] sm:$0xf]
        %v2237 = vld [vmem:[#allocation12 + $0x38] sm:$0xf]
        %v2238 = vld [vmem:[#allocation12 + $0x3c] sm:$0xf]
        %v2239 = vld [vmem:[#allocation12 + $0x40] sm:$0xf]
        %v2240 = vld [vmem:[#allocation12 + $0x44] sm:$0xf]
        %v2241 = vld [vmem:[#allocation12 + $0x48] sm:$0xf]
        %v2242 = vld [vmem:[#allocation12 + $0x4c] sm:$0xf]
        %v2243 = vld [vmem:[#allocation12 + $0x50] sm:$0xf]
        %v2244 = vld [vmem:[#allocation12 + $0x54] sm:$0xf]
        %v2245 = vld [vmem:[#allocation12 + $0x58] sm:$0xf]
        %v2246 = vld [vmem:[#allocation12 + $0x5c] sm:$0xf]
        %v2247 = vld [vmem:[#allocation12 + $0x60] sm:$0xf]
        %v2248 = vld [vmem:[#allocation12 + $0x64] sm:$0xf]
        %v2249 = vld [vmem:[#allocation12 + $0x68] sm:$0xf]
        %v2250 = vld [vmem:[#allocation12 + $0x6c] sm:$0xf]
        %v2251 = vld [vmem:[#allocation12 + $0x70] sm:$0xf]
        %v2252 = vld [vmem:[#allocation12 + $0x74] sm:$0xf]
        %v2253 = vld [vmem:[#allocation12 + $0x78] sm:$0xf]
        %v2254 = vld [vmem:[#allocation12 + $0x7c] sm:$0xf]
        %v2255 = vld [vmem:[%s10] sm:$0x1]
        %v2257 = vlaneseq
        %v2258 = vshrl.u32 %v2257, 7
        %v2259 = vsub.s32 0, %v2258
        %v2260 = vrot.slane %v2255, %v2259
        %v2294 = vunpack.c.l.b16 %v2223
        %v2295 = vunpack.c.l.b16 %v2224
        %v2296 = vunpack.c.l.b16 %v2225
        %v2297 = vunpack.c.l.b16 %v2226
        %v2298 = vunpack.c.l.b16 %v2227
        %v2299 = vunpack.c.l.b16 %v2228
        %v2300 = vunpack.c.l.b16 %v2229
        %v2301 = vunpack.c.l.b16 %v2230
        %v2302 = vunpack.c.l.b16 %v2231
        %v2303 = vunpack.c.l.b16 %v2232
        %v2304 = vunpack.c.l.b16 %v2233
        %v2305 = vunpack.c.l.b16 %v2234
        %v2306 = vunpack.c.l.b16 %v2235
        %v2307 = vunpack.c.l.b16 %v2236
        %v2308 = vunpack.c.l.b16 %v2237
        %v2309 = vunpack.c.l.b16 %v2238
        %v2310 = vunpack.c.l.b16 %v2239
        %v2311 = vunpack.c.l.b16 %v2240
        %v2312 = vunpack.c.l.b16 %v2241
        %v2313 = vunpack.c.l.b16 %v2242
        %v2314 = vunpack.c.l.b16 %v2243
        %v2315 = vunpack.c.l.b16 %v2244
        %v2316 = vunpack.c.l.b16 %v2245
        %v2317 = vunpack.c.l.b16 %v2246
        %v2318 = vunpack.c.l.b16 %v2247
        %v2319 = vunpack.c.l.b16 %v2248
        %v2320 = vunpack.c.l.b16 %v2249
        %v2321 = vunpack.c.l.b16 %v2250
        %v2322 = vunpack.c.l.b16 %v2251
        %v2323 = vunpack.c.l.b16 %v2252
        %v2324 = vunpack.c.l.b16 %v2253
        %v2325 = vunpack.c.l.b16 %v2254
        %v2326 = vpack.c.b16 %v2295, %v2294
        %v2327 = vpack.c.b16 %v2297, %v2296
        %v2328 = vpack.c.b16 %v2299, %v2298
        %v2329 = vpack.c.b16 %v2301, %v2300
        %v2330 = vpack.c.b16 %v2303, %v2302
        %v2331 = vpack.c.b16 %v2305, %v2304
        %v2332 = vpack.c.b16 %v2307, %v2306
        %v2333 = vpack.c.b16 %v2309, %v2308
        %v2334 = vpack.c.b16 %v2311, %v2310
        %v2335 = vpack.c.b16 %v2313, %v2312
        %v2336 = vpack.c.b16 %v2315, %v2314
        %v2337 = vpack.c.b16 %v2317, %v2316
        %v2338 = vpack.c.b16 %v2319, %v2318
        %v2339 = vpack.c.b16 %v2321, %v2320
        %v2340 = vpack.c.b16 %v2323, %v2322
        %v2341 = vpack.c.b16 %v2325, %v2324
        %2358 = vmatprep.subr.bf16.mxu0 0
        %2359 = vmatpush1.bf16.msra.mxu0 %v2326
        %2360 = vmatprep.subr.bf16.mxu0 0
        %2361 = vmatpush1.bf16.msra.mxu0 %v2327
        %2362 = vmatprep.subr.bf16.mxu0 0
        %2363 = vmatpush1.bf16.msra.mxu0 %v2328
        %2364 = vmatprep.subr.bf16.mxu0 0
        %2365 = vmatpush1.bf16.msra.mxu0 %v2329
        %2366 = vmatprep.subr.bf16.mxu0 0
        %2367 = vmatpush1.bf16.msra.mxu0 %v2330
        %2368 = vmatprep.subr.bf16.mxu0 0
        %2369 = vmatpush1.bf16.msra.mxu0 %v2331
        %2370 = vmatprep.subr.bf16.mxu0 0
        %2371 = vmatpush1.bf16.msra.mxu0 %v2332
        %2372 = vmatprep.subr.bf16.mxu0 0
        %2373 = vmatpush1.bf16.msra.mxu0 %v2333
        %2374 = vmatprep.subr.bf16.mxu0 0
        %2375 = vmatpush1.bf16.msra.mxu0 %v2334
        %2376 = vmatprep.subr.bf16.mxu0 0
        %2377 = vmatpush1.bf16.msra.mxu0 %v2335
        %2378 = vmatprep.subr.bf16.mxu0 0
        %2379 = vmatpush1.bf16.msra.mxu0 %v2336
        %2380 = vmatprep.subr.bf16.mxu0 0
        %2381 = vmatpush1.bf16.msra.mxu0 %v2337
        %2382 = vmatprep.subr.bf16.mxu0 0
        %2383 = vmatpush1.bf16.msra.mxu0 %v2338
        %2384 = vmatprep.subr.bf16.mxu0 0
        %2385 = vmatpush1.bf16.msra.mxu0 %v2339
        %2386 = vmatprep.subr.bf16.mxu0 0
        %2387 = vmatpush1.bf16.msra.mxu0 %v2340
        %2388 = vmatprep.subr.bf16.mxu0 0
        %2389 = vmatpush1.bf16.msra.mxu0 %v2341
        %2390 = vmatprep.mubr.bf16.mxu0 %v2222
        %2391 = vmatmul.mubr.bf16.gmra.mrb[0].mxu0 %v2221
        %v2392 = vpop.f32.mrb[0].mxu0
        %v2393 = vadd.f32 %v2260, %v2392
        %v2394 = vpop.f32.mrb[0].mxu0
        %v2395 = vpop.f32.mrb[0].mxu0
        %v2396 = vpop.f32.mrb[0].mxu0
        %2397 = vdwg.mxu0
        %v2398 = vadd.f32 %v2068, %v2393
        %v2399 = vld [vmem:[%s13] sm:$0x1]
        %v2400 = vld [vmem:[%s14] sm:$0x1]
        %2401 = vadd.xlane.f32.xlu0 %v2398
        %v2402 = vpop.xlane.xlu0 %2401
        %v2403 = vmul.f32 %v2402, %v2045
        %v2404 = vsub.f32 %v2398, %v2403
        %v2405 = vmul.f32 %v2404, %v2404
        %2406 = vadd.xlane.f32.xlu0 %v2405
        %v2407 = vpop.xlane.xlu0 %2406
        %v2408 = vmul.f32 %v2407, %v2045
        %v2409 = vadd.f32 %v2408, 1e-05
        %v2410 = vrsqrt.pop %v2409
        %v2411 = vmul.f32 %v2404, %v2410
        %v2413 = vlaneseq
        %v2414 = vshrl.u32 %v2413, 7
        %v2415 = vsub.s32 0, %v2414
        %v2416 = vrot.slane %v2399, %v2415
        %v2418 = vmul.f32 %v2411, %v2416
        %v2420 = vlaneseq
        %v2421 = vshrl.u32 %v2420, 7
        %v2422 = vsub.s32 0, %v2421
        %v2423 = vrot.slane %v2400, %v2422
        %v2425 = vadd.f32 %v2418, %v2423
        %2426 = vst [vmem:[%s581] sm:$0xff] %v2425
        %s2427 = sand.u32 %s364, 1
        %s2428 = scalar_lea.sflag [#allocation5], %s2427
        %s2429 = sand.u32 %s364, 1
        %s2430 = smul.addr %s2429, 8
        %s2431 = scalar_lea.vmem [#allocation14], %s2430
        // Predicated region
        $region105: #{tpu_custom_call.1} parent=79 // pred_check
          %p2432 = pneg %p374
        $region106: #{tpu_custom_call.1} parent=79 // pred_check_branch
          %2434 = sbr.rel (%p2432) target = $region108
        $region107: #{tpu_custom_call.1} parent=79 // pred_region
          %s2436 = ssub.s32 128, 128
          %2437 = vsyncadd %s2428, %s2436
          %s2438 = smul.addr %s36, 128
          %s2439 = scalar_lea.hbm %s15, %s2438
          %s2441 = sshll.u32 %s2431, 4
          %s2442 = int_to_ptr.vmem [resolvable:$true] %s2441
          %2444 = dma.vmem_to_hbm [thread:$0]  %s2442, 128, %s2439, %s2428
        $region108: #{tpu_custom_call.1} parent=79 // pred_fallthru
          _
      $region80: #{tpu_custom_call.1} parent=5 // pred_fallthru
        _
      %p2445 = scmp.le.s32.totalorder 2, %s31
      // Predicated region
      $region109: #{tpu_custom_call.1} parent=5 // pred_check
        %p2446 = pneg %p2445
      $region110: #{tpu_custom_call.1} parent=5 // pred_check_branch
        %2448 = sbr.rel (%p2446) target = $region112
      $region111: #{tpu_custom_call.1} parent=5 // pred_region
        %s2449 = ssub.s32 %s31, 2
        // Predicated region
        $region113: #{tpu_custom_call.1} parent=111 // pred_check
          %p2450 = pneg %p380
        $region114: #{tpu_custom_call.1} parent=111 // pred_check_branch
          %2452 = sbr.rel (%p2450) target = $region116
        $region115: #{tpu_custom_call.1} parent=111 // pred_region
          %s2453 = sand.u32 %s365, 1
          %s2454 = scalar_lea.sflag [#allocation5], %s2453
          %s2455 = sand.u32 %s365, 1
          %s2456 = smul.addr %s2455, 8
          %s2457 = scalar_lea.vmem [#allocation14], %s2456
          %2458 = dma.done %s2454, 128
        $region116: #{tpu_custom_call.1} parent=111 // pred_fallthru
          _
      $region112: #{tpu_custom_call.1} parent=5 // pred_fallthru
        _
    $region6: #{tpu_custom_call.1} parent=1 // loop_footer
      %s35 = sadd.s32 1, %s31
    $region7: #{tpu_custom_call.1} parent=1 // loop_footer_branch
      %30 = sbr.rel target = $region3
    $region8: #{tpu_custom_call.1} parent=1 // loop_exit
      _
    %2459 = vsyncpa [#allocation4], 1
    %s2460 = scalar_lea.sflag [#allocation4], 1
    %2461 = vsyncpa %s2460, 1
    %2462 = vsyncpa [#allocation7], 1
    %2463 = vsyncpa [#allocation10], 1
    %2464 = vsyncpa [#allocation13], 1
    %2465 = vsyncpa [#allocation5], 1
    %s2466 = scalar_lea.sflag [#allocation5], 1
    %2467 = vsyncpa %s2466, 1

// kernel: tpu_custom_call.1
$region0: #{tpu_custom_call.1}
  #allocation0 [shape = 'u32[]', space=smem, size = 0x4, offset = 0x4, fixed_abs, tag = 'smem constant byte address 0x4 - core index']
  #allocation1 [shape = 'u32[144,128]{1,0:T(1,128)}', space=vmem, size = 0x12000, scoped, tag = 'internal scratch']
  #allocation2 [shape = 'f32[1]{0:T(128)S(6)}', space=smem, size = 0x200, scoped, tag = 'scoped memory for tpu_custom_call.1']
  %s0 = inlined_call_operand.hbm [shape: f32[2,8,128], index: 0, kind: input, shape index: {}]
  %s1 = inlined_call_operand.hbm [shape: f32[1,8,128], index: 1, kind: input, shape index: {}]
  %s2 = inlined_call_operand.<no memory space> [shape: f32[1], index: 2, kind: input, shape index: {}]
  %s3 = inlined_call_operand.hbm [shape: bf16[128,384], index: 3, kind: input, shape index: {}]
  %s4 = inlined_call_operand.vmem [shape: f32[1,384], index: 4, kind: input, shape index: {}]
  %s5 = inlined_call_operand.hbm [shape: bf16[128,128], index: 5, kind: input, shape index: {}]
  %s6 = inlined_call_operand.vmem [shape: f32[1,128], index: 6, kind: input, shape index: {}]
  %s7 = inlined_call_operand.hbm [shape: bf16[128,256], index: 7, kind: input, shape index: {}]
  %s8 = inlined_call_operand.vmem [shape: f32[1,256], index: 8, kind: input, shape index: {}]
  %s9 = inlined_call_operand.hbm [shape: bf16[256,128], index: 9, kind: input, shape index: {}]
  %s10 = inlined_call_operand.vmem [shape: f32[1,128], index: 10, kind: input, shape index: {}]
  %s11 = inlined_call_operand.vmem [shape: f32[1,128], index: 11, kind: input, shape index: {}]
  %s12 = inlined_call_operand.vmem [shape: f32[1,128], index: 12, kind: input, shape index: {}]
  %s13 = inlined_call_operand.vmem [shape: f32[1,128], index: 13, kind: input, shape index: {}]
  %s14 = inlined_call_operand.vmem [shape: f32[1,128], index: 14, kind: input, shape index: {}]
  %s15 = inlined_call_operand.hbm [shape: f32[2,8,128], index: 15, kind: output, shape index: {}]
  %s16 = sld [smem:[#allocation0]]
  $region117: #{tpu_custom_call.1} parent=0
    _
  %s18 = ssub.s32 1, %s16
  %s19 = scalar_select 0, %s18, %s16
  %20 = sst [smem:[#allocation2]] %s2
  $region1: #{tpu_custom_call.1} parent=0
    #allocation3 [shape = 'u8[8192]{0}', space=vmem, size = 0x2000, scoped, tag = 'input window, operand 0']
    #allocation4 [shape = 's32[2]{0}', space=sflag, size = 0x8, scoped, tag = 'scoped memory for tpu_custom_call.1']
    #allocation5 [shape = 's32[2]{0}', space=sflag, size = 0x8, scoped, tag = 'scoped memory for tpu_custom_call.1']
    #allocation6 [shape = 'u8[4096]{0}', space=vmem, size = 0x1000, scoped, tag = 'input window, operand 1, single buffered']
    #allocation7 [shape = 's32[1]{0}', space=sflag, size = 0x4, scoped, tag = 'scoped memory for tpu_custom_call.1']
    #allocation8 [shape = 'u8[98304]{0}', space=vmem, size = 0x18000, scoped, tag = 'input window, operand 3, single buffered']
    #allocation9 [shape = 'u8[32768]{0}', space=vmem, size = 0x8000, scoped, tag = 'input window, operand 5, single buffered']
    #allocation10 [shape = 's32[1]{0}', space=sflag, size = 0x4, scoped, tag = 'scoped memory for tpu_custom_call.1']
    #allocation11 [shape = 'u8[65536]{0}', space=vmem, size = 0x10000, scoped, tag = 'input window, operand 7, single buffered']
    #allocation12 [shape = 'u8[65536]{0}', space=vmem, size = 0x10000, scoped, tag = 'input window, operand 9, single buffered']
    #allocation13 [shape = 's32[1]{0}', space=sflag, size = 0x4, scoped, tag = 'scoped memory for tpu_custom_call.1']
    #allocation14 [shape = 'u8[8192]{0}', space=vmem, size = 0x2000, scoped, tag = 'output window, operand 0']
    %21 = vsyncpa [#allocation4], 0
    %s22 = scalar_lea.sflag [#allocation4], 1
    %23 = vsyncpa %s22, 0
    %24 = vsyncpa [#allocation7], 0
    %25 = vsyncpa [#allocation10], 0
    %26 = vsyncpa [#allocation13], 0
    %27 = vsyncpa [#allocation5], 0
    %s28 = scalar_lea.sflag [#allocation5], 1
    %29 = vsyncpa %s28, 0
    loop: start=0, step=1, limit=4
    $region2: #{tpu_custom_call.1} parent=1 // loop_pre_header
      _
    $region3: #{tpu_custom_call.1} parent=1 // loop_header
      %s31 = sphi 0, %s35
      %p32 = scmp.ge.s32.totalorder %s31, 4
      %s41 = sphi 0, %s43
      %s44 = sphi 0, %s41
      %s45 = sphi 0, %s44
      %s61 = sphi 0, %s45
      %s65 = sphi 0, %s65
      %s67 = sphi 0, %s65
      %s68 = sphi 0, %s67
      %s82 = sphi 0, %s68
      %s86 = sphi 0, %s86
      %s88 = sphi 0, %s86
      %s89 = sphi 0, %s88
      %s103 = sphi 0, %s89
      %s107 = sphi 0, %s107
      %s109 = sphi 0, %s107
      %s110 = sphi 0, %s109
      %s124 = sphi 0, %s110
      %s128 = sphi 0, %s128
      %s130 = sphi 0, %s128
      %s131 = sphi 0, %s130
      %s145 = sphi 0, %s131
      %s149 = sphi 0, %s149
      %s151 = sphi 0, %s149
      %s152 = sphi 0, %s151
      %s166 = sphi 0, %s152
      %s170 = sphi 0, %s170
      %s172 = sphi 0, %s170
      %s173 = sphi 0, %s172
      %s187 = sphi 0, %s173
      %s191 = sphi 0, %s191
      %s193 = sphi 0, %s191
      %s194 = sphi 0, %s193
      %s208 = sphi 0, %s194
      %s212 = sphi 0, %s212
      %s214 = sphi 0, %s212
      %s215 = sphi 0, %s214
      %s229 = sphi 0, %s215
      %s233 = sphi 0, %s233
      %s235 = sphi 0, %s233
      %s236 = sphi 0, %s235
      %s250 = sphi 0, %s236
      %s254 = sphi 0, %s254
      %s256 = sphi 0, %s254
      %s257 = sphi 0, %s256
      %s271 = sphi 0, %s257
      %s275 = sphi 0, %s275
      %s277 = sphi 0, %s275
      %s278 = sphi 0, %s277
      %s292 = sphi 0, %s278
      %s296 = sphi 0, %s296
      %s298 = sphi 0, %s296
      %s299 = sphi 0, %s298
      %s313 = sphi 0, %s299
      %s317 = sphi 0, %s317
      %s319 = sphi 0, %s317
      %s320 = sphi 0, %s319
      %s334 = sphi 0, %s320
      %s338 = sphi 0, %s338
      %s340 = sphi 0, %s338
      %s341 = sphi 0, %s340
      %s355 = sphi 0, %s341
      %s361 = sphi 0, %s363
      %s364 = sphi 0, %s361
      %s365 = sphi 0, %s364
      %s381 = sphi 0, %s365
    $region4: #{tpu_custom_call.1} parent=1 // loop_header_branch
      %34 = sbr.rel (%p32) target = $region8
    $region5: #{tpu_custom_call.1} parent=1 // loop_body
      %s36 = ssub.s32 %s31, 1
      %s37 = ssub.s32 %s31, 2
      %s38 = sadd.s32 %s31, 1
      %s39 = ssub.s32 %s31, %s38
      %p40 = scmp.eq.s32.totalorder %s39, 0
      %s42 = sadd.s32 %s41, 1
      %s43 = scalar_select %p40, %s41, %s42
      %p46 = pneg %p40
      %p47 = scmp.eq.s32.totalorder %s31, 1
      %p48 = por %p46, %p47
      %p49 = scmp.ne.s32.totalorder %s41, %s44
      %p50 = scmp.eq.s32.totalorder %s31, 0
      %p51 = por %p49, %p50
      %p52 = scmp.ne.s32.totalorder %s41, %s44
      %p53 = scmp.eq.s32.totalorder %s36, 1
      %p54 = por %p52, %p53
      %p55 = scmp.ne.s32.totalorder %s44, %s45
      %p56 = scmp.eq.s32.totalorder %s36, 0
      %p57 = por %p55, %p56
      %p58 = scmp.ne.s32.totalorder %s44, %s45
      %p59 = scmp.eq.s32.totalorder %s37, 1
      %p60 = por %p58, %p59
      %p62 = scmp.ne.s32.totalorder %s45, %s61
      %p63 = scmp.eq.s32.totalorder %s37, 0
      %p64 = por %p62, %p63
      %s66 = sadd.s32 %s65, 1
      %p69 = scmp.eq.s32.totalorder %s31, 1
      %p70 = scmp.ne.s32.totalorder %s65, %s67
      %p71 = scmp.eq.s32.totalorder %s31, 0
      %p72 = por %p70, %p71
      %p73 = scmp.ne.s32.totalorder %s65, %s67
      %p74 = scmp.eq.s32.totalorder %s36, 1
      %p75 = por %p73, %p74
      %p76 = scmp.ne.s32.totalorder %s67, %s68
      %p77 = scmp.eq.s32.totalorder %s36, 0
      %p78 = por %p76, %p77
      %p79 = scmp.ne.s32.totalorder %s67, %s68
      %p80 = scmp.eq.s32.totalorder %s37, 1
      %p81 = por %p79, %p80
      %p83 = scmp.ne.s32.totalorder %s68, %s82
      %p84 = scmp.eq.s32.totalorder %s37, 0
      %p85 = por %p83, %p84
      %s87 = sadd.s32 %s86, 1
      %p90 = scmp.eq.s32.totalorder %s31, 1
      %p91 = scmp.ne.s32.totalorder %s86, %s88
      %p92 = scmp.eq.s32.totalorder %s31, 0
      %p93 = por %p91, %p92
      %p94 = scmp.ne.s32.totalorder %s86, %s88
      %p95 = scmp.eq.s32.totalorder %s36, 1
      %p96 = por %p94, %p95
      %p97 = scmp.ne.s32.totalorder %s88, %s89
      %p98 = scmp.eq.s32.totalorder %s36, 0
      %p99 = por %p97, %p98
      %p100 = scmp.ne.s32.totalorder %s88, %s89
      %p101 = scmp.eq.s32.totalorder %s37, 1
      %p102 = por %p100, %p101
      %p104 = scmp.ne.s32.totalorder %s89, %s103
      %p105 = scmp.eq.s32.totalorder %s37, 0
      %p106 = por %p104, %p105
      %s108 = sadd.s32 %s107, 1
      %p111 = scmp.eq.s32.totalorder %s31, 1
      %p112 = scmp.ne.s32.totalorder %s107, %s109
      %p113 = scmp.eq.s32.totalorder %s31, 0
      %p114 = por %p112, %p113
      %p115 = scmp.ne.s32.totalorder %s107, %s109
      %p116 = scmp.eq.s32.totalorder %s36, 1
      %p117 = por %p115, %p116
      %p118 = scmp.ne.s32.totalorder %s109, %s110
      %p119 = scmp.eq.s32.totalorder %s36, 0
      %p120 = por %p118, %p119
      %p121 = scmp.ne.s32.totalorder %s109, %s110
      %p122 = scmp.eq.s32.totalorder %s37, 1
      %p123 = por %p121, %p122
      %p125 = scmp.ne.s32.totalorder %s110, %s124
      %p126 = scmp.eq.s32.totalorder %s37, 0
      %p127 = por %p125, %p126
      %s129 = sadd.s32 %s128, 1
      %p132 = scmp.eq.s32.totalorder %s31, 1
      %p133 = scmp.ne.s32.totalorder %s128, %s130
      %p134 = scmp.eq.s32.totalorder %s31, 0
      %p135 = por %p133, %p134
      %p136 = scmp.ne.s32.totalorder %s128, %s130
      %p137 = scmp.eq.s32.totalorder %s36, 1
      %p138 = por %p136, %p137
      %p139 = scmp.ne.s32.totalorder %s130, %s131
      %p140 = scmp.eq.s32.totalorder %s36, 0
      %p141 = por %p139, %p140
      %p142 = scmp.ne.s32.totalorder %s130, %s131
      %p143 = scmp.eq.s32.totalorder %s37, 1
      %p144 = por %p142, %p143
      %p146 = scmp.ne.s32.totalorder %s131, %s145
      %p147 = scmp.eq.s32.totalorder %s37, 0
      %p148 = por %p146, %p147
      %s150 = sadd.s32 %s149, 1
      %p153 = scmp.eq.s32.totalorder %s31, 1
      %p154 = scmp.ne.s32.totalorder %s149, %s151
      %p155 = scmp.eq.s32.totalorder %s31, 0
      %p156 = por %p154, %p155
      %p157 = scmp.ne.s32.totalorder %s149, %s151
      %p158 = scmp.eq.s32.totalorder %s36, 1
      %p159 = por %p157, %p158
      %p160 = scmp.ne.s32.totalorder %s151, %s152
      %p161 = scmp.eq.s32.totalorder %s36, 0
      %p162 = por %p160, %p161
      %p163 = scmp.ne.s32.totalorder %s151, %s152
      %p164 = scmp.eq.s32.totalorder %s37, 1
      %p165 = por %p163, %p164
      %p167 = scmp.ne.s32.totalorder %s152, %s166
      %p168 = scmp.eq.s32.totalorder %s37, 0
      %p169 = por %p167, %p168
      %s171 = sadd.s32 %s170, 1
      %p174 = scmp.eq.s32.totalorder %s31, 1
      %p175 = scmp.ne.s32.totalorder %s170, %s172
      %p176 = scmp.eq.s32.totalorder %s31, 0
      %p177 = por %p175, %p176
      %p178 = scmp.ne.s32.totalorder %s170, %s172
      %p179 = scmp.eq.s32.totalorder %s36, 1
      %p180 = por %p178, %p179
      %p181 = scmp.ne.s32.totalorder %s172, %s173
      %p182 = scmp.eq.s32.totalorder %s36, 0
      %p183 = por %p181, %p182
      %p184 = scmp.ne.s32.totalorder %s172, %s173
      %p185 = scmp.eq.s32.totalorder %s37, 1
      %p186 = por %p184, %p185
      %p188 = scmp.ne.s32.totalorder %s173, %s187
      %p189 = scmp.eq.s32.totalorder %s37, 0
      %p190 = por %p188, %p189
      %s192 = sadd.s32 %s191, 1
      %p195 = scmp.eq.s32.totalorder %s31, 1
      %p196 = scmp.ne.s32.totalorder %s191, %s193
      %p197 = scmp.eq.s32.totalorder %s31, 0
      %p198 = por %p196, %p197
      %p199 = scmp.ne.s32.totalorder %s191, %s193
      %p200 = scmp.eq.s32.totalorder %s36, 1
      %p201 = por %p199, %p200
      %p202 = scmp.ne.s32.totalorder %s193, %s194
      %p203 = scmp.eq.s32.totalorder %s36, 0
      %p204 = por %p202, %p203
      %p205 = scmp.ne.s32.totalorder %s193, %s194
      %p206 = scmp.eq.s32.totalorder %s37, 1
      %p207 = por %p205, %p206
      %p209 = scmp.ne.s32.totalorder %s194, %s208
      %p210 = scmp.eq.s32.totalorder %s37, 0
      %p211 = por %p209, %p210
      %s213 = sadd.s32 %s212, 1
      %p216 = scmp.eq.s32.totalorder %s31, 1
      %p217 = scmp.ne.s32.totalorder %s212, %s214
      %p218 = scmp.eq.s32.totalorder %s31, 0
      %p219 = por %p217, %p218
      %p220 = scmp.ne.s32.totalorder %s212, %s214
      %p221 = scmp.eq.s32.totalorder %s36, 1
      %p222 = por %p220, %p221
      %p223 = scmp.ne.s32.totalorder %s214, %s215
      %p224 = scmp.eq.s32.totalorder %s36, 0
      %p225 = por %p223, %p224
      %p226 = scmp.ne.s32.totalorder %s214, %s215
      %p227 = scmp.eq.s32.totalorder %s37, 1
      %p228 = por %p226, %p227
      %p230 = scmp.ne.s32.totalorder %s215, %s229
      %p231 = scmp.eq.s32.totalorder %s37, 0
      %p232 = por %p230, %p231
      %s234 = sadd.s32 %s233, 1
      %p237 = scmp.eq.s32.totalorder %s31, 1
      %p238 = scmp.ne.s32.totalorder %s233, %s235
      %p239 = scmp.eq.s32.totalorder %s31, 0
      %p240 = por %p238, %p239
      %p241 = scmp.ne.s32.totalorder %s233, %s235
      %p242 = scmp.eq.s32.totalorder %s36, 1
      %p243 = por %p241, %p242
      %p244 = scmp.ne.s32.totalorder %s235, %s236
      %p245 = scmp.eq.s32.totalorder %s36, 0
      %p246 = por %p244, %p245
      %p247 = scmp.ne.s32.totalorder %s235, %s236
      %p248 = scmp.eq.s32.totalorder %s37, 1
      %p249 = por %p247, %p248
      %p251 = scmp.ne.s32.totalorder %s236, %s250
      %p252 = scmp.eq.s32.totalorder %s37, 0
      %p253 = por %p251, %p252
      %s255 = sadd.s32 %s254, 1
      %p258 = scmp.eq.s32.totalorder %s31, 1
      %p259 = scmp.ne.s32.totalorder %s254, %s256
      %p260 = scmp.eq.s32.totalorder %s31, 0
      %p261 = por %p259, %p260
      %p262 = scmp.ne.s32.totalorder %s254, %s256
      %p263 = scmp.eq.s32.totalorder %s36, 1
      %p264 = por %p262, %p263
      %p265 = scmp.ne.s32.totalorder %s256, %s257
      %p266 = scmp.eq.s32.totalorder %s36, 0
      %p267 = por %p265, %p266
      %p268 = scmp.ne.s32.totalorder %s256, %s257
      %p269 = scmp.eq.s32.totalorder %s37, 1
      %p270 = por %p268, %p269
      %p272 = scmp.ne.s32.totalorder %s257, %s271
      %p273 = scmp.eq.s32.totalorder %s37, 0
      %p274 = por %p272, %p273
      %s276 = sadd.s32 %s275, 1
      %p279 = scmp.eq.s32.totalorder %s31, 1
      %p280 = scmp.ne.s32.totalorder %s275, %s277
      %p281 = scmp.eq.s32.totalorder %s31, 0
      %p282 = por %p280, %p281
      %p283 = scmp.ne.s32.totalorder %s275, %s277
      %p284 = scmp.eq.s32.totalorder %s36, 1
      %p285 = por %p283, %p284
      %p286 = scmp.ne.s32.totalorder %s277, %s278
      %p287 = scmp.eq.s32.totalorder %s36, 0
      %p288 = por %p286, %p287
      %p289 = scmp.ne.s32.totalorder %s277, %s278
      %p290 = scmp.eq.s32.totalorder %s37, 1
      %p291 = por %p289, %p290
      %p293 = scmp.ne.s32.totalorder %s278, %s292
      %p294 = scmp.eq.s32.totalorder %s37, 0
      %p295 = por %p293, %p294
      %s297 = sadd.s32 %s296, 1
      %p300 = scmp.eq.s32.totalorder %s31, 1
      %p301 = scmp.ne.s32.totalorder %s296, %s298
      %p302 = scmp.eq.s32.totalorder %s31, 0
      %p303 = por %p301, %p302
      %p304 = scmp.ne.s32.totalorder %s296, %s298
      %p305 = scmp.eq.s32.totalorder %s36, 1
      %p306 = por %p304, %p305
      %p307 = scmp.ne.s32.totalorder %s298, %s299
      %p308 = scmp.eq.s32.totalorder %s36, 0
      %p309 = por %p307, %p308
      %p310 = scmp.ne.s32.totalorder %s298, %s299
      %p311 = scmp.eq.s32.totalorder %s37, 1
      %p312 = por %p310, %p311
      %p314 = scmp.ne.s32.totalorder %s299, %s313
      %p315 = scmp.eq.s32.totalorder %s37, 0
      %p316 = por %p314, %p315
      %s318 = sadd.s32 %s317, 1
      %p321 = scmp.eq.s32.totalorder %s31, 1
      %p322 = scmp.ne.s32.totalorder %s317, %s319
      %p323 = scmp.eq.s32.totalorder %s31, 0
      %p324 = por %p322, %p323
      %p325 = scmp.ne.s32.totalorder %s317, %s319
      %p326 = scmp.eq.s32.totalorder %s36, 1
      %p327 = por %p325, %p326
      %p328 = scmp.ne.s32.totalorder %s319, %s320
      %p329 = scmp.eq.s32.totalorder %s36, 0
      %p330 = por %p328, %p329
      %p331 = scmp.ne.s32.totalorder %s319, %s320
      %p332 = scmp.eq.s32.totalorder %s37, 1
      %p333 = por %p331, %p332
      %p335 = scmp.ne.s32.totalorder %s320, %s334
      %p336 = scmp.eq.s32.totalorder %s37, 0
      %p337 = por %p335, %p336
      %s339 = sadd.s32 %s338, 1
      %p342 = scmp.eq.s32.totalorder %s31, 1
      %p343 = scmp.ne.s32.totalorder %s338, %s340
      %p344 = scmp.eq.s32.totalorder %s31, 0
      %p345 = por %p343, %p344
      %p346 = scmp.ne.s32.totalorder %s338, %s340
      %p347 = scmp.eq.s32.totalorder %s36, 1
      %p348 = por %p346, %p347
      %p349 = scmp.ne.s32.totalorder %s340, %s341
      %p350 = scmp.eq.s32.totalorder %s36, 0
      %p351 = por %p349, %p350
      %p352 = scmp.ne.s32.totalorder %s340, %s341
      %p353 = scmp.eq.s32.totalorder %s37, 1
      %p354 = por %p352, %p353
      %p356 = scmp.ne.s32.totalorder %s341, %s355
      %p357 = scmp.eq.s32.totalorder %s37, 0
      %p358 = por %p356, %p357
      %s359 = ssub.s32 %s31, %s38
      %p360 = scmp.eq.s32.totalorder %s359, 0
      %s362 = sadd.s32 %s361, 1
      %s363 = scalar_select %p360, %s361, %s362
      %p366 = pneg %p360
      %p367 = scmp.eq.s32.totalorder %s31, 1
      %p368 = por %p366, %p367
      %p369 = scmp.ne.s32.totalorder %s361, %s364
      %p370 = scmp.eq.s32.totalorder %s31, 0
      %p371 = por %p369, %p370
      %p372 = scmp.ne.s32.totalorder %s361, %s364
      %p373 = scmp.eq.s32.totalorder %s36, 1
      %p374 = por %p372, %p373
      %p375 = scmp.ne.s32.totalorder %s364, %s365
      %p376 = scmp.eq.s32.totalorder %s36, 0
      %p377 = por %p375, %p376
      %p378 = scmp.ne.s32.totalorder %s364, %s365
      %p379 = scmp.eq.s32.totalorder %s37, 1
      %p380 = por %p378, %p379
      %p382 = scmp.ne.s32.totalorder %s365, %s381
      %p383 = scmp.eq.s32.totalorder %s37, 0
      %p384 = por %p382, %p383
      %p385 = scmp.le.s32.totalorder 1, %s31
      %p386 = scmp.lt.s32.totalorder %s31, 3
      %p387 = pnand %p385, %p386
      %p388 = pneg %p387
      // Predicated region
      $region9: #{tpu_custom_call.1} parent=5 // pred_check
        _
      $region10: #{tpu_custom_call.1} parent=5 // pred_check_branch
        %390 = sbr.rel (%p387) target = $region12
      $region11: #{tpu_custom_call.1} parent=5 // pred_region
        %s391 = ssub.s32 %s31, 1
        // Predicated region
        $region13: #{tpu_custom_call.1} parent=11 // pred_check
          %p392 = pneg %p78
        $region14: #{tpu_custom_call.1} parent=11 // pred_check_branch
          %394 = sbr.rel (%p392) target = $region16
        $region15: #{tpu_custom_call.1} parent=11 // pred_region
          %s396 = ssub.s32 128, 128
          %397 = vsyncadd [#allocation7], %s396
          %s399 = sshll.u32 [#allocation6], 4
          %s400 = int_to_ptr.vmem [resolvable:$true] %s399
          %402 = dma.hbm_to_vmem [thread:$0]  %s1, 128, %s400, [#allocation7]
        $region16: #{tpu_custom_call.1} parent=11 // pred_fallthru
          _
        // Predicated region
        $region17: #{tpu_custom_call.1} parent=11 // pred_check
          %p403 = pneg %p99
        $region18: #{tpu_custom_call.1} parent=11 // pred_check_branch
          %405 = sbr.rel (%p403) target = $region20
        $region19: #{tpu_custom_call.1} parent=11 // pred_region
          _
        $region20: #{tpu_custom_call.1} parent=11 // pred_fallthru
          _
        // Predicated region
        $region21: #{tpu_custom_call.1} parent=11 // pred_check
          %p406 = pneg %p120
        $region22: #{tpu_custom_call.1} parent=11 // pred_check_branch
          %408 = sbr.rel (%p406) target = $region24
        $region23: #{tpu_custom_call.1} parent=11 // pred_region
          %s410 = ssub.s32 3072, 3072
          %411 = vsyncadd [#allocation7], %s410
          %s412 = sshll.u32 [#allocation8], 4
          %s413 = int_to_ptr.vmem [resolvable:$true] %s412
          %418 = dma.hbm_to_vmem [thread:$0]  %s3, 3072, %s413, [#allocation7], 192, 192, 12
        $region24: #{tpu_custom_call.1} parent=11 // pred_fallthru
          _
        // Predicated region
        $region25: #{tpu_custom_call.1} parent=11 // pred_check
          %p419 = pneg %p141
        $region26: #{tpu_custom_call.1} parent=11 // pred_check_branch
          %421 = sbr.rel (%p419) target = $region28
        $region27: #{tpu_custom_call.1} parent=11 // pred_region
          _
        $region28: #{tpu_custom_call.1} parent=11 // pred_fallthru
          _
        // Predicated region
        $region29: #{tpu_custom_call.1} parent=11 // pred_check
          %p422 = pneg %p162
        $region30: #{tpu_custom_call.1} parent=11 // pred_check_branch
          %424 = sbr.rel (%p422) target = $region32
        $region31: #{tpu_custom_call.1} parent=11 // pred_region
          %s426 = ssub.s32 1024, 1024
          %427 = vsyncadd [#allocation10], %s426
          %s428 = sshll.u32 [#allocation9], 4
          %s429 = int_to_ptr.vmem [resolvable:$true] %s428
          %434 = dma.hbm_to_vmem [thread:$0]  %s5, 1024, %s429, [#allocation10], 64, 64, 4
        $region32: #{tpu_custom_call.1} parent=11 // pred_fallthru
          _
        // Predicated region
        $region33: #{tpu_custom_call.1} parent=11 // pred_check
          %p435 = pneg %p183
        $region34: #{tpu_custom_call.1} parent=11 // pred_check_branch
          %437 = sbr.rel (%p435) target = $region36
        $region35: #{tpu_custom_call.1} parent=11 // pred_region
          _
        $region36: #{tpu_custom_call.1} parent=11 // pred_fallthru
          _
        // Predicated region
        $region37: #{tpu_custom_call.1} parent=11 // pred_check
          %p438 = pneg %p204
        $region38: #{tpu_custom_call.1} parent=11 // pred_check_branch
          %440 = sbr.rel (%p438) target = $region40
        $region39: #{tpu_custom_call.1} parent=11 // pred_region
          %s442 = ssub.s32 2048, 2048
          %443 = vsyncadd [#allocation10], %s442
          %s444 = sshll.u32 [#allocation11], 4
          %s445 = int_to_ptr.vmem [resolvable:$true] %s444
          %450 = dma.hbm_to_vmem [thread:$0]  %s7, 2048, %s445, [#allocation10], 128, 128, 8
        $region40: #{tpu_custom_call.1} parent=11 // pred_fallthru
          _
        // Predicated region
        $region41: #{tpu_custom_call.1} parent=11 // pred_check
          %p451 = pneg %p225
        $region42: #{tpu_custom_call.1} parent=11 // pred_check_branch
          %453 = sbr.rel (%p451) target = $region44
        $region43: #{tpu_custom_call.1} parent=11 // pred_region
          _
        $region44: #{tpu_custom_call.1} parent=11 // pred_fallthru
          _
        // Predicated region
        $region45: #{tpu_custom_call.1} parent=11 // pred_check
          %p454 = pneg %p246
        $region46: #{tpu_custom_call.1} parent=11 // pred_check_branch
          %456 = sbr.rel (%p454) target = $region48
        $region47: #{tpu_custom_call.1} parent=11 // pred_region
          %s458 = ssub.s32 2048, 2048
          %459 = vsyncadd [#allocation13], %s458
          %s460 = sshll.u32 [#allocation12], 4
          %s461 = int_to_ptr.vmem [resolvable:$true] %s460
          %466 = dma.hbm_to_vmem [thread:$0]  %s9, 2048, %s461, [#allocation13], 64, 64, 4
        $region48: #{tpu_custom_call.1} parent=11 // pred_fallthru
          _
        // Predicated region
        $region49: #{tpu_custom_call.1} parent=11 // pred_check
          %p467 = pneg %p267
        $region50: #{tpu_custom_call.1} parent=11 // pred_check_branch
          %469 = sbr.rel (%p467) target = $region52
        $region51: #{tpu_custom_call.1} parent=11 // pred_region
          _
        $region52: #{tpu_custom_call.1} parent=11 // pred_fallthru
          _
        // Predicated region
        $region53: #{tpu_custom_call.1} parent=11 // pred_check
          %p470 = pneg %p288
        $region54: #{tpu_custom_call.1} parent=11 // pred_check_branch
          %472 = sbr.rel (%p470) target = $region56
        $region55: #{tpu_custom_call.1} parent=11 // pred_region
          _
        $region56: #{tpu_custom_call.1} parent=11 // pred_fallthru
          _
        // Predicated region
        $region57: #{tpu_custom_call.1} parent=11 // pred_check
          %p473 = pneg %p309
        $region58: #{tpu_custom_call.1} parent=11 // pred_check_branch
          %475 = sbr.rel (%p473) target = $region60
        $region59: #{tpu_custom_call.1} parent=11 // pred_region
          _
        $region60: #{tpu_custom_call.1} parent=11 // pred_fallthru
          _
        // Predicated region
        $region61: #{tpu_custom_call.1} parent=11 // pred_check
          %p476 = pneg %p330
        $region62: #{tpu_custom_call.1} parent=11 // pred_check_branch
          %478 = sbr.rel (%p476) target = $region64
        $region63: #{tpu_custom_call.1} parent=11 // pred_region
          _
        $region64: #{tpu_custom_call.1} parent=11 // pred_fallthru
          _
        // Predicated region
        $region65: #{tpu_custom_call.1} parent=11 // pred_check
          %p479 = pneg %p351
        $region66: #{tpu_custom_call.1} parent=11 // pred_check_branch
          %481 = sbr.rel (%p479) target = $region68
        $region67: #{tpu_custom_call.1} parent=11 // pred_region
          _
        $region68: #{tpu_custom_call.1} parent=11 // pred_fallthru
          _
      $region12: #{tpu_custom_call.1} parent=5 // pred_fallthru
        _
      %p482 = scmp.lt.s32.totalorder %s31, 2
      // Predicated region
      $region69: #{tpu_custom_call.1} parent=5 // pred_check
        %p483 = pneg %p482
      $region70: #{tpu_custom_call.1} parent=5 // pred_check_branch
        %485 = sbr.rel (%p483) target = $region72
      $region71: #{tpu_custom_call.1} parent=5 // pred_region
        // Predicated region
        $region73: #{tpu_custom_call.1} parent=71 // pred_check
          %p486 = pneg %p51
        $region74: #{tpu_custom_call.1} parent=71 // pred_check_branch
          %488 = sbr.rel (%p486) target = $region76
        $region75: #{tpu_custom_call.1} parent=71 // pred_region
          %s489 = sand.u32 %s41, 1
          %s490 = scalar_lea.sflag [#allocation4], %s489
          %s491 = sand.u32 %s41, 1
          %s492 = smul.addr %s491, 8
          %s493 = scalar_lea.vmem [#allocation3], %s492
          %s495 = ssub.s32 128, 128
          %496 = vsyncadd %s490, %s495
          %s497 = smul.addr %s31, 128
          %s498 = scalar_lea.hbm %s0, %s497
          %s500 = sshll.u32 %s493, 4
          %s501 = int_to_ptr.vmem [resolvable:$true] %s500
          %503 = dma.hbm_to_vmem [thread:$0]  %s498, 128, %s501, %s490
        $region76: #{tpu_custom_call.1} parent=71 // pred_fallthru
          _
      $region72: #{tpu_custom_call.1} parent=5 // pred_fallthru
        _
      %p504 = scmp.le.s32.totalorder 1, %s31
      %p505 = scmp.lt.s32.totalorder %s31, 3
      %p506 = pnand %p504, %p505
      %p507 = pneg %p506
      // Predicated region
      $region77: #{tpu_custom_call.1} parent=5 // pred_check
        _
      $region78: #{tpu_custom_call.1} parent=5 // pred_check_branch
        %509 = sbr.rel (%p506) target = $region80
      $region79: #{tpu_custom_call.1} parent=5 // pred_region
        %s510 = ssub.s32 %s31, 1
        %s511 = sand.u32 %s44, 1
        %s512 = scalar_lea.sflag [#allocation4], %s511
        %s513 = sand.u32 %s44, 1
        %s514 = smul.addr %s513, 8
        %s515 = scalar_lea.vmem [#allocation3], %s514
        // Predicated region
        $region81: #{tpu_custom_call.1} parent=79 // pred_check
          %p516 = pneg %p57
        $region82: #{tpu_custom_call.1} parent=79 // pred_check_branch
          %518 = sbr.rel (%p516) target = $region84
        $region83: #{tpu_custom_call.1} parent=79 // pred_region
          %519 = dma.done %s512, 128
        $region84: #{tpu_custom_call.1} parent=79 // pred_fallthru
          _
        // Predicated region
        $region85: #{tpu_custom_call.1} parent=79 // pred_check
          %p520 = pneg %p78
        $region86: #{tpu_custom_call.1} parent=79 // pred_check_branch
          %522 = sbr.rel (%p520) target = $region88
        $region87: #{tpu_custom_call.1} parent=79 // pred_region
          %523 = dma.done [#allocation7], 128
        $region88: #{tpu_custom_call.1} parent=79 // pred_fallthru
          _
        // Predicated region
        $region89: #{tpu_custom_call.1} parent=79 // pred_check
          %p524 = pneg %p120
        $region90: #{tpu_custom_call.1} parent=79 // pred_check_branch
          %526 = sbr.rel (%p524) target = $region92
        $region91: #{tpu_custom_call.1} parent=79 // pred_region
          %527 = dma.done [#allocation7], 3072
        $region92: #{tpu_custom_call.1} parent=79 // pred_fallthru
          _
        // Predicated region
        $region93: #{tpu_custom_call.1} parent=79 // pred_check
          %p528 = pneg %p162
        $region94: #{tpu_custom_call.1} parent=79 // pred_check_branch
          %530 = sbr.rel (%p528) target = $region96
        $region95: #{tpu_custom_call.1} parent=79 // pred_region
          %531 = dma.done [#allocation10], 1024
        $region96: #{tpu_custom_call.1} parent=79 // pred_fallthru
          _
        // Predicated region
        $region97: #{tpu_custom_call.1} parent=79 // pred_check
          %p532 = pneg %p204
        $region98: #{tpu_custom_call.1} parent=79 // pred_check_branch
          %534 = sbr.rel (%p532) target = $region100
        $region99: #{tpu_custom_call.1} parent=79 // pred_region
          %535 = dma.done [#allocation10], 2048
        $region100: #{tpu_custom_call.1} parent=79 // pred_fallthru
          _
        // Predicated region
        $region101: #{tpu_custom_call.1} parent=79 // pred_check
          %p536 = pneg %p246
        $region102: #{tpu_custom_call.1} parent=79 // pred_check_branch
          %538 = sbr.rel (%p536) target = $region104
        $region103: #{tpu_custom_call.1} parent=79 // pred_region
          %539 = dma.done [#allocation13], 2048
        $region104: #{tpu_custom_call.1} parent=79 // pred_fallthru
          _
        %s540 = sand.u32 %s44, 1
        %s541 = scalar_lea.sflag [#allocation4], %s540
        %s542 = sand.u32 %s44, 1
        %s543 = smul.addr %s542, 8
        %s544 = scalar_lea.vmem [#allocation3], %s543
        %p545 = pneg %p57
        %p546 = pneg %p54
        %p547 = pneg %p78
        %p548 = pneg %p75
        %p549 = pneg %p99
        %p550 = pneg %p96
        %p551 = pneg %p120
        %p552 = pneg %p117
        %p553 = pneg %p141
        %p554 = pneg %p138
        %p555 = pneg %p162
        %p556 = pneg %p159
        %p557 = pneg %p183
        %p558 = pneg %p180
        %p559 = pneg %p204
        %p560 = pneg %p201
        %p561 = pneg %p225
        %p562 = pneg %p222
        %p563 = pneg %p246
        %p564 = pneg %p243
        %p565 = pneg %p267
        %p566 = pneg %p264
        %p567 = pneg %p288
        %p568 = pneg %p285
        %p569 = pneg %p309
        %p570 = pneg %p306
        %p571 = pneg %p330
        %p572 = pneg %p327
        %p573 = pneg %p351
        %p574 = pneg %p348
        %p575 = pneg %p377
        %p576 = pneg %p374
        %s577 = sand.u32 %s364, 1
        %s578 = scalar_lea.sflag [#allocation5], %s577
        %s579 = sand.u32 %s364, 1
        %s580 = smul.addr %s579, 8
        %s581 = scalar_lea.vmem [#allocation14], %s580
        %v583 = vld [vmem:[%s515] sm:$0xff]
        %s584 = sld [smem:[#allocation2]]
        %v585 = vld [vmem:[#allocation6] sm:$0xff]
        %v586 = vstv %s584
        %v587 = vmul.f32 %v586, %v585
        %v588 = vadd.f32 %v583, %v587
        %v589 = vpack.c.bf16 %v588, %v588
        %v590 = vld [vmem:[#allocation8] sm:$0xff]
        %v591 = vld [vmem:[#allocation8 + $0x8] sm:$0xf]
        %v592 = vld [vmem:[#allocation8 + $0xc] sm:$0xff]
        %v593 = vld [vmem:[#allocation8 + $0x14] sm:$0xf]
        %v594 = vld [vmem:[#allocation8 + $0x18] sm:$0xff]
        %v595 = vld [vmem:[#allocation8 + $0x20] sm:$0xf]
        %v596 = vld [vmem:[#allocation8 + $0x24] sm:$0xff]
        %v597 = vld [vmem:[#allocation8 + $0x2c] sm:$0xf]
        %v598 = vld [vmem:[#allocation8 + $0x30] sm:$0xff]
        %v599 = vld [vmem:[#allocation8 + $0x38] sm:$0xf]
        %v600 = vld [vmem:[#allocation8 + $0x3c] sm:$0xff]
        %v601 = vld [vmem:[#allocation8 + $0x44] sm:$0xf]
        %v602 = vld [vmem:[#allocation8 + $0x48] sm:$0xff]
        %v603 = vld [vmem:[#allocation8 + $0x50] sm:$0xf]
        %v604 = vld [vmem:[#allocation8 + $0x54] sm:$0xff]
        %v605 = vld [vmem:[#allocation8 + $0x5c] sm:$0xf]
        %v606 = vld [vmem:[#allocation8 + $0x60] sm:$0xff]
        %v607 = vld [vmem:[#allocation8 + $0x68] sm:$0xf]
        %v608 = vld [vmem:[#allocation8 + $0x6c] sm:$0xff]
        %v609 = vld [vmem:[#allocation8 + $0x74] sm:$0xf]
        %v610 = vld [vmem:[#allocation8 + $0x78] sm:$0xff]
        %v611 = vld [vmem:[#allocation8 + $0x80] sm:$0xf]
        %v612 = vld [vmem:[#allocation8 + $0x84] sm:$0xff]
        %v613 = vld [vmem:[#allocation8 + $0x8c] sm:$0xf]
        %v614 = vld [vmem:[#allocation8 + $0x90] sm:$0xff]
        %v615 = vld [vmem:[#allocation8 + $0x98] sm:$0xf]
        %v616 = vld [vmem:[#allocation8 + $0x9c] sm:$0xff]
        %v617 = vld [vmem:[#allocation8 + $0xa4] sm:$0xf]
        %v618 = vld [vmem:[#allocation8 + $0xa8] sm:$0xff]
        %v619 = vld [vmem:[#allocation8 + $0xb0] sm:$0xf]
        %v620 = vld [vmem:[#allocation8 + $0xb4] sm:$0xff]
        %v621 = vld [vmem:[#allocation8 + $0xbc] sm:$0xf]
        %v622 = vld [vmem:[%s4] sm:$0x7]
        %v624 = vlaneseq
        %v625 = vshrl.u32 %v624, 7
        %v626 = vsub.s32 0, %v625
        %v627 = vrot.slane %v622, %v626
        %v628 = vlaneseq
        %v629 = vshrl.u32 %v628, 7
        %v630 = vsub.s32 1, %v629
        %v631 = vrot.slane %v622, %v630
        %v632 = vlaneseq
        %v633 = vshrl.u32 %v632, 7
        %v634 = vsub.s32 2, %v633
        %v635 = vrot.slane %v622, %v634
        %v671 = vunpack.c.l.b16 %v590
        %v672 = vunpack.c.h.b16 %v590
        %v673 = vunpack.c.l.b16 %v591
        %v674 = vunpack.c.l.b16 %v592
        %v675 = vunpack.c.h.b16 %v592
        %v676 = vunpack.c.l.b16 %v593
        %v677 = vunpack.c.l.b16 %v594
        %v678 = vunpack.c.h.b16 %v594
        %v679 = vunpack.c.l.b16 %v595
        %v680 = vunpack.c.l.b16 %v596
        %v681 = vunpack.c.h.b16 %v596
        %v682 = vunpack.c.l.b16 %v597
        %v683 = vunpack.c.l.b16 %v598
        %v684 = vunpack.c.h.b16 %v598
        %v685 = vunpack.c.l.b16 %v599
        %v686 = vunpack.c.l.b16 %v600
        %v687 = vunpack.c.h.b16 %v600
        %v688 = vunpack.c.l.b16 %v601
        %v689 = vunpack.c.l.b16 %v602
        %v690 = vunpack.c.h.b16 %v602
        %v691 = vunpack.c.l.b16 %v603
        %v692 = vunpack.c.l.b16 %v604
        %v693 = vunpack.c.h.b16 %v604
        %v694 = vunpack.c.l.b16 %v605
        %v695 = vunpack.c.l.b16 %v606
        %v696 = vunpack.c.h.b16 %v606
        %v697 = vunpack.c.l.b16 %v607
        %v698 = vunpack.c.l.b16 %v608
        %v699 = vunpack.c.h.b16 %v608
        %v700 = vunpack.c.l.b16 %v609
        %v701 = vunpack.c.l.b16 %v610
        %v702 = vunpack.c.h.b16 %v610
        %v703 = vunpack.c.l.b16 %v611
        %v704 = vunpack.c.l.b16 %v612
        %v705 = vunpack.c.h.b16 %v612
        %v706 = vunpack.c.l.b16 %v613
        %v707 = vunpack.c.l.b16 %v614
        %v708 = vunpack.c.h.b16 %v614
        %v709 = vunpack.c.l.b16 %v615
        %v710 = vunpack.c.l.b16 %v616
        %v711 = vunpack.c.h.b16 %v616
        %v712 = vunpack.c.l.b16 %v617
        %v713 = vunpack.c.l.b16 %v618
        %v714 = vunpack.c.h.b16 %v618
        %v715 = vunpack.c.l.b16 %v619
        %v716 = vunpack.c.l.b16 %v620
        %v717 = vunpack.c.h.b16 %v620
        %v718 = vunpack.c.l.b16 %v621
        %v719 = vpack.c.b16 %v674, %v671
        %v720 = vpack.c.b16 %v675, %v672
        %v721 = vpack.c.b16 %v676, %v673
        %v722 = vpack.c.b16 %v680, %v677
        %v723 = vpack.c.b16 %v681, %v678
        %v724 = vpack.c.b16 %v682, %v679
        %v725 = vpack.c.b16 %v686, %v683
        %v726 = vpack.c.b16 %v687, %v684
        %v727 = vpack.c.b16 %v688, %v685
        %v728 = vpack.c.b16 %v692, %v689
        %v729 = vpack.c.b16 %v693, %v690
        %v730 = vpack.c.b16 %v694, %v691
        %v731 = vpack.c.b16 %v698, %v695
        %v732 = vpack.c.b16 %v699, %v696
        %v733 = vpack.c.b16 %v700, %v697
        %v734 = vpack.c.b16 %v704, %v701
        %v735 = vpack.c.b16 %v705, %v702
        %v736 = vpack.c.b16 %v706, %v703
        %v737 = vpack.c.b16 %v710, %v707
        %v738 = vpack.c.b16 %v711, %v708
        %v739 = vpack.c.b16 %v712, %v709
        %v740 = vpack.c.b16 %v716, %v713
        %v741 = vpack.c.b16 %v717, %v714
        %v742 = vpack.c.b16 %v718, %v715
        %767 = vmatprep.subr.bf16.mxu0 %v720
        %768 = vmatpush1.bf16.msra.mxu0 %v719
        %769 = vmatprep.subr.bf16.mxu0 %v723
        %770 = vmatpush1.bf16.msra.mxu0 %v722
        %771 = vmatprep.subr.bf16.mxu0 %v726
        %772 = vmatpush1.bf16.msra.mxu0 %v725
        %773 = vmatprep.subr.bf16.mxu0 %v729
        %774 = vmatpush1.bf16.msra.mxu0 %v728
        %775 = vmatprep.subr.bf16.mxu0 %v732
        %776 = vmatpush1.bf16.msra.mxu0 %v731
        %777 = vmatprep.subr.bf16.mxu0 %v735
        %778 = vmatpush1.bf16.msra.mxu0 %v734
        %779 = vmatprep.subr.bf16.mxu0 %v738
        %780 = vmatpush1.bf16.msra.mxu0 %v737
        %781 = vmatprep.subr.bf16.mxu0 %v741
        %782 = vmatpush1.bf16.msra.mxu0 %v740
        %783 = vmatprep.subr.bf16.mxu0 0
        %784 = vmatpush1.bf16.msra.mxu0 0
        %785 = vmatprep.subr.bf16.mxu0 0
        %786 = vmatpush1.bf16.msra.mxu0 0
        %787 = vmatprep.subr.bf16.mxu0 0
        %788 = vmatpush1.bf16.msra.mxu0 0
        %789 = vmatprep.subr.bf16.mxu0 0
        %790 = vmatpush1.bf16.msra.mxu0 0
        %791 = vmatprep.subr.bf16.mxu0 0
        %792 = vmatpush1.bf16.msra.mxu0 0
        %793 = vmatprep.subr.bf16.mxu0 0
        %794 = vmatpush1.bf16.msra.mxu0 0
        %795 = vmatprep.subr.bf16.mxu0 0
        %796 = vmatpush1.bf16.msra.mxu0 0
        %797 = vmatprep.subr.bf16.mxu0 0
        %798 = vmatpush1.bf16.msra.mxu0 0
        %799 = vmatprep.mubr.bf16.mxu0 0
        %800 = vmatmul.mubr.bf16.gmra.mrb[0].mxu0 %v589
        %v801 = vpop.f32.mrb[0].mxu0
        %v802 = vadd.f32 %v627, %v801
        %v803 = vpop.f32.mrb[0].mxu0
        %v804 = vadd.f32 %v631, %v803
        %v805 = vpop.f32.mrb[0].mxu0
        %v806 = vpop.f32.mrb[0].mxu0
        %807 = vdwg.mxu0
        %808 = vmatprep.subr.bf16.mxu0 0
        %809 = vmatpush1.bf16.msra.mxu0 %v721
        %810 = vmatprep.subr.bf16.mxu0 0
        %811 = vmatpush1.bf16.msra.mxu0 %v724
        %812 = vmatprep.subr.bf16.mxu0 0
        %813 = vmatpush1.bf16.msra.mxu0 %v727
        %814 = vmatprep.subr.bf16.mxu0 0
        %815 = vmatpush1.bf16.msra.mxu0 %v730
        %816 = vmatprep.subr.bf16.mxu0 0
        %817 = vmatpush1.bf16.msra.mxu0 %v733
        %818 = vmatprep.subr.bf16.mxu0 0
        %819 = vmatpush1.bf16.msra.mxu0 %v736
        %820 = vmatprep.subr.bf16.mxu0 0
        %821 = vmatpush1.bf16.msra.mxu0 %v739
        %822 = vmatprep.subr.bf16.mxu0 0
        %823 = vmatpush1.bf16.msra.mxu0 %v742
        %824 = vmatprep.subr.bf16.mxu0 0
        %825 = vmatpush1.bf16.msra.mxu0 0
        %826 = vmatprep.subr.bf16.mxu0 0
        %827 = vmatpush1.bf16.msra.mxu0 0
        %828 = vmatprep.subr.bf16.mxu0 0
        %829 = vmatpush1.bf16.msra.mxu0 0
        %830 = vmatprep.subr.bf16.mxu0 0
        %831 = vmatpush1.bf16.msra.mxu0 0
        %832 = vmatprep.subr.bf16.mxu0 0
        %833 = vmatpush1.bf16.msra.mxu0 0
        %834 = vmatprep.subr.bf16.mxu0 0
        %835 = vmatpush1.bf16.msra.mxu0 0
        %836 = vmatprep.subr.bf16.mxu0 0
        %837 = vmatpush1.bf16.msra.mxu0 0
        %838 = vmatprep.subr.bf16.mxu0 0
        %839 = vmatpush1.bf16.msra.mxu0 0
        %840 = vmatprep.mubr.bf16.mxu0 0
        %841 = vmatmul.mubr.bf16.gmra.mrb[0].mxu0 %v589
        %v842 = vpop.f32.mrb[0].mxu0
        %v843 = vadd.f32 %v635, %v842
        %v844 = vpop.f32.mrb[0].mxu0
        %v845 = vpop.f32.mrb[0].mxu0
        %v846 = vpop.f32.mrb[0].mxu0
        %847 = vdwg.mxu0
        %v848 = vmul.f32 %v802, 0.17677669
        %v849 = vpack.c.bf16 %v848, %v848
        %851 = vrot.lane.b32.xlu0 %v849, 96
        %v852 = vpop.permute.xlu0 %851
        %853 = vrot.lane.b32.xlu0 %v849, 64
        %v854 = vpop.permute.xlu0 %853
        %855 = vrot.lane.b32.xlu0 %v849, 32
        %v856 = vpop.permute.xlu0 %855
        %v858 = vunpack.c.l.s4 1983009808
        %v859 = vunpack.c.0.s8 %v858
        %v860 = vlaneseq
        %v861 = vshrl.u32 %v860, 7
        %v862 = vsub.s32 %v859, %v861
        %v863 = vrot.slane %v849, %v862
        %v866 = vunpack.c.l.s4 1983009808
        %v867 = vunpack.c.0.s8 %v866
        %v868 = vlaneseq
        %v869 = vshrl.u32 %v868, 7
        %v870 = vsub.s32 %v867, %v869
        %v871 = vrot.slane %v854, %v870
        %v872 = vcombine.low %v863, %v871
        %v873 = vcombine.high %v863, %v871
        %v875 = vunpack.c.l.s4 1934713408
        %v876 = vunpack.c.0.s8 %v875
        %v877 = vlaneseq
        %v878 = vshrl.u32 %v877, 7
        %v879 = vsub.s32 %v876, %v878
        %v880 = vrot.slane %v872, %v879
        %v882 = vunpack.c.l.s4 1934713408
        %v883 = vunpack.c.0.s8 %v882
        %v884 = vlaneseq
        %v885 = vshrl.u32 %v884, 7
        %v886 = vsub.s32 %v883, %v885
        %v887 = vrot.slane %v873, %v886
        %v888 = vcombine.high %v880, 0
        %v889 = vcombine.high %v887, 0
        %v892 = vunpack.c.l.s4 1983009808
        %v893 = vunpack.c.0.s8 %v892
        %v894 = vlaneseq
        %v895 = vshrl.u32 %v894, 7
        %v896 = vsub.s32 %v893, %v895
        %v897 = vrot.slane %v852, %v896
        %v900 = vunpack.c.l.s4 1983009808
        %v901 = vunpack.c.0.s8 %v900
        %v902 = vlaneseq
        %v903 = vshrl.u32 %v902, 7
        %v904 = vsub.s32 %v901, %v903
        %v905 = vrot.slane %v856, %v904
        %v906 = vcombine.low %v897, %v905
        %v907 = vcombine.high %v897, %v905
        %v909 = vunpack.c.l.s4 1934713408
        %v910 = vunpack.c.0.s8 %v909
        %v911 = vlaneseq
        %v912 = vshrl.u32 %v911, 7
        %v913 = vsub.s32 %v910, %v912
        %v914 = vrot.slane %v906, %v913
        %v916 = vunpack.c.l.s4 1934713408
        %v917 = vunpack.c.0.s8 %v916
        %v918 = vlaneseq
        %v919 = vshrl.u32 %v918, 7
        %v920 = vsub.s32 %v917, %v919
        %v921 = vrot.slane %v907, %v920
        %v922 = vcombine.high %v914, 0
        %v923 = vcombine.high %v921, 0
        %v926 = vpack.i.b16 %v914, %v880
        %v928 = vshrl.u32 %v880, 16
        %v929 = vshrl.u32 %v914, 16
        %v930 = vpack.i.b16 %v929, %v928
        %v934 = vpack.i.b16 %v922, %v888
        %v936 = vshrl.u32 %v888, 16
        %v937 = vshrl.u32 %v922, 16
        %v938 = vpack.i.b16 %v937, %v936
        %v942 = vpack.i.b16 %v921, %v887
        %v944 = vshrl.u32 %v887, 16
        %v945 = vshrl.u32 %v921, 16
        %v946 = vpack.i.b16 %v945, %v944
        %v950 = vpack.i.b16 %v923, %v889
        %v952 = vshrl.u32 %v889, 16
        %v953 = vshrl.u32 %v923, 16
        %v954 = vpack.i.b16 %v953, %v952
        %v956 = vcombine.low %v926, %v942
        %v958 = vunpack.c.l.s4 1983009808
        %v959 = vunpack.c.0.s8 %v958
        %v960 = vlaneseq
        %v961 = vshrl.u32 %v960, 7
        %v962 = vsub.s32 %v959, %v961
        %v963 = vrot.slane %v956, %v962
        %v964 = vcombine.low %v934, %v950
        %v966 = vunpack.c.l.s4 1983009808
        %v967 = vunpack.c.0.s8 %v966
        %v968 = vlaneseq
        %v969 = vshrl.u32 %v968, 7
        %v970 = vsub.s32 %v967, %v969
        %v971 = vrot.slane %v964, %v970
        %v972 = vcombine.low %v963, %v971
        %v974 = vunpack.c.l.s4 1934713408
        %v975 = vunpack.c.0.s8 %v974
        %v976 = vlaneseq
        %v977 = vshrl.u32 %v976, 7
        %v978 = vsub.s32 %v975, %v977
        %v979 = vrot.slane %v972, %v978
        %v980 = vcombine.high %v979, 0
        %v981 = vcombine.low %v930, %v946
        %v983 = vunpack.c.l.s4 1983009808
        %v984 = vunpack.c.0.s8 %v983
        %v985 = vlaneseq
        %v986 = vshrl.u32 %v985, 7
        %v987 = vsub.s32 %v984, %v986
        %v988 = vrot.slane %v981, %v987
        %v989 = vcombine.low %v938, %v954
        %v991 = vunpack.c.l.s4 1983009808
        %v992 = vunpack.c.0.s8 %v991
        %v993 = vlaneseq
        %v994 = vshrl.u32 %v993, 7
        %v995 = vsub.s32 %v992, %v994
        %v996 = vrot.slane %v989, %v995
        %v997 = vcombine.low %v988, %v996
        %v999 = vunpack.c.l.s4 1934713408
        %v1000 = vunpack.c.0.s8 %v999
        %v1001 = vlaneseq
        %v1002 = vshrl.u32 %v1001, 7
        %v1003 = vsub.s32 %v1000, %v1002
        %v1004 = vrot.slane %v997, %v1003
        %v1005 = vcombine.high %v1004, 0
        %v1008 = vpack.i.b16 %v1004, %v979
        %v1009 = vshrl.u32 %v979, 16
        %v1010 = vshrl.u32 %v1004, 16
        %v1011 = vpack.i.b16 %v1010, %v1009
        %v1014 = vpack.i.b16 %v1005, %v980
        %v1015 = vshrl.u32 %v980, 16
        %v1016 = vshrl.u32 %v1005, 16
        %v1017 = vpack.i.b16 %v1016, %v1015
        %v1018 = vpack.c.bf16 %v804, %v804
        %1020 = vrot.lane.b32.xlu0 %v1018, 96
        %v1021 = vpop.permute.xlu0 %1020
        %1022 = vrot.lane.b32.xlu0 %v1018, 64
        %v1023 = vpop.permute.xlu0 %1022
        %1024 = vrot.lane.b32.xlu0 %v1018, 32
        %v1025 = vpop.permute.xlu0 %1024
        %v1027 = vunpack.c.l.s4 1983009808
        %v1028 = vunpack.c.0.s8 %v1027
        %v1029 = vlaneseq
        %v1030 = vshrl.u32 %v1029, 7
        %v1031 = vsub.s32 %v1028, %v1030
        %v1032 = vrot.slane %v1018, %v1031
        %v1035 = vunpack.c.l.s4 1983009808
        %v1036 = vunpack.c.0.s8 %v1035
        %v1037 = vlaneseq
        %v1038 = vshrl.u32 %v1037, 7
        %v1039 = vsub.s32 %v1036, %v1038
        %v1040 = vrot.slane %v1023, %v1039
        %v1041 = vcombine.low %v1032, %v1040
        %v1042 = vcombine.high %v1032, %v1040
        %v1044 = vunpack.c.l.s4 1934713408
        %v1045 = vunpack.c.0.s8 %v1044
        %v1046 = vlaneseq
        %v1047 = vshrl.u32 %v1046, 7
        %v1048 = vsub.s32 %v1045, %v1047
        %v1049 = vrot.slane %v1041, %v1048
        %v1051 = vunpack.c.l.s4 1934713408
        %v1052 = vunpack.c.0.s8 %v1051
        %v1053 = vlaneseq
        %v1054 = vshrl.u32 %v1053, 7
        %v1055 = vsub.s32 %v1052, %v1054
        %v1056 = vrot.slane %v1042, %v1055
        %v1057 = vcombine.high %v1049, 0
        %v1058 = vcombine.high %v1056, 0
        %v1061 = vunpack.c.l.s4 1983009808
        %v1062 = vunpack.c.0.s8 %v1061
        %v1063 = vlaneseq
        %v1064 = vshrl.u32 %v1063, 7
        %v1065 = vsub.s32 %v1062, %v1064
        %v1066 = vrot.slane %v1021, %v1065
        %v1069 = vunpack.c.l.s4 1983009808
        %v1070 = vunpack.c.0.s8 %v1069
        %v1071 = vlaneseq
        %v1072 = vshrl.u32 %v1071, 7
        %v1073 = vsub.s32 %v1070, %v1072
        %v1074 = vrot.slane %v1025, %v1073
        %v1075 = vcombine.low %v1066, %v1074
        %v1076 = vcombine.high %v1066, %v1074
        %v1078 = vunpack.c.l.s4 1934713408
        %v1079 = vunpack.c.0.s8 %v1078
        %v1080 = vlaneseq
        %v1081 = vshrl.u32 %v1080, 7
        %v1082 = vsub.s32 %v1079, %v1081
        %v1083 = vrot.slane %v1075, %v1082
        %v1085 = vunpack.c.l.s4 1934713408
        %v1086 = vunpack.c.0.s8 %v1085
        %v1087 = vlaneseq
        %v1088 = vshrl.u32 %v1087, 7
        %v1089 = vsub.s32 %v1086, %v1088
        %v1090 = vrot.slane %v1076, %v1089
        %v1091 = vcombine.high %v1083, 0
        %v1092 = vcombine.high %v1090, 0
        %v1095 = vpack.i.b16 %v1083, %v1049
        %v1097 = vshrl.u32 %v1049, 16
        %v1098 = vshrl.u32 %v1083, 16
        %v1099 = vpack.i.b16 %v1098, %v1097
        %v1103 = vpack.i.b16 %v1091, %v1057
        %v1105 = vshrl.u32 %v1057, 16
        %v1106 = vshrl.u32 %v1091, 16
        %v1107 = vpack.i.b16 %v1106, %v1105
        %v1111 = vpack.i.b16 %v1090, %v1056
        %v1113 = vshrl.u32 %v1056, 16
        %v1114 = vshrl.u32 %v1090, 16
        %v1115 = vpack.i.b16 %v1114, %v1113
        %v1119 = vpack.i.b16 %v1092, %v1058
        %v1121 = vshrl.u32 %v1058, 16
        %v1122 = vshrl.u32 %v1092, 16
        %v1123 = vpack.i.b16 %v1122, %v1121
        %v1125 = vcombine.low %v1095, %v1111
        %v1127 = vunpack.c.l.s4 1983009808
        %v1128 = vunpack.c.0.s8 %v1127
        %v1129 = vlaneseq
        %v1130 = vshrl.u32 %v1129, 7
        %v1131 = vsub.s32 %v1128, %v1130
        %v1132 = vrot.slane %v1125, %v1131
        %v1133 = vcombine.low %v1103, %v1119
        %v1135 = vunpack.c.l.s4 1983009808
        %v1136 = vunpack.c.0.s8 %v1135
        %v1137 = vlaneseq
        %v1138 = vshrl.u32 %v1137, 7
        %v1139 = vsub.s32 %v1136, %v1138
        %v1140 = vrot.slane %v1133, %v1139
        %v1141 = vcombine.low %v1132, %v1140
        %v1143 = vunpack.c.l.s4 1934713408
        %v1144 = vunpack.c.0.s8 %v1143
        %v1145 = vlaneseq
        %v1146 = vshrl.u32 %v1145, 7
        %v1147 = vsub.s32 %v1144, %v1146
        %v1148 = vrot.slane %v1141, %v1147
        %v1149 = vcombine.high %v1148, 0
        %v1150 = vcombine.low %v1099, %v1115
        %v1152 = vunpack.c.l.s4 1983009808
        %v1153 = vunpack.c.0.s8 %v1152
        %v1154 = vlaneseq
        %v1155 = vshrl.u32 %v1154, 7
        %v1156 = vsub.s32 %v1153, %v1155
        %v1157 = vrot.slane %v1150, %v1156
        %v1158 = vcombine.low %v1107, %v1123
        %v1160 = vunpack.c.l.s4 1983009808
        %v1161 = vunpack.c.0.s8 %v1160
        %v1162 = vlaneseq
        %v1163 = vshrl.u32 %v1162, 7
        %v1164 = vsub.s32 %v1161, %v1163
        %v1165 = vrot.slane %v1158, %v1164
        %v1166 = vcombine.low %v1157, %v1165
        %v1168 = vunpack.c.l.s4 1934713408
        %v1169 = vunpack.c.0.s8 %v1168
        %v1170 = vlaneseq
        %v1171 = vshrl.u32 %v1170, 7
        %v1172 = vsub.s32 %v1169, %v1171
        %v1173 = vrot.slane %v1166, %v1172
        %v1174 = vcombine.high %v1173, 0
        %v1177 = vpack.i.b16 %v1173, %v1148
        %v1178 = vshrl.u32 %v1148, 16
        %v1179 = vshrl.u32 %v1173, 16
        %v1180 = vpack.i.b16 %v1179, %v1178
        %v1183 = vpack.i.b16 %v1174, %v1149
        %v1184 = vshrl.u32 %v1149, 16
        %v1185 = vshrl.u32 %v1174, 16
        %v1186 = vpack.i.b16 %v1185, %v1184
        %v1187 = vpack.c.bf16 %v843, %v843
        %1189 = vrot.lane.b32.xlu0 %v1187, 96
        %v1190 = vpop.permute.xlu0 %1189
        %1191 = vrot.lane.b32.xlu0 %v1187, 64
        %v1192 = vpop.permute.xlu0 %1191
        %1193 = vrot.lane.b32.xlu0 %v1187, 32
        %v1194 = vpop.permute.xlu0 %1193
        %v1196 = vunpack.c.l.s4 1983009808
        %v1197 = vunpack.c.0.s8 %v1196
        %v1198 = vlaneseq
        %v1199 = vshrl.u32 %v1198, 7
        %v1200 = vsub.s32 %v1197, %v1199
        %v1201 = vrot.slane %v1187, %v1200
        %v1204 = vunpack.c.l.s4 1983009808
        %v1205 = vunpack.c.0.s8 %v1204
        %v1206 = vlaneseq
        %v1207 = vshrl.u32 %v1206, 7
        %v1208 = vsub.s32 %v1205, %v1207
        %v1209 = vrot.slane %v1192, %v1208
        %v1210 = vcombine.low %v1201, %v1209
        %v1211 = vcombine.high %v1201, %v1209
        %v1213 = vunpack.c.l.s4 1934713408
        %v1214 = vunpack.c.0.s8 %v1213
        %v1215 = vlaneseq
        %v1216 = vshrl.u32 %v1215, 7
        %v1217 = vsub.s32 %v1214, %v1216
        %v1218 = vrot.slane %v1210, %v1217
        %v1220 = vunpack.c.l.s4 1934713408
        %v1221 = vunpack.c.0.s8 %v1220
        %v1222 = vlaneseq
        %v1223 = vshrl.u32 %v1222, 7
        %v1224 = vsub.s32 %v1221, %v1223
        %v1225 = vrot.slane %v1211, %v1224
        %v1226 = vcombine.high %v1218, 0
        %v1227 = vcombine.high %v1225, 0
        %v1230 = vunpack.c.l.s4 1983009808
        %v1231 = vunpack.c.0.s8 %v1230
        %v1232 = vlaneseq
        %v1233 = vshrl.u32 %v1232, 7
        %v1234 = vsub.s32 %v1231, %v1233
        %v1235 = vrot.slane %v1190, %v1234
        %v1238 = vunpack.c.l.s4 1983009808
        %v1239 = vunpack.c.0.s8 %v1238
        %v1240 = vlaneseq
        %v1241 = vshrl.u32 %v1240, 7
        %v1242 = vsub.s32 %v1239, %v1241
        %v1243 = vrot.slane %v1194, %v1242
        %v1244 = vcombine.low %v1235, %v1243
        %v1245 = vcombine.high %v1235, %v1243
        %v1247 = vunpack.c.l.s4 1934713408
        %v1248 = vunpack.c.0.s8 %v1247
        %v1249 = vlaneseq
        %v1250 = vshrl.u32 %v1249, 7
        %v1251 = vsub.s32 %v1248, %v1250
        %v1252 = vrot.slane %v1244, %v1251
        %v1254 = vunpack.c.l.s4 1934713408
        %v1255 = vunpack.c.0.s8 %v1254
        %v1256 = vlaneseq
        %v1257 = vshrl.u32 %v1256, 7
        %v1258 = vsub.s32 %v1255, %v1257
        %v1259 = vrot.slane %v1245, %v1258
        %v1260 = vcombine.high %v1252, 0
        %v1261 = vcombine.high %v1259, 0
        %v1264 = vpack.i.b16 %v1252, %v1218
        %v1266 = vshrl.u32 %v1218, 16
        %v1267 = vshrl.u32 %v1252, 16
        %v1268 = vpack.i.b16 %v1267, %v1266
        %v1272 = vpack.i.b16 %v1260, %v1226
        %v1274 = vshrl.u32 %v1226, 16
        %v1275 = vshrl.u32 %v1260, 16
        %v1276 = vpack.i.b16 %v1275, %v1274
        %v1280 = vpack.i.b16 %v1259, %v1225
        %v1282 = vshrl.u32 %v1225, 16
        %v1283 = vshrl.u32 %v1259, 16
        %v1284 = vpack.i.b16 %v1283, %v1282
        %v1288 = vpack.i.b16 %v1261, %v1227
        %v1290 = vshrl.u32 %v1227, 16
        %v1291 = vshrl.u32 %v1261, 16
        %v1292 = vpack.i.b16 %v1291, %v1290
        %v1294 = vcombine.low %v1264, %v1280
        %v1296 = vunpack.c.l.s4 1983009808
        %v1297 = vunpack.c.0.s8 %v1296
        %v1298 = vlaneseq
        %v1299 = vshrl.u32 %v1298, 7
        %v1300 = vsub.s32 %v1297, %v1299
        %v1301 = vrot.slane %v1294, %v1300
        %v1302 = vcombine.low %v1272, %v1288
        %v1304 = vunpack.c.l.s4 1983009808
        %v1305 = vunpack.c.0.s8 %v1304
        %v1306 = vlaneseq
        %v1307 = vshrl.u32 %v1306, 7
        %v1308 = vsub.s32 %v1305, %v1307
        %v1309 = vrot.slane %v1302, %v1308
        %v1310 = vcombine.low %v1301, %v1309
        %v1312 = vunpack.c.l.s4 1934713408
        %v1313 = vunpack.c.0.s8 %v1312
        %v1314 = vlaneseq
        %v1315 = vshrl.u32 %v1314, 7
        %v1316 = vsub.s32 %v1313, %v1315
        %v1317 = vrot.slane %v1310, %v1316
        %v1318 = vcombine.high %v1317, 0
        %v1319 = vcombine.low %v1268, %v1284
        %v1321 = vunpack.c.l.s4 1983009808
        %v1322 = vunpack.c.0.s8 %v1321
        %v1323 = vlaneseq
        %v1324 = vshrl.u32 %v1323, 7
        %v1325 = vsub.s32 %v1322, %v1324
        %v1326 = vrot.slane %v1319, %v1325
        %v1327 = vcombine.low %v1276, %v1292
        %v1329 = vunpack.c.l.s4 1983009808
        %v1330 = vunpack.c.0.s8 %v1329
        %v1331 = vlaneseq
        %v1332 = vshrl.u32 %v1331, 7
        %v1333 = vsub.s32 %v1330, %v1332
        %v1334 = vrot.slane %v1327, %v1333
        %v1335 = vcombine.low %v1326, %v1334
        %v1337 = vunpack.c.l.s4 1934713408
        %v1338 = vunpack.c.0.s8 %v1337
        %v1339 = vlaneseq
        %v1340 = vshrl.u32 %v1339, 7
        %v1341 = vsub.s32 %v1338, %v1340
        %v1342 = vrot.slane %v1335, %v1341
        %v1343 = vcombine.high %v1342, 0
        %v1346 = vpack.i.b16 %v1342, %v1317
        %v1347 = vshrl.u32 %v1317, 16
        %v1348 = vshrl.u32 %v1342, 16
        %v1349 = vpack.i.b16 %v1348, %v1347
        %v1352 = vpack.i.b16 %v1343, %v1318
        %v1353 = vshrl.u32 %v1318, 16
        %v1354 = vshrl.u32 %v1343, 16
        %v1355 = vpack.i.b16 %v1354, %v1353
        %vm1356 = vcmask 261120
        %v1358 = vsel %vm1356, %v1008, 0
        %v1361 = vsel %vm1356, %v1177, 0
        %1363 = vmatprep.subr.bf16.mxu0 0
        %1364 = vmatpush1.bf16.xpose.msra.mxu0 %v1361
        %1365 = vmatprep.subr.bf16.mxu0 0
        %1366 = vmatpush1.bf16.xpose.msra.mxu0 0
        %1367 = vmatprep.subr.bf16.mxu0 0
        %1368 = vmatpush1.bf16.xpose.msra.mxu0 0
        %1369 = vmatprep.subr.bf16.mxu0 0
        %1370 = vmatpush1.bf16.xpose.msra.mxu0 0
        %1371 = vmatprep.subr.bf16.mxu0 0
        %1372 = vmatpush1.bf16.xpose.msra.mxu0 0
        %1373 = vmatprep.subr.bf16.mxu0 0
        %1374 = vmatpush1.bf16.xpose.msra.mxu0 0
        %1375 = vmatprep.subr.bf16.mxu0 0
        %1376 = vmatpush1.bf16.xpose.msra.mxu0 0
        %1377 = vmatprep.subr.bf16.mxu0 0
        %1378 = vmatpush1.bf16.xpose.msra.mxu0 0
        %1379 = vmatprep.subr.bf16.mxu0 0
        %1380 = vmatpush1.bf16.xpose.msra.mxu0 0
        %1381 = vmatprep.subr.bf16.mxu0 0
        %1382 = vmatpush1.bf16.xpose.msra.mxu0 0
        %1383 = vmatprep.subr.bf16.mxu0 0
        %1384 = vmatpush1.bf16.xpose.msra.mxu0 0
        %1385 = vmatprep.subr.bf16.mxu0 0
        %1386 = vmatpush1.bf16.xpose.msra.mxu0 0
        %1387 = vmatprep.subr.bf16.mxu0 0
        %1388 = vmatpush1.bf16.xpose.msra.mxu0 0
        %1389 = vmatprep.subr.bf16.mxu0 0
        %1390 = vmatpush1.bf16.xpose.msra.mxu0 0
        %1391 = vmatprep.subr.bf16.mxu0 0
        %1392 = vmatpush1.bf16.xpose.msra.mxu0 0
        %1393 = vmatprep.subr.bf16.mxu0 0
        %1394 = vmatpush1.bf16.xpose.msra.mxu0 0
        %1395 = vmatprep.mubr.bf16.mxu0 0
        %1396 = vmatmul.mubr.bf16.gmra.mrb[0].mxu0 %v1358
        %v1397 = vpop.f32.mrb[0].mxu0
        %v1398 = vadd.f32 0.0, %v1397
        %v1399 = vpop.f32.mrb[0].mxu0
        %v1400 = vpop.f32.mrb[0].mxu0
        %v1401 = vpop.f32.mrb[0].mxu0
        %1402 = vdwg.mxu0
        %v1404 = vsel %vm1356, %v1011, 0
        %v1407 = vsel %vm1356, %v1180, 0
        %1409 = vmatprep.subr.bf16.mxu0 0
        %1410 = vmatpush1.bf16.xpose.msra.mxu0 %v1407
        %1411 = vmatprep.subr.bf16.mxu0 0
        %1412 = vmatpush1.bf16.xpose.msra.mxu0 0
        %1413 = vmatprep.subr.bf16.mxu0 0
        %1414 = vmatpush1.bf16.xpose.msra.mxu0 0
        %1415 = vmatprep.subr.bf16.mxu0 0
        %1416 = vmatpush1.bf16.xpose.msra.mxu0 0
        %1417 = vmatprep.subr.bf16.mxu0 0
        %1418 = vmatpush1.bf16.xpose.msra.mxu0 0
        %1419 = vmatprep.subr.bf16.mxu0 0
        %1420 = vmatpush1.bf16.xpose.msra.mxu0 0
        %1421 = vmatprep.subr.bf16.mxu0 0
        %1422 = vmatpush1.bf16.xpose.msra.mxu0 0
        %1423 = vmatprep.subr.bf16.mxu0 0
        %1424 = vmatpush1.bf16.xpose.msra.mxu0 0
        %1425 = vmatprep.subr.bf16.mxu0 0
        %1426 = vmatpush1.bf16.xpose.msra.mxu0 0
        %1427 = vmatprep.subr.bf16.mxu0 0
        %1428 = vmatpush1.bf16.xpose.msra.mxu0 0
        %1429 = vmatprep.subr.bf16.mxu0 0
        %1430 = vmatpush1.bf16.xpose.msra.mxu0 0
        %1431 = vmatprep.subr.bf16.mxu0 0
        %1432 = vmatpush1.bf16.xpose.msra.mxu0 0
        %1433 = vmatprep.subr.bf16.mxu0 0
        %1434 = vmatpush1.bf16.xpose.msra.mxu0 0
        %1435 = vmatprep.subr.bf16.mxu0 0
        %1436 = vmatpush1.bf16.xpose.msra.mxu0 0
        %1437 = vmatprep.subr.bf16.mxu0 0
        %1438 = vmatpush1.bf16.xpose.msra.mxu0 0
        %1439 = vmatprep.subr.bf16.mxu0 0
        %1440 = vmatpush1.bf16.xpose.msra.mxu0 0
        %1441 = vmatprep.mubr.bf16.mxu0 0
        %1442 = vmatmul.mubr.bf16.gmra.mrb[0].mxu0 %v1404
        %v1443 = vpop.f32.mrb[0].mxu0
        %v1444 = vadd.f32 0.0, %v1443
        %v1445 = vpop.f32.mrb[0].mxu0
        %v1446 = vpop.f32.mrb[0].mxu0
        %v1447 = vpop.f32.mrb[0].mxu0
        %1448 = vdwg.mxu0
        %v1450 = vsel %vm1356, %v1014, 0
        %v1453 = vsel %vm1356, %v1183, 0
        %1455 = vmatprep.subr.bf16.mxu0 0
        %1456 = vmatpush1.bf16.xpose.msra.mxu0 %v1453
        %1457 = vmatprep.subr.bf16.mxu0 0
        %1458 = vmatpush1.bf16.xpose.msra.mxu0 0
        %1459 = vmatprep.subr.bf16.mxu0 0
        %1460 = vmatpush1.bf16.xpose.msra.mxu0 0
        %1461 = vmatprep.subr.bf16.mxu0 0
        %1462 = vmatpush1.bf16.xpose.msra.mxu0 0
        %1463 = vmatprep.subr.bf16.mxu0 0
        %1464 = vmatpush1.bf16.xpose.msra.mxu0 0
        %1465 = vmatprep.subr.bf16.mxu0 0
        %1466 = vmatpush1.bf16.xpose.msra.mxu0 0
        %1467 = vmatprep.subr.bf16.mxu0 0
        %1468 = vmatpush1.bf16.xpose.msra.mxu0 0
        %1469 = vmatprep.subr.bf16.mxu0 0
        %1470 = vmatpush1.bf16.xpose.msra.mxu0 0
        %1471 = vmatprep.subr.bf16.mxu0 0
        %1472 = vmatpush1.bf16.xpose.msra.mxu0 0
        %1473 = vmatprep.subr.bf16.mxu0 0
        %1474 = vmatpush1.bf16.xpose.msra.mxu0 0
        %1475 = vmatprep.subr.bf16.mxu0 0
        %1476 = vmatpush1.bf16.xpose.msra.mxu0 0
        %1477 = vmatprep.subr.bf16.mxu0 0
        %1478 = vmatpush1.bf16.xpose.msra.mxu0 0
        %1479 = vmatprep.subr.bf16.mxu0 0
        %1480 = vmatpush1.bf16.xpose.msra.mxu0 0
        %1481 = vmatprep.subr.bf16.mxu0 0
        %1482 = vmatpush1.bf16.xpose.msra.mxu0 0
        %1483 = vmatprep.subr.bf16.mxu0 0
        %1484 = vmatpush1.bf16.xpose.msra.mxu0 0
        %1485 = vmatprep.subr.bf16.mxu0 0
        %1486 = vmatpush1.bf16.xpose.msra.mxu0 0
        %1487 = vmatprep.mubr.bf16.mxu0 0
        %1488 = vmatmul.mubr.bf16.gmra.mrb[0].mxu0 %v1450
        %v1489 = vpop.f32.mrb[0].mxu0
        %v1490 = vadd.f32 0.0, %v1489
        %v1491 = vpop.f32.mrb[0].mxu0
        %v1492 = vpop.f32.mrb[0].mxu0
        %v1493 = vpop.f32.mrb[0].mxu0
        %1494 = vdwg.mxu0
        %v1496 = vsel %vm1356, %v1017, 0
        %v1499 = vsel %vm1356, %v1186, 0
        %1501 = vmatprep.subr.bf16.mxu0 0
        %1502 = vmatpush1.bf16.xpose.msra.mxu0 %v1499
        %1503 = vmatprep.subr.bf16.mxu0 0
        %1504 = vmatpush1.bf16.xpose.msra.mxu0 0
        %1505 = vmatprep.subr.bf16.mxu0 0
        %1506 = vmatpush1.bf16.xpose.msra.mxu0 0
        %1507 = vmatprep.subr.bf16.mxu0 0
        %1508 = vmatpush1.bf16.xpose.msra.mxu0 0
        %1509 = vmatprep.subr.bf16.mxu0 0
        %1510 = vmatpush1.bf16.xpose.msra.mxu0 0
        %1511 = vmatprep.subr.bf16.mxu0 0
        %1512 = vmatpush1.bf16.xpose.msra.mxu0 0
        %1513 = vmatprep.subr.bf16.mxu0 0
        %1514 = vmatpush1.bf16.xpose.msra.mxu0 0
        %1515 = vmatprep.subr.bf16.mxu0 0
        %1516 = vmatpush1.bf16.xpose.msra.mxu0 0
        %1517 = vmatprep.subr.bf16.mxu0 0
        %1518 = vmatpush1.bf16.xpose.msra.mxu0 0
        %1519 = vmatprep.subr.bf16.mxu0 0
        %1520 = vmatpush1.bf16.xpose.msra.mxu0 0
        %1521 = vmatprep.subr.bf16.mxu0 0
        %1522 = vmatpush1.bf16.xpose.msra.mxu0 0
        %1523 = vmatprep.subr.bf16.mxu0 0
        %1524 = vmatpush1.bf16.xpose.msra.mxu0 0
        %1525 = vmatprep.subr.bf16.mxu0 0
        %1526 = vmatpush1.bf16.xpose.msra.mxu0 0
        %1527 = vmatprep.subr.bf16.mxu0 0
        %1528 = vmatpush1.bf16.xpose.msra.mxu0 0
        %1529 = vmatprep.subr.bf16.mxu0 0
        %1530 = vmatpush1.bf16.xpose.msra.mxu0 0
        %1531 = vmatprep.subr.bf16.mxu0 0
        %1532 = vmatpush1.bf16.xpose.msra.mxu0 0
        %1533 = vmatprep.mubr.bf16.mxu0 0
        %1534 = vmatmul.mubr.bf16.gmra.mrb[0].mxu0 %v1496
        %v1535 = vpop.f32.mrb[0].mxu0
        %v1536 = vadd.f32 0.0, %v1535
        %v1537 = vpop.f32.mrb[0].mxu0
        %v1538 = vpop.f32.mrb[0].mxu0
        %v1539 = vpop.f32.mrb[0].mxu0
        %1540 = vdwg.mxu0
        %vm1541 = vcmask 64512
        %v1542 = vsel %vm1541, %v1398, -inf
        %1543 = vmax.xlane.f32.xlu0 %v1542
        %v1544 = vpop.xlane.xlu0 %1543
        %v1545 = vsel %vm1541, %v1444, -inf
        %1546 = vmax.xlane.f32.xlu0 %v1545
        %v1547 = vpop.xlane.xlu0 %1546
        %v1548 = vsel %vm1541, %v1490, -inf
        %1549 = vmax.xlane.f32.xlu0 %v1548
        %v1550 = vpop.xlane.xlu0 %1549
        %v1551 = vsel %vm1541, %v1536, -inf
        %1552 = vmax.xlane.f32.xlu0 %v1551
        %v1553 = vpop.xlane.xlu0 %1552
        %v1554 = vsub.f32 %v1398, %v1544
        %v1555 = vsub.f32 %v1444, %v1547
        %v1556 = vsub.f32 %v1490, %v1550
        %v1557 = vsub.f32 %v1536, %v1553
        %v1558 = vmul.f32 %v1554, 1.442695
        %v1559 = vpow.pop %v1558
        %v1560 = vmul.f32 %v1555, 1.442695
        %v1561 = vpow.pop %v1560
        %v1562 = vmul.f32 %v1556, 1.442695
        %v1563 = vpow.pop %v1562
        %v1564 = vmul.f32 %v1557, 1.442695
        %v1565 = vpow.pop %v1564
        %v1566 = vsel %vm1541, %v1559, 0.0
        %1567 = vadd.xlane.f32.xlu0 %v1566
        %v1568 = vpop.xlane.xlu0 %1567
        %v1569 = vsel %vm1541, %v1561, 0.0
        %1570 = vadd.xlane.f32.xlu0 %v1569
        %v1571 = vpop.xlane.xlu0 %1570
        %v1572 = vsel %vm1541, %v1563, 0.0
        %1573 = vadd.xlane.f32.xlu0 %v1572
        %v1574 = vpop.xlane.xlu0 %1573
        %v1575 = vsel %vm1541, %v1565, 0.0
        %1576 = vadd.xlane.f32.xlu0 %v1575
        %v1577 = vpop.xlane.xlu0 %1576
        %v1578 = vrcp.pop %v1568
        %v1579 = vrcp.pop %v1571
        %v1580 = vrcp.pop %v1574
        %v1581 = vrcp.pop %v1577
        %v1582 = vmul.f32 %v1559, %v1578
        %v1583 = vmul.f32 %v1561, %v1579
        %v1584 = vmul.f32 %v1563, %v1580
        %v1585 = vmul.f32 %v1565, %v1581
        %v1586 = vpack.c.bf16 %v1582, %v1582
        %v1587 = vpack.c.bf16 %v1583, %v1583
        %v1588 = vpack.c.bf16 %v1584, %v1584
        %v1589 = vpack.c.bf16 %v1585, %v1585
        %v1591 = vsel %vm1541, %v1586, 0
        %vm1593 = vcmask 1043456
        %v1595 = vsel %vm1593, %v1346, 0
        %1597 = vmatprep.subr.bf16.mxu0 0
        %1598 = vmatpush1.bf16.msra.mxu0 %v1595
        %1599 = vmatprep.subr.bf16.mxu0 0
        %1600 = vmatpush1.bf16.msra.mxu0 0
        %1601 = vmatprep.subr.bf16.mxu0 0
        %1602 = vmatpush1.bf16.msra.mxu0 0
        %1603 = vmatprep.subr.bf16.mxu0 0
        %1604 = vmatpush1.bf16.msra.mxu0 0
        %1605 = vmatprep.subr.bf16.mxu0 0
        %1606 = vmatpush1.bf16.msra.mxu0 0
        %1607 = vmatprep.subr.bf16.mxu0 0
        %1608 = vmatpush1.bf16.msra.mxu0 0
        %1609 = vmatprep.subr.bf16.mxu0 0
        %1610 = vmatpush1.bf16.msra.mxu0 0
        %1611 = vmatprep.subr.bf16.mxu0 0
        %1612 = vmatpush1.bf16.msra.mxu0 0
        %1613 = vmatprep.subr.bf16.mxu0 0
        %1614 = vmatpush1.bf16.msra.mxu0 0
        %1615 = vmatprep.subr.bf16.mxu0 0
        %1616 = vmatpush1.bf16.msra.mxu0 0
        %1617 = vmatprep.subr.bf16.mxu0 0
        %1618 = vmatpush1.bf16.msra.mxu0 0
        %1619 = vmatprep.subr.bf16.mxu0 0
        %1620 = vmatpush1.bf16.msra.mxu0 0
        %1621 = vmatprep.subr.bf16.mxu0 0
        %1622 = vmatpush1.bf16.msra.mxu0 0
        %1623 = vmatprep.subr.bf16.mxu0 0
        %1624 = vmatpush1.bf16.msra.mxu0 0
        %1625 = vmatprep.subr.bf16.mxu0 0
        %1626 = vmatpush1.bf16.msra.mxu0 0
        %1627 = vmatprep.subr.bf16.mxu0 0
        %1628 = vmatpush1.bf16.msra.mxu0 0
        %1629 = vmatprep.mubr.bf16.mxu0 0
        %1630 = vmatmul.mubr.bf16.gmra.mrb[0].mxu0 %v1591
        %v1631 = vpop.f32.mrb[0].mxu0
        %v1632 = vadd.f32 0.0, %v1631
        %v1633 = vpop.f32.mrb[0].mxu0
        %v1634 = vpop.f32.mrb[0].mxu0
        %v1635 = vpop.f32.mrb[0].mxu0
        %1636 = vdwg.mxu0
        %v1638 = vsel %vm1541, %v1587, 0
        %v1641 = vsel %vm1593, %v1349, 0
        %1643 = vmatprep.subr.bf16.mxu0 0
        %1644 = vmatpush1.bf16.msra.mxu0 %v1641
        %1645 = vmatprep.subr.bf16.mxu0 0
        %1646 = vmatpush1.bf16.msra.mxu0 0
        %1647 = vmatprep.subr.bf16.mxu0 0
        %1648 = vmatpush1.bf16.msra.mxu0 0
        %1649 = vmatprep.subr.bf16.mxu0 0
        %1650 = vmatpush1.bf16.msra.mxu0 0
        %1651 = vmatprep.subr.bf16.mxu0 0
        %1652 = vmatpush1.bf16.msra.mxu0 0
        %1653 = vmatprep.subr.bf16.mxu0 0
        %1654 = vmatpush1.bf16.msra.mxu0 0
        %1655 = vmatprep.subr.bf16.mxu0 0
        %1656 = vmatpush1.bf16.msra.mxu0 0
        %1657 = vmatprep.subr.bf16.mxu0 0
        %1658 = vmatpush1.bf16.msra.mxu0 0
        %1659 = vmatprep.subr.bf16.mxu0 0
        %1660 = vmatpush1.bf16.msra.mxu0 0
        %1661 = vmatprep.subr.bf16.mxu0 0
        %1662 = vmatpush1.bf16.msra.mxu0 0
        %1663 = vmatprep.subr.bf16.mxu0 0
        %1664 = vmatpush1.bf16.msra.mxu0 0
        %1665 = vmatprep.subr.bf16.mxu0 0
        %1666 = vmatpush1.bf16.msra.mxu0 0
        %1667 = vmatprep.subr.bf16.mxu0 0
        %1668 = vmatpush1.bf16.msra.mxu0 0
        %1669 = vmatprep.subr.bf16.mxu0 0
        %1670 = vmatpush1.bf16.msra.mxu0 0
        %1671 = vmatprep.subr.bf16.mxu0 0
        %1672 = vmatpush1.bf16.msra.mxu0 0
        %1673 = vmatprep.subr.bf16.mxu0 0
        %1674 = vmatpush1.bf16.msra.mxu0 0
        %1675 = vmatprep.mubr.bf16.mxu0 0
        %1676 = vmatmul.mubr.bf16.gmra.mrb[0].mxu0 %v1638
        %v1677 = vpop.f32.mrb[0].mxu0
        %v1678 = vadd.f32 0.0, %v1677
        %v1679 = vpop.f32.mrb[0].mxu0
        %v1680 = vpop.f32.mrb[0].mxu0
        %v1681 = vpop.f32.mrb[0].mxu0
        %1682 = vdwg.mxu0
        %v1684 = vsel %vm1541, %v1588, 0
        %v1687 = vsel %vm1593, %v1352, 0
        %1689 = vmatprep.subr.bf16.mxu0 0
        %1690 = vmatpush1.bf16.msra.mxu0 %v1687
        %1691 = vmatprep.subr.bf16.mxu0 0
        %1692 = vmatpush1.bf16.msra.mxu0 0
        %1693 = vmatprep.subr.bf16.mxu0 0
        %1694 = vmatpush1.bf16.msra.mxu0 0
        %1695 = vmatprep.subr.bf16.mxu0 0
        %1696 = vmatpush1.bf16.msra.mxu0 0
        %1697 = vmatprep.subr.bf16.mxu0 0
        %1698 = vmatpush1.bf16.msra.mxu0 0
        %1699 = vmatprep.subr.bf16.mxu0 0
        %1700 = vmatpush1.bf16.msra.mxu0 0
        %1701 = vmatprep.subr.bf16.mxu0 0
        %1702 = vmatpush1.bf16.msra.mxu0 0
        %1703 = vmatprep.subr.bf16.mxu0 0
        %1704 = vmatpush1.bf16.msra.mxu0 0
        %1705 = vmatprep.subr.bf16.mxu0 0
        %1706 = vmatpush1.bf16.msra.mxu0 0
        %1707 = vmatprep.subr.bf16.mxu0 0
        %1708 = vmatpush1.bf16.msra.mxu0 0
        %1709 = vmatprep.subr.bf16.mxu0 0
        %1710 = vmatpush1.bf16.msra.mxu0 0
        %1711 = vmatprep.subr.bf16.mxu0 0
        %1712 = vmatpush1.bf16.msra.mxu0 0
        %1713 = vmatprep.subr.bf16.mxu0 0
        %1714 = vmatpush1.bf16.msra.mxu0 0
        %1715 = vmatprep.subr.bf16.mxu0 0
        %1716 = vmatpush1.bf16.msra.mxu0 0
        %1717 = vmatprep.subr.bf16.mxu0 0
        %1718 = vmatpush1.bf16.msra.mxu0 0
        %1719 = vmatprep.subr.bf16.mxu0 0
        %1720 = vmatpush1.bf16.msra.mxu0 0
        %1721 = vmatprep.mubr.bf16.mxu0 0
        %1722 = vmatmul.mubr.bf16.gmra.mrb[0].mxu0 %v1684
        %v1723 = vpop.f32.mrb[0].mxu0
        %v1724 = vadd.f32 0.0, %v1723
        %v1725 = vpop.f32.mrb[0].mxu0
        %v1726 = vpop.f32.mrb[0].mxu0
        %v1727 = vpop.f32.mrb[0].mxu0
        %1728 = vdwg.mxu0
        %v1730 = vsel %vm1541, %v1589, 0
        %v1733 = vsel %vm1593, %v1355, 0
        %1735 = vmatprep.subr.bf16.mxu0 0
        %1736 = vmatpush1.bf16.msra.mxu0 %v1733
        %1737 = vmatprep.subr.bf16.mxu0 0
        %1738 = vmatpush1.bf16.msra.mxu0 0
        %1739 = vmatprep.subr.bf16.mxu0 0
        %1740 = vmatpush1.bf16.msra.mxu0 0
        %1741 = vmatprep.subr.bf16.mxu0 0
        %1742 = vmatpush1.bf16.msra.mxu0 0
        %1743 = vmatprep.subr.bf16.mxu0 0
        %1744 = vmatpush1.bf16.msra.mxu0 0
        %1745 = vmatprep.subr.bf16.mxu0 0
        %1746 = vmatpush1.bf16.msra.mxu0 0
        %1747 = vmatprep.subr.bf16.mxu0 0
        %1748 = vmatpush1.bf16.msra.mxu0 0
        %1749 = vmatprep.subr.bf16.mxu0 0
        %1750 = vmatpush1.bf16.msra.mxu0 0
        %1751 = vmatprep.subr.bf16.mxu0 0
        %1752 = vmatpush1.bf16.msra.mxu0 0
        %1753 = vmatprep.subr.bf16.mxu0 0
        %1754 = vmatpush1.bf16.msra.mxu0 0
        %1755 = vmatprep.subr.bf16.mxu0 0
        %1756 = vmatpush1.bf16.msra.mxu0 0
        %1757 = vmatprep.subr.bf16.mxu0 0
        %1758 = vmatpush1.bf16.msra.mxu0 0
        %1759 = vmatprep.subr.bf16.mxu0 0
        %1760 = vmatpush1.bf16.msra.mxu0 0
        %1761 = vmatprep.subr.bf16.mxu0 0
        %1762 = vmatpush1.bf16.msra.mxu0 0
        %1763 = vmatprep.subr.bf16.mxu0 0
        %1764 = vmatpush1.bf16.msra.mxu0 0
        %1765 = vmatprep.subr.bf16.mxu0 0
        %1766 = vmatpush1.bf16.msra.mxu0 0
        %1767 = vmatprep.mubr.bf16.mxu0 0
        %1768 = vmatmul.mubr.bf16.gmra.mrb[0].mxu0 %v1730
        %v1769 = vpop.f32.mrb[0].mxu0
        %v1770 = vadd.f32 0.0, %v1769
        %v1771 = vpop.f32.mrb[0].mxu0
        %v1772 = vpop.f32.mrb[0].mxu0
        %v1773 = vpop.f32.mrb[0].mxu0
        %1774 = vdwg.mxu0
        %v1775 = vcombine.low %v1632, %v1724
        %v1776 = vcombine.high %v1632, %v1724
        %v1778 = vunpack.c.l.s4 1983009808
        %v1779 = vunpack.c.0.s8 %v1778
        %v1780 = vlaneseq
        %v1781 = vshrl.u32 %v1780, 7
        %v1782 = vsub.s32 %v1779, %v1781
        %v1783 = vrot.slane %v1775, %v1782
        %v1785 = vunpack.c.l.s4 1983009808
        %v1786 = vunpack.c.0.s8 %v1785
        %v1787 = vlaneseq
        %v1788 = vshrl.u32 %v1787, 7
        %v1789 = vsub.s32 %v1786, %v1788
        %v1790 = vrot.slane %v1776, %v1789
        %v1791 = vcombine.low %v1678, %v1770
        %v1792 = vcombine.high %v1678, %v1770
        %v1794 = vunpack.c.l.s4 1983009808
        %v1795 = vunpack.c.0.s8 %v1794
        %v1796 = vlaneseq
        %v1797 = vshrl.u32 %v1796, 7
        %v1798 = vsub.s32 %v1795, %v1797
        %v1799 = vrot.slane %v1791, %v1798
        %v1801 = vunpack.c.l.s4 1983009808
        %v1802 = vunpack.c.0.s8 %v1801
        %v1803 = vlaneseq
        %v1804 = vshrl.u32 %v1803, 7
        %v1805 = vsub.s32 %v1802, %v1804
        %v1806 = vrot.slane %v1792, %v1805
        %v1807 = vcombine.low %v1783, %v1799
        %v1808 = vcombine.high %v1783, %v1799
        %v1810 = vunpack.c.l.s4 1934713408
        %v1811 = vunpack.c.0.s8 %v1810
        %v1812 = vlaneseq
        %v1813 = vshrl.u32 %v1812, 7
        %v1814 = vsub.s32 %v1811, %v1813
        %v1815 = vrot.slane %v1807, %v1814
        %v1817 = vunpack.c.l.s4 1934713408
        %v1818 = vunpack.c.0.s8 %v1817
        %v1819 = vlaneseq
        %v1820 = vshrl.u32 %v1819, 7
        %v1821 = vsub.s32 %v1818, %v1820
        %v1822 = vrot.slane %v1808, %v1821
        %v1823 = vcombine.low %v1790, %v1806
        %v1824 = vcombine.high %v1790, %v1806
        %v1826 = vunpack.c.l.s4 1934713408
        %v1827 = vunpack.c.0.s8 %v1826
        %v1828 = vlaneseq
        %v1829 = vshrl.u32 %v1828, 7
        %v1830 = vsub.s32 %v1827, %v1829
        %v1831 = vrot.slane %v1823, %v1830
        %v1833 = vunpack.c.l.s4 1934713408
        %v1834 = vunpack.c.0.s8 %v1833
        %v1835 = vlaneseq
        %v1836 = vshrl.u32 %v1835, 7
        %v1837 = vsub.s32 %v1834, %v1836
        %v1838 = vrot.slane %v1824, %v1837
        %v1839 = vcombine.high %v1815, 0.0
        %v1840 = vcombine.high %v1822, 0.0
        %v1841 = vcombine.high %v1831, 0.0
        %v1842 = vcombine.high %v1838, 0.0
        %v1843 = vcombine.low %v1815, %v1822
        %v1845 = vunpack.c.l.s4 1983009808
        %v1846 = vunpack.c.0.s8 %v1845
        %v1847 = vlaneseq
        %v1848 = vshrl.u32 %v1847, 7
        %v1849 = vsub.s32 %v1846, %v1848
        %v1850 = vrot.slane %v1843, %v1849
        %v1851 = vcombine.low %v1839, %v1840
        %v1853 = vunpack.c.l.s4 1983009808
        %v1854 = vunpack.c.0.s8 %v1853
        %v1855 = vlaneseq
        %v1856 = vshrl.u32 %v1855, 7
        %v1857 = vsub.s32 %v1854, %v1856
        %v1858 = vrot.slane %v1851, %v1857
        %v1859 = vcombine.low %v1831, %v1838
        %v1861 = vunpack.c.l.s4 1983009808
        %v1862 = vunpack.c.0.s8 %v1861
        %v1863 = vlaneseq
        %v1864 = vshrl.u32 %v1863, 7
        %v1865 = vsub.s32 %v1862, %v1864
        %v1866 = vrot.slane %v1859, %v1865
        %v1867 = vcombine.low %v1841, %v1842
        %v1869 = vunpack.c.l.s4 1983009808
        %v1870 = vunpack.c.0.s8 %v1869
        %v1871 = vlaneseq
        %v1872 = vshrl.u32 %v1871, 7
        %v1873 = vsub.s32 %v1870, %v1872
        %v1874 = vrot.slane %v1867, %v1873
        %v1875 = vcombine.low %v1850, %v1858
        %v1876 = vcombine.high %v1850, %v1858
        %v1878 = vunpack.c.l.s4 1934713408
        %v1879 = vunpack.c.0.s8 %v1878
        %v1880 = vlaneseq
        %v1881 = vshrl.u32 %v1880, 7
        %v1882 = vsub.s32 %v1879, %v1881
        %v1883 = vrot.slane %v1875, %v1882
        %v1885 = vunpack.c.l.s4 1934713408
        %v1886 = vunpack.c.0.s8 %v1885
        %v1887 = vlaneseq
        %v1888 = vshrl.u32 %v1887, 7
        %v1889 = vsub.s32 %v1886, %v1888
        %v1890 = vrot.slane %v1876, %v1889
        %v1891 = vcombine.low %v1866, %v1874
        %v1892 = vcombine.high %v1866, %v1874
        %v1894 = vunpack.c.l.s4 1934713408
        %v1895 = vunpack.c.0.s8 %v1894
        %v1896 = vlaneseq
        %v1897 = vshrl.u32 %v1896, 7
        %v1898 = vsub.s32 %v1895, %v1897
        %v1899 = vrot.slane %v1891, %v1898
        %v1901 = vunpack.c.l.s4 1934713408
        %v1902 = vunpack.c.0.s8 %v1901
        %v1903 = vlaneseq
        %v1904 = vshrl.u32 %v1903, 7
        %v1905 = vsub.s32 %v1902, %v1904
        %v1906 = vrot.slane %v1892, %v1905
        %v1907 = vcombine.low %v1883, %v1899
        %v1908 = vcombine.high %v1883, %v1899
        %v1909 = vcombine.low %v1890, %v1906
        %v1910 = vcombine.high %v1890, %v1906
        %1912 = vrot.lane.b32.xlu0 %v1908, 32
        %v1913 = vpop.permute.xlu0 %1912
        %1916 = vrot.lane.b32.xlu0 %v1909, 64
        %v1917 = vpop.permute.xlu0 %1916
        %1920 = vrot.lane.b32.xlu0 %v1910, 96
        %v1921 = vpop.permute.xlu0 %1920
        %v1923 = vsel %vm1356, %v1907, %v1913
        %vm1924 = vcmask 523264
        %v1925 = vsel %vm1924, %v1923, %v1917
        %vm1926 = vcmask 785408
        %v1927 = vsel %vm1926, %v1925, %v1921
        %v1928 = vpack.c.bf16 %v1927, %v1927
        %v1929 = vld [vmem:[#allocation9] sm:$0xf]
        %v1930 = vld [vmem:[#allocation9 + $0x4] sm:$0xf]
        %v1931 = vld [vmem:[#allocation9 + $0x8] sm:$0xf]
        %v1932 = vld [vmem:[#allocation9 + $0xc] sm:$0xf]
        %v1933 = vld [vmem:[#allocation9 + $0x10] sm:$0xf]
        %v1934 = vld [vmem:[#allocation9 + $0x14] sm:$0xf]
        %v1935 = vld [vmem:[#allocation9 + $0x18] sm:$0xf]
        %v1936 = vld [vmem:[#allocation9 + $0x1c] sm:$0xf]
        %v1937 = vld [vmem:[#allocation9 + $0x20] sm:$0xf]
        %v1938 = vld [vmem:[#allocation9 + $0x24] sm:$0xf]
        %v1939 = vld [vmem:[#allocation9 + $0x28] sm:$0xf]
        %v1940 = vld [vmem:[#allocation9 + $0x2c] sm:$0xf]
        %v1941 = vld [vmem:[#allocation9 + $0x30] sm:$0xf]
        %v1942 = vld [vmem:[#allocation9 + $0x34] sm:$0xf]
        %v1943 = vld [vmem:[#allocation9 + $0x38] sm:$0xf]
        %v1944 = vld [vmem:[#allocation9 + $0x3c] sm:$0xf]
        %v1945 = vld [vmem:[%s6] sm:$0x1]
        %v1947 = vlaneseq
        %v1948 = vshrl.u32 %v1947, 7
        %v1949 = vsub.s32 0, %v1948
        %v1950 = vrot.slane %v1945, %v1949
        %v1968 = vunpack.c.l.b16 %v1929
        %v1969 = vunpack.c.l.b16 %v1930
        %v1970 = vunpack.c.l.b16 %v1931
        %v1971 = vunpack.c.l.b16 %v1932
        %v1972 = vunpack.c.l.b16 %v1933
        %v1973 = vunpack.c.l.b16 %v1934
        %v1974 = vunpack.c.l.b16 %v1935
        %v1975 = vunpack.c.l.b16 %v1936
        %v1976 = vunpack.c.l.b16 %v1937
        %v1977 = vunpack.c.l.b16 %v1938
        %v1978 = vunpack.c.l.b16 %v1939
        %v1979 = vunpack.c.l.b16 %v1940
        %v1980 = vunpack.c.l.b16 %v1941
        %v1981 = vunpack.c.l.b16 %v1942
        %v1982 = vunpack.c.l.b16 %v1943
        %v1983 = vunpack.c.l.b16 %v1944
        %v1984 = vpack.c.b16 %v1969, %v1968
        %v1985 = vpack.c.b16 %v1971, %v1970
        %v1986 = vpack.c.b16 %v1973, %v1972
        %v1987 = vpack.c.b16 %v1975, %v1974
        %v1988 = vpack.c.b16 %v1977, %v1976
        %v1989 = vpack.c.b16 %v1979, %v1978
        %v1990 = vpack.c.b16 %v1981, %v1980
        %v1991 = vpack.c.b16 %v1983, %v1982
        %2000 = vmatprep.subr.bf16.mxu0 0
        %2001 = vmatpush1.bf16.msra.mxu0 %v1984
        %2002 = vmatprep.subr.bf16.mxu0 0
        %2003 = vmatpush1.bf16.msra.mxu0 %v1985
        %2004 = vmatprep.subr.bf16.mxu0 0
        %2005 = vmatpush1.bf16.msra.mxu0 %v1986
        %2006 = vmatprep.subr.bf16.mxu0 0
        %2007 = vmatpush1.bf16.msra.mxu0 %v1987
        %2008 = vmatprep.subr.bf16.mxu0 0
        %2009 = vmatpush1.bf16.msra.mxu0 %v1988
        %2010 = vmatprep.subr.bf16.mxu0 0
        %2011 = vmatpush1.bf16.msra.mxu0 %v1989
        %2012 = vmatprep.subr.bf16.mxu0 0
        %2013 = vmatpush1.bf16.msra.mxu0 %v1990
        %2014 = vmatprep.subr.bf16.mxu0 0
        %2015 = vmatpush1.bf16.msra.mxu0 %v1991
        %2016 = vmatprep.subr.bf16.mxu0 0
        %2017 = vmatpush1.bf16.msra.mxu0 0
        %2018 = vmatprep.subr.bf16.mxu0 0
        %2019 = vmatpush1.bf16.msra.mxu0 0
        %2020 = vmatprep.subr.bf16.mxu0 0
        %2021 = vmatpush1.bf16.msra.mxu0 0
        %2022 = vmatprep.subr.bf16.mxu0 0
        %2023 = vmatpush1.bf16.msra.mxu0 0
        %2024 = vmatprep.subr.bf16.mxu0 0
        %2025 = vmatpush1.bf16.msra.mxu0 0
        %2026 = vmatprep.subr.bf16.mxu0 0
        %2027 = vmatpush1.bf16.msra.mxu0 0
        %2028 = vmatprep.subr.bf16.mxu0 0
        %2029 = vmatpush1.bf16.msra.mxu0 0
        %2030 = vmatprep.subr.bf16.mxu0 0
        %2031 = vmatpush1.bf16.msra.mxu0 0
        %2032 = vmatprep.mubr.bf16.mxu0 0
        %2033 = vmatmul.mubr.bf16.gmra.mrb[0].mxu0 %v1928
        %v2034 = vpop.f32.mrb[0].mxu0
        %v2035 = vadd.f32 %v1950, %v2034
        %v2036 = vpop.f32.mrb[0].mxu0
        %v2037 = vpop.f32.mrb[0].mxu0
        %v2038 = vpop.f32.mrb[0].mxu0
        %2039 = vdwg.mxu0
        %v2040 = vadd.f32 %v588, %v2035
        %v2041 = vld [vmem:[%s11] sm:$0x1]
        %v2042 = vld [vmem:[%s12] sm:$0x1]
        %2043 = vadd.xlane.f32.xlu0 %v2040
        %v2044 = vpop.xlane.xlu0 %2043
        %v2045 = vrcp.pop 128.0
        %v2046 = vmul.f32 %v2044, %v2045
        %v2047 = vsub.f32 %v2040, %v2046
        %v2048 = vmul.f32 %v2047, %v2047
        %2049 = vadd.xlane.f32.xlu0 %v2048
        %v2050 = vpop.xlane.xlu0 %2049
        %v2051 = vmul.f32 %v2050, %v2045
        %v2052 = vadd.f32 %v2051, 1e-05
        %v2053 = vrsqrt.pop %v2052
        %v2054 = vmul.f32 %v2047, %v2053
        %v2056 = vlaneseq
        %v2057 = vshrl.u32 %v2056, 7
        %v2058 = vsub.s32 0, %v2057
        %v2059 = vrot.slane %v2041, %v2058
        %v2061 = vmul.f32 %v2054, %v2059
        %v2063 = vlaneseq
        %v2064 = vshrl.u32 %v2063, 7
        %v2065 = vsub.s32 0, %v2064
        %v2066 = vrot.slane %v2042, %v2065
        %v2068 = vadd.f32 %v2061, %v2066
        %v2069 = vpack.c.bf16 %v2068, %v2068
        %v2070 = vld [vmem:[#allocation11] sm:$0xff]
        %v2071 = vld [vmem:[#allocation11 + $0x8] sm:$0xff]
        %v2072 = vld [vmem:[#allocation11 + $0x10] sm:$0xff]
        %v2073 = vld [vmem:[#allocation11 + $0x18] sm:$0xff]
        %v2074 = vld [vmem:[#allocation11 + $0x20] sm:$0xff]
        %v2075 = vld [vmem:[#allocation11 + $0x28] sm:$0xff]
        %v2076 = vld [vmem:[#allocation11 + $0x30] sm:$0xff]
        %v2077 = vld [vmem:[#allocation11 + $0x38] sm:$0xff]
        %v2078 = vld [vmem:[#allocation11 + $0x40] sm:$0xff]
        %v2079 = vld [vmem:[#allocation11 + $0x48] sm:$0xff]
        %v2080 = vld [vmem:[#allocation11 + $0x50] sm:$0xff]
        %v2081 = vld [vmem:[#allocation11 + $0x58] sm:$0xff]
        %v2082 = vld [vmem:[#allocation11 + $0x60] sm:$0xff]
        %v2083 = vld [vmem:[#allocation11 + $0x68] sm:$0xff]
        %v2084 = vld [vmem:[#allocation11 + $0x70] sm:$0xff]
        %v2085 = vld [vmem:[#allocation11 + $0x78] sm:$0xff]
        %v2086 = vld [vmem:[%s8] sm:$0x3]
        %v2088 = vlaneseq
        %v2089 = vshrl.u32 %v2088, 7
        %v2090 = vsub.s32 0, %v2089
        %v2091 = vrot.slane %v2086, %v2090
        %v2092 = vlaneseq
        %v2093 = vshrl.u32 %v2092, 7
        %v2094 = vsub.s32 1, %v2093
        %v2095 = vrot.slane %v2086, %v2094
        %v2114 = vunpack.c.l.b16 %v2070
        %v2115 = vunpack.c.h.b16 %v2070
        %v2116 = vunpack.c.l.b16 %v2071
        %v2117 = vunpack.c.h.b16 %v2071
        %v2118 = vunpack.c.l.b16 %v2072
        %v2119 = vunpack.c.h.b16 %v2072
        %v2120 = vunpack.c.l.b16 %v2073
        %v2121 = vunpack.c.h.b16 %v2073
        %v2122 = vunpack.c.l.b16 %v2074
        %v2123 = vunpack.c.h.b16 %v2074
        %v2124 = vunpack.c.l.b16 %v2075
        %v2125 = vunpack.c.h.b16 %v2075
        %v2126 = vunpack.c.l.b16 %v2076
        %v2127 = vunpack.c.h.b16 %v2076
        %v2128 = vunpack.c.l.b16 %v2077
        %v2129 = vunpack.c.h.b16 %v2077
        %v2130 = vunpack.c.l.b16 %v2078
        %v2131 = vunpack.c.h.b16 %v2078
        %v2132 = vunpack.c.l.b16 %v2079
        %v2133 = vunpack.c.h.b16 %v2079
        %v2134 = vunpack.c.l.b16 %v2080
        %v2135 = vunpack.c.h.b16 %v2080
        %v2136 = vunpack.c.l.b16 %v2081
        %v2137 = vunpack.c.h.b16 %v2081
        %v2138 = vunpack.c.l.b16 %v2082
        %v2139 = vunpack.c.h.b16 %v2082
        %v2140 = vunpack.c.l.b16 %v2083
        %v2141 = vunpack.c.h.b16 %v2083
        %v2142 = vunpack.c.l.b16 %v2084
        %v2143 = vunpack.c.h.b16 %v2084
        %v2144 = vunpack.c.l.b16 %v2085
        %v2145 = vunpack.c.h.b16 %v2085
        %v2146 = vpack.c.b16 %v2116, %v2114
        %v2147 = vpack.c.b16 %v2117, %v2115
        %v2148 = vpack.c.b16 %v2120, %v2118
        %v2149 = vpack.c.b16 %v2121, %v2119
        %v2150 = vpack.c.b16 %v2124, %v2122
        %v2151 = vpack.c.b16 %v2125, %v2123
        %v2152 = vpack.c.b16 %v2128, %v2126
        %v2153 = vpack.c.b16 %v2129, %v2127
        %v2154 = vpack.c.b16 %v2132, %v2130
        %v2155 = vpack.c.b16 %v2133, %v2131
        %v2156 = vpack.c.b16 %v2136, %v2134
        %v2157 = vpack.c.b16 %v2137, %v2135
        %v2158 = vpack.c.b16 %v2140, %v2138
        %v2159 = vpack.c.b16 %v2141, %v2139
        %v2160 = vpack.c.b16 %v2144, %v2142
        %v2161 = vpack.c.b16 %v2145, %v2143
        %2178 = vmatprep.subr.bf16.mxu0 %v2147
        %2179 = vmatpush1.bf16.msra.mxu0 %v2146
        %2180 = vmatprep.subr.bf16.mxu0 %v2149
        %2181 = vmatpush1.bf16.msra.mxu0 %v2148
        %2182 = vmatprep.subr.bf16.mxu0 %v2151
        %2183 = vmatpush1.bf16.msra.mxu0 %v2150
        %2184 = vmatprep.subr.bf16.mxu0 %v2153
        %2185 = vmatpush1.bf16.msra.mxu0 %v2152
        %2186 = vmatprep.subr.bf16.mxu0 %v2155
        %2187 = vmatpush1.bf16.msra.mxu0 %v2154
        %2188 = vmatprep.subr.bf16.mxu0 %v2157
        %2189 = vmatpush1.bf16.msra.mxu0 %v2156
        %2190 = vmatprep.subr.bf16.mxu0 %v2159
        %2191 = vmatpush1.bf16.msra.mxu0 %v2158
        %2192 = vmatprep.subr.bf16.mxu0 %v2161
        %2193 = vmatpush1.bf16.msra.mxu0 %v2160
        %2194 = vmatprep.subr.bf16.mxu0 0
        %2195 = vmatpush1.bf16.msra.mxu0 0
        %2196 = vmatprep.subr.bf16.mxu0 0
        %2197 = vmatpush1.bf16.msra.mxu0 0
        %2198 = vmatprep.subr.bf16.mxu0 0
        %2199 = vmatpush1.bf16.msra.mxu0 0
        %2200 = vmatprep.subr.bf16.mxu0 0
        %2201 = vmatpush1.bf16.msra.mxu0 0
        %2202 = vmatprep.subr.bf16.mxu0 0
        %2203 = vmatpush1.bf16.msra.mxu0 0
        %2204 = vmatprep.subr.bf16.mxu0 0
        %2205 = vmatpush1.bf16.msra.mxu0 0
        %2206 = vmatprep.subr.bf16.mxu0 0
        %2207 = vmatpush1.bf16.msra.mxu0 0
        %2208 = vmatprep.subr.bf16.mxu0 0
        %2209 = vmatpush1.bf16.msra.mxu0 0
        %2210 = vmatprep.mubr.bf16.mxu0 0
        %2211 = vmatmul.mubr.bf16.gmra.mrb[0].mxu0 %v2069
        %v2212 = vpop.f32.mrb[0].mxu0
        %v2213 = vadd.f32 %v2091, %v2212
        %v2214 = vpop.f32.mrb[0].mxu0
        %v2215 = vadd.f32 %v2095, %v2214
        %v2216 = vpop.f32.mrb[0].mxu0
        %v2217 = vpop.f32.mrb[0].mxu0
        %2218 = vdwg.mxu0
        %v2219 = vmax.f32 %v2213, 0.0
        %v2220 = vmax.f32 %v2215, 0.0
        %v2221 = vpack.c.bf16 %v2219, %v2219
        %v2222 = vpack.c.bf16 %v2220, %v2220
        %v2223 = vld [vmem:[#allocation12] sm:$0xf]
        %v2224 = vld [vmem:[#allocation12 + $0x4] sm:$0xf]
        %v2225 = vld [vmem:[#allocation12 + $0x8] sm:$0xf]
        %v2226 = vld [vmem:[#allocation12 + $0xc] sm:$0xf]
        %v2227 = vld [vmem:[#allocation12 + $0x10] sm:$0xf]
        %v2228 = vld [vmem:[#allocation12 + $0x14] sm:$0xf]
        %v2229 = vld [vmem:[#allocation12 + $0x18] sm:$0xf]
        %v2230 = vld [vmem:[#allocation12 + $0x1c] sm:$0xf]
        %v2231 = vld [vmem:[#allocation12 + $0x20] sm:$0xf]
        %v2232 = vld [vmem:[#allocation12 + $0x24] sm:$0xf]
        %v2233 = vld [vmem:[#allocation12 + $0x28] sm:$0xf]
        %v2234 = vld [vmem:[#allocation12 + $0x2c] sm:$0xf]
        %v2235 = vld [vmem:[#allocation12 + $0x30] sm:$0xf]
        %v2236 = vld [vmem:[#allocation12 + $0x34] sm:$0xf]
        %v2237 = vld [vmem:[#allocation12 + $0x38] sm:$0xf]
        %v2238 = vld [vmem:[#allocation12 + $0x3c] sm:$0xf]
        %v2239 = vld [vmem:[#allocation12 + $0x40] sm:$0xf]
        %v2240 = vld [vmem:[#allocation12 + $0x44] sm:$0xf]
        %v2241 = vld [vmem:[#allocation12 + $0x48] sm:$0xf]
        %v2242 = vld [vmem:[#allocation12 + $0x4c] sm:$0xf]
        %v2243 = vld [vmem:[#allocation12 + $0x50] sm:$0xf]
        %v2244 = vld [vmem:[#allocation12 + $0x54] sm:$0xf]
        %v2245 = vld [vmem:[#allocation12 + $0x58] sm:$0xf]
        %v2246 = vld [vmem:[#allocation12 + $0x5c] sm:$0xf]
        %v2247 = vld [vmem:[#allocation12 + $0x60] sm:$0xf]
        %v2248 = vld [vmem:[#allocation12 + $0x64] sm:$0xf]
        %v2249 = vld [vmem:[#allocation12 + $0x68] sm:$0xf]
        %v2250 = vld [vmem:[#allocation12 + $0x6c] sm:$0xf]
        %v2251 = vld [vmem:[#allocation12 + $0x70] sm:$0xf]
        %v2252 = vld [vmem:[#allocation12 + $0x74] sm:$0xf]
        %v2253 = vld [vmem:[#allocation12 + $0x78] sm:$0xf]
        %v2254 = vld [vmem:[#allocation12 + $0x7c] sm:$0xf]
        %v2255 = vld [vmem:[%s10] sm:$0x1]
        %v2257 = vlaneseq
        %v2258 = vshrl.u32 %v2257, 7
        %v2259 = vsub.s32 0, %v2258
        %v2260 = vrot.slane %v2255, %v2259
        %v2294 = vunpack.c.l.b16 %v2223
        %v2295 = vunpack.c.l.b16 %v2224
        %v2296 = vunpack.c.l.b16 %v2225
        %v2297 = vunpack.c.l.b16 %v2226
        %v2298 = vunpack.c.l.b16 %v2227
        %v2299 = vunpack.c.l.b16 %v2228
        %v2300 = vunpack.c.l.b16 %v2229
        %v2301 = vunpack.c.l.b16 %v2230
        %v2302 = vunpack.c.l.b16 %v2231
        %v2303 = vunpack.c.l.b16 %v2232
        %v2304 = vunpack.c.l.b16 %v2233
        %v2305 = vunpack.c.l.b16 %v2234
        %v2306 = vunpack.c.l.b16 %v2235
        %v2307 = vunpack.c.l.b16 %v2236
        %v2308 = vunpack.c.l.b16 %v2237
        %v2309 = vunpack.c.l.b16 %v2238
        %v2310 = vunpack.c.l.b16 %v2239
        %v2311 = vunpack.c.l.b16 %v2240
        %v2312 = vunpack.c.l.b16 %v2241
        %v2313 = vunpack.c.l.b16 %v2242
        %v2314 = vunpack.c.l.b16 %v2243
        %v2315 = vunpack.c.l.b16 %v2244
        %v2316 = vunpack.c.l.b16 %v2245
        %v2317 = vunpack.c.l.b16 %v2246
        %v2318 = vunpack.c.l.b16 %v2247
        %v2319 = vunpack.c.l.b16 %v2248
        %v2320 = vunpack.c.l.b16 %v2249
        %v2321 = vunpack.c.l.b16 %v2250
        %v2322 = vunpack.c.l.b16 %v2251
        %v2323 = vunpack.c.l.b16 %v2252
        %v2324 = vunpack.c.l.b16 %v2253
        %v2325 = vunpack.c.l.b16 %v2254
        %v2326 = vpack.c.b16 %v2295, %v2294
        %v2327 = vpack.c.b16 %v2297, %v2296
        %v2328 = vpack.c.b16 %v2299, %v2298
        %v2329 = vpack.c.b16 %v2301, %v2300
        %v2330 = vpack.c.b16 %v2303, %v2302
        %v2331 = vpack.c.b16 %v2305, %v2304
        %v2332 = vpack.c.b16 %v2307, %v2306
        %v2333 = vpack.c.b16 %v2309, %v2308
        %v2334 = vpack.c.b16 %v2311, %v2310
        %v2335 = vpack.c.b16 %v2313, %v2312
        %v2336 = vpack.c.b16 %v2315, %v2314
        %v2337 = vpack.c.b16 %v2317, %v2316
        %v2338 = vpack.c.b16 %v2319, %v2318
        %v2339 = vpack.c.b16 %v2321, %v2320
        %v2340 = vpack.c.b16 %v2323, %v2322
        %v2341 = vpack.c.b16 %v2325, %v2324
        %2358 = vmatprep.subr.bf16.mxu0 0
        %2359 = vmatpush1.bf16.msra.mxu0 %v2326
        %2360 = vmatprep.subr.bf16.mxu0 0
        %2361 = vmatpush1.bf16.msra.mxu0 %v2327
        %2362 = vmatprep.subr.bf16.mxu0 0
        %2363 = vmatpush1.bf16.msra.mxu0 %v2328
        %2364 = vmatprep.subr.bf16.mxu0 0
        %2365 = vmatpush1.bf16.msra.mxu0 %v2329
        %2366 = vmatprep.subr.bf16.mxu0 0
        %2367 = vmatpush1.bf16.msra.mxu0 %v2330
        %2368 = vmatprep.subr.bf16.mxu0 0
        %2369 = vmatpush1.bf16.msra.mxu0 %v2331
        %2370 = vmatprep.subr.bf16.mxu0 0
        %2371 = vmatpush1.bf16.msra.mxu0 %v2332
        %2372 = vmatprep.subr.bf16.mxu0 0
        %2373 = vmatpush1.bf16.msra.mxu0 %v2333
        %2374 = vmatprep.subr.bf16.mxu0 0
        %2375 = vmatpush1.bf16.msra.mxu0 %v2334
        %2376 = vmatprep.subr.bf16.mxu0 0
        %2377 = vmatpush1.bf16.msra.mxu0 %v2335
        %2378 = vmatprep.subr.bf16.mxu0 0
        %2379 = vmatpush1.bf16.msra.mxu0 %v2336
        %2380 = vmatprep.subr.bf16.mxu0 0
        %2381 = vmatpush1.bf16.msra.mxu0 %v2337
        %2382 = vmatprep.subr.bf16.mxu0 0
        %2383 = vmatpush1.bf16.msra.mxu0 %v2338
        %2384 = vmatprep.subr.bf16.mxu0 0
        %2385 = vmatpush1.bf16.msra.mxu0 %v2339
        %2386 = vmatprep.subr.bf16.mxu0 0
        %2387 = vmatpush1.bf16.msra.mxu0 %v2340
        %2388 = vmatprep.subr.bf16.mxu0 0
        %2389 = vmatpush1.bf16.msra.mxu0 %v2341
        %2390 = vmatprep.mubr.bf16.mxu0 %v2222
        %2391 = vmatmul.mubr.bf16.gmra.mrb[0].mxu0 %v2221
        %v2392 = vpop.f32.mrb[0].mxu0
        %v2393 = vadd.f32 %v2260, %v2392
        %v2394 = vpop.f32.mrb[0].mxu0
        %v2395 = vpop.f32.mrb[0].mxu0
        %v2396 = vpop.f32.mrb[0].mxu0
        %2397 = vdwg.mxu0
        %v2398 = vadd.f32 %v2068, %v2393
        %v2399 = vld [vmem:[%s13] sm:$0x1]
        %v2400 = vld [vmem:[%s14] sm:$0x1]
        %2401 = vadd.xlane.f32.xlu0 %v2398
        %v2402 = vpop.xlane.xlu0 %2401
        %v2403 = vmul.f32 %v2402, %v2045
        %v2404 = vsub.f32 %v2398, %v2403
        %v2405 = vmul.f32 %v2404, %v2404
        %2406 = vadd.xlane.f32.xlu0 %v2405
        %v2407 = vpop.xlane.xlu0 %2406
        %v2408 = vmul.f32 %v2407, %v2045
        %v2409 = vadd.f32 %v2408, 1e-05
        %v2410 = vrsqrt.pop %v2409
        %v2411 = vmul.f32 %v2404, %v2410
        %v2413 = vlaneseq
        %v2414 = vshrl.u32 %v2413, 7
        %v2415 = vsub.s32 0, %v2414
        %v2416 = vrot.slane %v2399, %v2415
        %v2418 = vmul.f32 %v2411, %v2416
        %v2420 = vlaneseq
        %v2421 = vshrl.u32 %v2420, 7
        %v2422 = vsub.s32 0, %v2421
        %v2423 = vrot.slane %v2400, %v2422
        %v2425 = vadd.f32 %v2418, %v2423
        %2426 = vst [vmem:[%s581] sm:$0xff] %v2425
        %s2427 = sand.u32 %s364, 1
        %s2428 = scalar_lea.sflag [#allocation5], %s2427
        %s2429 = sand.u32 %s364, 1
        %s2430 = smul.addr %s2429, 8
        %s2431 = scalar_lea.vmem [#allocation14], %s2430
        // Predicated region
        $region105: #{tpu_custom_call.1} parent=79 // pred_check
          %p2432 = pneg %p374
        $region106: #{tpu_custom_call.1} parent=79 // pred_check_branch
          %2434 = sbr.rel (%p2432) target = $region108
        $region107: #{tpu_custom_call.1} parent=79 // pred_region
          %s2436 = ssub.s32 128, 128
          %2437 = vsyncadd %s2428, %s2436
          %s2438 = smul.addr %s36, 128
          %s2439 = scalar_lea.hbm %s15, %s2438
          %s2441 = sshll.u32 %s2431, 4
          %s2442 = int_to_ptr.vmem [resolvable:$true] %s2441
          %2444 = dma.vmem_to_hbm [thread:$0]  %s2442, 128, %s2439, %s2428
        $region108: #{tpu_custom_call.1} parent=79 // pred_fallthru
          _
      $region80: #{tpu_custom_call.1} parent=5 // pred_fallthru
        _
      %p2445 = scmp.le.s32.totalorder 2, %s31
      // Predicated region
      $region109: #{tpu_custom_call.1} parent=5 // pred_check
        %p2446 = pneg %p2445
      $region110: #{tpu_custom_call.1} parent=5 // pred_check_branch
        %2448 = sbr.rel (%p2446) target = $region112
      $region111: #{tpu_custom_call.1} parent=5 // pred_region
        %s2449 = ssub.s32 %s31, 2
        // Predicated region
        $region113: #{tpu_custom_call.1} parent=111 // pred_check
          %p2450 = pneg %p380
        $region114: #{tpu_custom_call.1} parent=111 // pred_check_branch
          %2452 = sbr.rel (%p2450) target = $region116
        $region115: #{tpu_custom_call.1} parent=111 // pred_region
          %s2453 = sand.u32 %s365, 1
          %s2454 = scalar_lea.sflag [#allocation5], %s2453
          %s2455 = sand.u32 %s365, 1
          %s2456 = smul.addr %s2455, 8
          %s2457 = scalar_lea.vmem [#allocation14], %s2456
          %2458 = dma.done %s2454, 128
        $region116: #{tpu_custom_call.1} parent=111 // pred_fallthru
          _
      $region112: #{tpu_custom_call.1} parent=5 // pred_fallthru
        _
    $region6: #{tpu_custom_call.1} parent=1 // loop_footer
      %s35 = sadd.s32 1, %s31
    $region7: #{tpu_custom_call.1} parent=1 // loop_footer_branch
      %30 = sbr.rel target = $region3
    $region8: #{tpu_custom_call.1} parent=1 // loop_exit
      _
    %2459 = vsyncpa [#allocation4], 1
    %s2460 = scalar_lea.sflag [#allocation4], 1
    %2461 = vsyncpa %s2460, 1
    %2462 = vsyncpa [#allocation7], 1
    %2463 = vsyncpa [#allocation10], 1
    %2464 = vsyncpa [#allocation13], 1
    %2465 = vsyncpa [#allocation5], 1
    %s2466 = scalar_lea.sflag [#allocation5], 1
    %2467 = vsyncpa %s2466, 1

</llo_original>
